<compile_context>
chip_gen: v6e
topology: v6e:2x2x1
jax: 0.10.0
libtpu: 0.0.40
codegen_flags: <defaults>
</compile_context>

<pallas_src>
import functools

import jax
import jax.numpy as jnp
from jax import lax
from jax.experimental import pallas as pl
from jax.experimental.pallas import tpu as pltpu


# ----------------------------------------------------------------------------
# Small helpers.
# ----------------------------------------------------------------------------
def _round_up(x, m):
    return (x + m - 1) // m * m


def _pick_block(dim, prefs):
    for cand in prefs:
        if dim % cand == 0 and cand <= dim:
            return cand
    return dim  # full extent (legal: block == full array dim)


def _pixel_block(hw):
    for cand in (1024, 512, 256, 128):
        if hw % cand == 0 and hw // cand >= 2:
            return cand
    return hw


def _time_block(t, batch, hidden_p):
    # Double-buffered bf16 blocks: (B,Tb,4Hp) in + (B,Tb,Hp) out; keep them
    # under a conservative budget so v7x's 64 MiB VMEM is never the limiter.
    budget = 8 * 1024 * 1024
    for cand in (32, 24, 16, 8):
        if t % cand == 0 and t // cand >= 2:
            need = 2 * (batch * cand * 4 * hidden_p * 2 + batch * cand * hidden_p * 2)
            if need <= budget:
                return cand
    return t


def _vmem_limit_bytes():
    # Generation-aware scoped-VMEM: ~half of physical (v5e/v6e 128 MiB -> 64,
    # v7x 64 MiB -> 32).  Falls back to compiler default if the query fails.
    try:
        cap = pltpu.get_tpu_info().vmem_capacity_bytes
        return int(min(cap // 2, 64 * 1024 * 1024))
    except Exception:
        return None


_VMEM_LIMIT = _vmem_limit_bytes()


def _compiler_params(dimension_semantics):
    kw = dict(dimension_semantics=dimension_semantics)
    if _VMEM_LIMIT is not None:
        kw["vmem_limit_bytes"] = _VMEM_LIMIT
    return pltpu.CompilerParams(**kw)


def _copy_kernel(x_ref, o_ref):
    o_ref[...] = x_ref[...]


@functools.lru_cache(maxsize=None)
def _single_buffer_supported():
    """True if this JAX supports pipeline_mode=pl.Buffered(1) on BlockSpec."""
    try:
        spec = pl.BlockSpec((8, 128), lambda i: (0, 0), pipeline_mode=pl.Buffered(1))
        fn = pl.pallas_call(
            _copy_kernel,
            out_shape=jax.ShapeDtypeStruct((8, 128), jnp.float32),
            grid=(1,),
            in_specs=[spec],
            out_specs=pl.BlockSpec((8, 128), lambda i: (0, 0)),
        )
        jax.block_until_ready(fn(jnp.zeros((8, 128), jnp.float32)))
        return True
    except Exception:
        return False


def _weight_spec(block_shape, index_map):
    """Constant-index weight block: single-buffer it (block never changes
    across the grid -> double buffering only wastes VMEM)."""
    if _single_buffer_supported():
        return pl.BlockSpec(block_shape, index_map, pipeline_mode=pl.Buffered(1))
    return pl.BlockSpec(block_shape, index_map)


def _sigmoid(x):
    # sigmoid(x) == 0.5 * tanh(0.5 x) + 0.5 : one EUP push, no exp + divide.
    return 0.5 * jnp.tanh(0.5 * x) + 0.5


# ----------------------------------------------------------------------------
# Encoder kernel: MXU 1x1-conv stem + ReLU + global-average-pool partial sums
# accumulated over pixel blocks.  Leading grid axis of size 2 splits the pixel
# blocks so both v7x TensorCores run; partials are combined in the wrapper.
# The embed Linear(2048, E) is hoisted OUT into the tiled matmul below.
# ----------------------------------------------------------------------------
def encoder_kernel(x_ref, w1_ref, b1_ref, out_ref, acc_ref, *, f_chunk):
    p = pl.program_id(1)                                  # inner pixel-block axis

    @pl.when(p == 0)
    def _():
        acc_ref[...] = jnp.zeros_like(acc_ref)            # f32 pooled-sum accumulator

    x = x_ref[...]                                        # (B, Pb, Cp) bf16
    b, pb, cp = x.shape
    x2 = x.reshape(b * pb, cp)
    n_f = acc_ref.shape[1]
    for c0 in range(0, n_f, f_chunk):                     # bound the live intermediate
        h = jnp.dot(x2, w1_ref[:, c0:c0 + f_chunk],       # MXU (bf16 x bf16 -> f32)
                    preferred_element_type=jnp.float32)
        h = jnp.maximum(h + b1_ref[:, c0:c0 + f_chunk], 0.0)      # bias + ReLU
        acc_ref[:, c0:c0 + f_chunk] += jnp.sum(h.reshape(b, pb, f_chunk), axis=1)

    @pl.when(p == pl.num_programs(1) - 1)
    def _():
        out_ref[...] = acc_ref[...][None, :, :]           # per-core partial pooled sum


def encode(images_nchw, w_stem, b_stem):
    B, C, H, W = images_nchw.shape
    HW = H * W
    Cp = _round_up(C, 8)
    x = jnp.transpose(images_nchw, (0, 2, 3, 1)).reshape(B, HW, C)
    if Cp != C:
        x = jnp.pad(x, ((0, 0), (0, 0), (0, Cp - C)))
        w_stem = jnp.pad(w_stem, ((0, Cp - C), (0, 0)))
    x = x.astype(jnp.bfloat16)
    w_stem = w_stem.astype(jnp.bfloat16)

    F = w_stem.shape[1]
    Pb = _pixel_block(HW)
    n_blocks = HW // Pb
    split = 2 if n_blocks % 2 == 0 else 1                 # both v7x TensorCores
    inner = n_blocks // split
    f_chunk = 512 if F % 512 == 0 else F

    kernel = functools.partial(encoder_kernel, f_chunk=f_chunk)
    partial_sums = pl.pallas_call(
        kernel,
        out_shape=jax.ShapeDtypeStruct((split, B, F), jnp.float32),
        grid_spec=pltpu.PrefetchScalarGridSpec(
            num_scalar_prefetch=0,
            grid=(split, inner),
            in_specs=[
                pl.BlockSpec((B, Pb, Cp), lambda s, p: (0, s * inner + p, 0)),
                _weight_spec((Cp, F), lambda s, p: (0, 0)),
                _weight_spec((1, F), lambda s, p: (0, 0)),
            ],
            out_specs=pl.BlockSpec((1, B, F), lambda s, p: (s, 0, 0)),
            scratch_shapes=[pltpu.VMEM((B, F), jnp.float32)],
        ),
        compiler_params=_compiler_params(("parallel", "arbitrary")),
    )(x, w_stem, b_stem)

    # tiny epilogue: combine the (<=2) per-core partials and finish the mean
    pooled = jnp.sum(partial_sums, axis=0) * (1.0 / HW)   # (B, F) f32
    return pooled


# ----------------------------------------------------------------------------
# M/N/K-tiled matmul + bias:  o = x @ w + b.  bf16 MXU operands, f32 VMEM
# accumulator, lane-dense N tiles.  Used for the hoisted embed projection, the
# hoisted LSTM input projection, and the final Linear(hidden, vocab).
# ----------------------------------------------------------------------------
def matmul_bias_kernel(x_ref, w_ref, b_ref, o_ref, acc_ref):
    k = pl.program_id(2)

    @pl.when(k == 0)
    def _():
        acc_ref[...] = jnp.zeros_like(acc_ref)

    acc_ref[...] += jnp.dot(x_ref[...].astype(jnp.bfloat16),
                            w_ref[...].astype(jnp.bfloat16),
                            preferred_element_type=jnp.float32)

    @pl.when(k == pl.num_programs(2) - 1)
    def _():
        o_ref[...] = (acc_ref[...] + b_ref[...]).astype(o_ref.dtype)


def matmul_bias(x, w, b, out_dtype=jnp.float32):
    M, K = x.shape
    N = w.shape[1]
    Mb = _pick_block(M, (256, 128, 64, 32, 16, 8))
    Nb = _pick_block(N, (512, 256, 128))
    Kb = _pick_block(K, (1024, 512, 256, 128))
    return pl.pallas_call(
        matmul_bias_kernel,
        out_shape=jax.ShapeDtypeStruct((M, N), out_dtype),
        grid=(M // Mb, N // Nb, K // Kb),
        in_specs=[
            pl.BlockSpec((Mb, Kb), lambda i, j, k: (i, k)),
            pl.BlockSpec((Kb, Nb), lambda i, j, k: (k, j)),
            pl.BlockSpec((1, Nb), lambda i, j, k: (0, j)),
        ],
        out_specs=pl.BlockSpec((Mb, Nb), lambda i, j, k: (i, j)),
        scratch_shapes=[pltpu.VMEM((Mb, Nb), jnp.float32)],
        compiler_params=_compiler_params(("parallel", "parallel", "arbitrary")),
    )(x, w, b)


# ----------------------------------------------------------------------------
# Recurrent LSTM kernel (PyTorch gate order i, f, g, o).  gates_x already holds
# x@w_ih + b_ih + b_hh (bf16, lane-aligned padded layout), so each step only
# adds h @ w_hh.  Tb timesteps per grid iteration; h/c carried in f32 VMEM
# scratch across grid steps; gate math stays f32 (v5e-safe).
# ----------------------------------------------------------------------------
def lstm_kernel(gx_ref, whh_ref, hseq_ref, h_sc, c_sc, *, hidden_p, t_block):
    @pl.when(pl.program_id(0) == 0)
    def _():
        h_sc[...] = jnp.zeros_like(h_sc)
        c_sc[...] = jnp.zeros_like(c_sc)

    h = h_sc[...]
    c = c_sc[...]
    whh = whh_ref[...]                                   # (Hp, 4Hp) bf16, single-buffered
    # TODO(synk): for Tb > ~16 switch to lax.fori_loop(..., unroll=True) to
    # bound vreg live ranges; Tb is capped small here so a static unroll is fine.
    for i in range(t_block):
        gates = (gx_ref[:, i, :].astype(jnp.float32)
                 + jnp.dot(h.astype(jnp.bfloat16), whh,
                           preferred_element_type=jnp.float32))
        i_g = _sigmoid(gates[:, 0 * hidden_p:1 * hidden_p])   # lane-aligned slices
        f_g = _sigmoid(gates[:, 1 * hidden_p:2 * hidden_p])
        g_g = jnp.tanh(gates[:, 2 * hidden_p:3 * hidden_p])
        o_g = _sigmoid(gates[:, 3 * hidden_p:4 * hidden_p])
        c = f_g * c + i_g * g_g
        h = o_g * jnp.tanh(c)
        hseq_ref[:, i, :] = h.astype(hseq_ref.dtype)          # lane-dense (Hp>=128)
    h_sc[...] = h
    c_sc[...] = c


def decode(x_bte, w_ih, w_hh, b_ih, b_hh, w_fc, b_fc, hidden_size):
    B, T, E = x_bte.shape
    H = hidden_size
    V = w_fc.shape[1]
    Hp = _round_up(H, 128)

    # Lane-align the gate layout: pad each gate from H to Hp columns.  The
    # padded lanes stay exactly zero through the recurrence (their input and
    # recurrent weights/biases are zero, c starts at zero, tanh(0)=0), and the
    # zero-padded w_fc rows make them invisible in the logits.
    def pad_gates_cols(w):                                 # (rows, 4H) -> (rows, 4Hp)
        rows = w.shape[0]
        w4 = w.reshape(rows, 4, H)
        w4 = jnp.pad(w4, ((0, 0), (0, 0), (0, Hp - H)))
        return w4.reshape(rows, 4 * Hp)

    w_ih_p = pad_gates_cols(w_ih)                                    # (E, 4Hp)
    w_hh_p = jnp.pad(pad_gates_cols(w_hh), ((0, Hp - H), (0, 0)))    # (Hp, 4Hp)
    bias_p = pad_gates_cols(b_ih + b_hh)                             # (1, 4Hp)
    w_fc_p = jnp.pad(w_fc, ((0, Hp - H), (0, 0)))                    # (Hp, V)

    # (1) hoisted input projection: one (B*T, E) @ (E, 4Hp) tiled matmul.
    #     bf16 operands and a bf16 HBM intermediate (half the round-trip bytes).
    gates_x = matmul_bias(
        x_bte.reshape(B * T, E).astype(jnp.bfloat16),
        w_ih_p.astype(jnp.bfloat16), bias_p,
        out_dtype=jnp.bfloat16).reshape(B, T, 4 * Hp)

    # (2) sequential recurrence, Tb timesteps per grid step, batch-first blocks.
    Tb = _time_block(T, B, Hp)
    kernel = functools.partial(lstm_kernel, hidden_p=Hp, t_block=Tb)
    h_seq = pl.pallas_call(
        kernel,
        out_shape=jax.ShapeDtypeStruct((B, T, Hp), jnp.bfloat16),
        grid_spec=pltpu.PrefetchScalarGridSpec(
            num_scalar_prefetch=0,
            grid=(T // Tb,),
            in_specs=[
                pl.BlockSpec((B, Tb, 4 * Hp), lambda k: (0, k, 0)),
                _weight_spec((Hp, 4 * Hp), lambda k: (0, 0)),
            ],
            out_specs=pl.BlockSpec((B, Tb, Hp), lambda k: (0, k, 0)),
            scratch_shapes=[pltpu.VMEM((B, Hp), jnp.float32),
                            pltpu.VMEM((B, Hp), jnp.float32)],
        ),
        compiler_params=_compiler_params(("arbitrary",)),
    )(gates_x, w_hh_p.astype(jnp.bfloat16))

    # (3) hoisted output projection (M/N/K tiled -> safe at production vocab).
    logits = matmul_bias(h_seq.reshape(B * T, Hp),
                         w_fc_p.astype(jnp.bfloat16), b_fc,
                         out_dtype=jnp.float32)
    return logits.reshape(B, T, V)


# ----------------------------------------------------------------------------
# Full EncoderDecoder forward (glue in plain JAX: embedding gather, concat).
# ----------------------------------------------------------------------------
def encoder_decoder_forward(params, images, captions, hidden_size):
    pooled = encode(images, params["w_stem"], params["b_stem"])          # (B, 2048)
    features = matmul_bias(pooled, params["w_embed"].astype(jnp.bfloat16),
                           params["b_embed"])                            # (B, E)
    embeds = jnp.take(params["emb_table"], captions[:, :-1], axis=0)     # (B, T-1, E)
    x = jnp.concatenate([features[:, None, :], embeds], axis=1)          # (B, T, E)
    return decode(x, params["w_ih"], params["w_hh"], params["b_ih"],
                  params["b_hh"], params["w_fc"], params["b_fc"], hidden_size)


# Pure-JAX f32 reference for verification.
def reference_forward(params, images, captions, hidden_size):
    B, C, H, W = images.shape
    imgs = jnp.transpose(images, (0, 2, 3, 1)).reshape(B, H * W, C)
    h = jnp.maximum(jnp.einsum("bpc,cf->bpf", imgs, params["w_stem"]) + params["b_stem"], 0.0)
    pooled = jnp.mean(h, axis=1)
    features = pooled @ params["w_embed"] + params["b_embed"]
    embeds = jnp.take(params["emb_table"], captions[:, :-1], axis=0)
    x = jnp.concatenate([features[:, None, :], embeds], axis=1)

    def step(carry, xt):
        h_prev, c_prev = carry
        gates = xt @ params["w_ih"] + params["b_ih"] + h_prev @ params["w_hh"] + params["b_hh"]
        i = jax.nn.sigmoid(gates[:, :hidden_size])
        f = jax.nn.sigmoid(gates[:, hidden_size:2 * hidden_size])
        g = jnp.tanh(gates[:, 2 * hidden_size:3 * hidden_size])
        o = jax.nn.sigmoid(gates[:, 3 * hidden_size:])
        c = f * c_prev + i * g
        hh = o * jnp.tanh(c)
        return (hh, c), hh

    x_tbe = jnp.transpose(x, (1, 0, 2))
    init = (jnp.zeros((B, hidden_size), jnp.float32), jnp.zeros((B, hidden_size), jnp.float32))
    _, hs = lax.scan(step, init, x_tbe)
    hs = jnp.transpose(hs, (1, 0, 2))
    return hs @ params["w_fc"] + params["b_fc"]


if __name__ == "__main__":
    # Small shapes consistent with the module's forward.
    embed_size, hidden_size, vocab_size = 32, 32, 64
    feat_dim = 2048                     # resnet50 fc.in_features
    B, C, Himg, Wimg = 2, 3, 16, 16
    T_cap = 16                          # caption length -> LSTM seq len = T_cap

    key = jax.random.PRNGKey(0)
    ks = jax.random.split(key, 12)
    s = 1.0 / jnp.sqrt(hidden_size).astype(jnp.float32)

    params = dict(
        # encoder stand-in stem + exact embed linear
        w_stem=jax.random.normal(ks[0], (C, feat_dim), jnp.float32) * 0.1,
        b_stem=jnp.zeros((1, feat_dim), jnp.float32),
        w_embed=jax.random.normal(ks[1], (feat_dim, embed_size), jnp.float32)
                * (1.0 / jnp.sqrt(feat_dim).astype(jnp.float32)),
        b_embed=jax.random.normal(ks[2], (1, embed_size), jnp.float32) * 0.01,
        # decoder: embedding table, LSTM (stored transposed: (in, 4H)), fcn
        emb_table=jax.random.normal(ks[3], (vocab_size, embed_size), jnp.float32),
        w_ih=jax.random.uniform(ks[4], (embed_size, 4 * hidden_size), jnp.float32, -s, s),
        w_hh=jax.random.uniform(ks[5], (hidden_size, 4 * hidden_size), jnp.float32, -s, s),
        b_ih=jax.random.uniform(ks[6], (1, 4 * hidden_size), jnp.float32, -s, s),
        b_hh=jax.random.uniform(ks[7], (1, 4 * hidden_size), jnp.float32, -s, s),
        w_fc=jax.random.uniform(ks[8], (hidden_size, vocab_size), jnp.float32, -s, s),
        b_fc=jax.random.uniform(ks[9], (1, vocab_size), jnp.float32, -s, s),
    )

    images = jax.random.normal(ks[10], (B, C, Himg, Wimg), jnp.float32)
    captions = jax.random.randint(ks[11], (B, T_cap), 0, vocab_size)

    out = encoder_decoder_forward(params, images, captions, hidden_size)
    out = jax.block_until_ready(out)
    assert out.shape == (B, T_cap, vocab_size), out.shape

    ref = reference_forward(params, images, captions, hidden_size)
    # bf16 MXU operands + bf16 HBM intermediates vs an f32 reference: the LSTM
    # recurrence compounds rounding over T, so the tolerance is loosened.
    max_err = float(jnp.max(jnp.abs(out - ref)))
    assert jnp.allclose(out, ref, rtol=5e-2, atol=5e-2), max_err

    print("KERNEL_OK")
</pallas_src>

<mosaic_0001>
module attributes {stable_mosaic.version = 11 : i64} {
  func.func @_copy_kernel(%arg0: i32, %arg1: memref<8x128xf32, #tpu.memory_space<vmem>>, %arg2: memref<8x128xf32, #tpu.memory_space<vmem>>) attributes {dimension_semantics = [#tpu.dimension_semantics<arbitrary>], iteration_bounds = array<i64: 1>, scalar_prefetch = 0 : i64, scratch_operands = 0 : i64, tpu.core_type = #tpu.core_type<tc>, window_params = [{pipeline_mode = #tpu.pipeline_mode<synchronous>, transform_indices = @transform_0, window_bounds = array<i64: 8, 128>}, {pipeline_mode = #tpu.pipeline_mode<synchronous>, transform_indices = @transform_1, window_bounds = array<i64: 8, 128>}]} {
    %c0 = arith.constant 0 : index
    %c0_0 = arith.constant 0 : index
    %0 = vector.load %arg1[%c0, %c0_0] : memref<8x128xf32, #tpu.memory_space<vmem>>, vector<8x128xf32>
    %c0_1 = arith.constant 0 : index
    %c0_2 = arith.constant 0 : index
    %1 = vector.load %arg2[%c0_1, %c0_2] : memref<8x128xf32, #tpu.memory_space<vmem>>, vector<8x128xf32>
    tpu.vector_store %arg2[%c0_1, %c0_2], %0 {strides = array<i32>} : memref<8x128xf32, #tpu.memory_space<vmem>>, vector<8x128xf32>,
    return
  }
  func.func @transform_0(%arg0: i32) -> (i32, i32) {
    %c0_i32 = arith.constant 0 : i32
    %c0_i32_0 = arith.constant 0 : i32
    %c0_i32_1 = arith.constant 0 : i32
    return %c0_i32, %c0_i32_0 : i32, i32
  }
  func.func @transform_1(%arg0: i32) -> (i32, i32) {
    %c0_i32 = arith.constant 0 : i32
    %c0_i32_0 = arith.constant 0 : i32
    %c0_i32_1 = arith.constant 0 : i32
    return %c0_i32, %c0_i32_0 : i32, i32
  }
}

module attributes {stable_mosaic.version = 11 : i64} {
  func.func @encoder_kernel(%arg0: i32, %arg1: i32, %arg2: memref<2x128x8xbf16, #tpu.memory_space<vmem>>, %arg3: memref<8x2048xbf16, #tpu.memory_space<vmem>>, %arg4: memref<1x2048xf32, #tpu.memory_space<vmem>>, %arg5: memref<1x2x2048xf32, #tpu.memory_space<vmem>>, %arg6: memref<2x2048xf32, #tpu.memory_space<vmem>>) attributes {dimension_semantics = [#tpu.dimension_semantics<parallel>, #tpu.dimension_semantics<arbitrary>], iteration_bounds = array<i64: 2, 1>, scalar_prefetch = 0 : i64, scratch_operands = 1 : i64, tpu.core_type = #tpu.core_type<tc>, window_params = [{transform_indices = @transform_0, window_bounds = array<i64: 2, 128, 8>}, {pipeline_mode = #tpu.pipeline_mode<synchronous>, transform_indices = @transform_1, window_bounds = array<i64: 8, 2048>}, {pipeline_mode = #tpu.pipeline_mode<synchronous>, transform_indices = @transform_2, window_bounds = array<i64: 1, 2048>}, {transform_indices = @transform_3, window_bounds = array<i64: 1, 2, 2048>}]} {
    %c0_i32 = arith.constant 0 : i32
    %0 = arith.cmpi eq, %arg1, %c0_i32 : i32
    %1 = arith.extui %0 : i1 to i32
    %c0_i32_0 = arith.constant 0 : i32
    %2 = arith.cmpi ne, %1, %c0_i32_0 : i32
    scf.if %2 {
      %cst_45 = arith.constant 0.000000e+00 : f32
      %56 = vector.broadcast %cst_45 : f32 to vector<2x2048xf32>
      %c0_46 = arith.constant 0 : index
      %c0_47 = arith.constant 0 : index
      %57 = vector.load %arg6[%c0_46, %c0_47] : memref<2x2048xf32, #tpu.memory_space<vmem>>, vector<2x2048xf32>
      tpu.vector_store %arg6[%c0_46, %c0_47], %56 {strides = array<i32>} : memref<2x2048xf32, #tpu.memory_space<vmem>>, vector<2x2048xf32>,
    } else {
    }
    %c0 = arith.constant 0 : index
    %c0_1 = arith.constant 0 : index
    %c0_2 = arith.constant 0 : index
    %3 = vector.load %arg2[%c0, %c0_1, %c0_2] : memref<2x128x8xbf16, #tpu.memory_space<vmem>>, vector<2x128x8xbf16>
    %4 = vector.shape_cast %3 : vector<2x128x8xbf16> to vector<256x8xbf16>
    %c0_3 = arith.constant 0 : index
    %c0_4 = arith.constant 0 : index
    %5 = vector.load %arg3[%c0_3, %c0_4] : memref<8x2048xbf16, #tpu.memory_space<vmem>>, vector<8x512xbf16>
    %cst = arith.constant dense<0.000000e+00> : vector<256x512xf32>
    %6 = tpu.matmul %4, %5, %cst {dimension_numbers = #tpu.dot_dimension_numbers<[1], [0], [0], [1], [0, 0, 1, 1], [], []>} : vector<256x8xbf16>, vector<8x512xbf16>, vector<256x512xf32> -> vector<256x512xf32>
    %c0_5 = arith.constant 0 : index
    %c0_6 = arith.constant 0 : index
    %7 = vector.load %arg4[%c0_5, %c0_6] : memref<1x2048xf32, #tpu.memory_space<vmem>>, vector<1x512xf32>
    %8 = vector.broadcast %7 : vector<1x512xf32> to vector<256x512xf32>
    %9 = arith.addf %6, %8 : vector<256x512xf32>
    %cst_7 = arith.constant 0.000000e+00 : f32
    %10 = vector.broadcast %cst_7 : f32 to vector<256x512xf32>
    %11 = arith.maximumf %9, %10 : vector<256x512xf32>
    %c0_8 = arith.constant 0 : index
    %c0_9 = arith.constant 0 : index
    %12 = vector.load %arg6[%c0_8, %c0_9] : memref<2x2048xf32, #tpu.memory_space<vmem>>, vector<2x512xf32>
    %13 = vector.shape_cast %11 : vector<256x512xf32> to vector<2x128x512xf32>
    %cst_10 = arith.constant dense<0.000000e+00> : vector<2x512xf32>
    %14 = vector.multi_reduction <add>, %13, %cst_10 [1] : vector<2x128x512xf32> to vector<2x512xf32>
    %15 = arith.addf %12, %14 : vector<2x512xf32>
    %c0_11 = arith.constant 0 : index
    %c0_12 = arith.constant 0 : index
    %16 = vector.load %arg6[%c0_11, %c0_12] : memref<2x2048xf32, #tpu.memory_space<vmem>>, vector<2x512xf32>
    tpu.vector_store %arg6[%c0_11, %c0_12], %15 {strides = array<i32>} : memref<2x2048xf32, #tpu.memory_space<vmem>>, vector<2x512xf32>,
    %c0_13 = arith.constant 0 : index
    %c512 = arith.constant 512 : index
    %17 = vector.load %arg3[%c0_13, %c512] : memref<8x2048xbf16, #tpu.memory_space<vmem>>, vector<8x512xbf16>
    %cst_14 = arith.constant dense<0.000000e+00> : vector<256x512xf32>
    %18 = tpu.matmul %4, %17, %cst_14 {dimension_numbers = #tpu.dot_dimension_numbers<[1], [0], [0], [1], [0, 0, 1, 1], [], []>} : vector<256x8xbf16>, vector<8x512xbf16>, vector<256x512xf32> -> vector<256x512xf32>
    %c0_15 = arith.constant 0 : index
    %c512_16 = arith.constant 512 : index
    %19 = vector.load %arg4[%c0_15, %c512_16] : memref<1x2048xf32, #tpu.memory_space<vmem>>, vector<1x512xf32>
    %20 = vector.broadcast %19 : vector<1x512xf32> to vector<256x512xf32>
    %21 = arith.addf %18, %20 : vector<256x512xf32>
    %cst_17 = arith.constant 0.000000e+00 : f32
    %22 = vector.broadcast %cst_17 : f32 to vector<256x512xf32>
    %23 = arith.maximumf %21, %22 : vector<256x512xf32>
    %c0_18 = arith.constant 0 : index
    %c512_19 = arith.constant 512 : index
    %24 = vector.load %arg6[%c0_18, %c512_19] : memref<2x2048xf32, #tpu.memory_space<vmem>>, vector<2x512xf32>
    %25 = vector.shape_cast %23 : vector<256x512xf32> to vector<2x128x512xf32>
    %cst_20 = arith.constant dense<0.000000e+00> : vector<2x512xf32>
    %26 = vector.multi_reduction <add>, %25, %cst_20 [1] : vector<2x128x512xf32> to vector<2x512xf32>
    %27 = arith.addf %24, %26 : vector<2x512xf32>
    %c0_21 = arith.constant 0 : index
    %c512_22 = arith.constant 512 : index
    %28 = vector.load %arg6[%c0_21, %c512_22] : memref<2x2048xf32, #tpu.memory_space<vmem>>, vector<2x512xf32>
    tpu.vector_store %arg6[%c0_21, %c512_22], %27 {strides = array<i32>} : memref<2x2048xf32, #tpu.memory_space<vmem>>, vector<2x512xf32>,
    %c0_23 = arith.constant 0 : index
    %c1024 = arith.constant 1024 : index
    %29 = vector.load %arg3[%c0_23, %c1024] : memref<8x2048xbf16, #tpu.memory_space<vmem>>, vector<8x512xbf16>
    %cst_24 = arith.constant dense<0.000000e+00> : vector<256x512xf32>
    %30 = tpu.matmul %4, %29, %cst_24 {dimension_numbers = #tpu.dot_dimension_numbers<[1], [0], [0], [1], [0, 0, 1, 1], [], []>} : vector<256x8xbf16>, vector<8x512xbf16>, vector<256x512xf32> -> vector<256x512xf32>
    %c0_25 = arith.constant 0 : index
    %c1024_26 = arith.constant 1024 : index
    %31 = vector.load %arg4[%c0_25, %c1024_26] : memref<1x2048xf32, #tpu.memory_space<vmem>>, vector<1x512xf32>
    %32 = vector.broadcast %31 : vector<1x512xf32> to vector<256x512xf32>
    %33 = arith.addf %30, %32 : vector<256x512xf32>
    %cst_27 = arith.constant 0.000000e+00 : f32
    %34 = vector.broadcast %cst_27 : f32 to vector<256x512xf32>
    %35 = arith.maximumf %33, %34 : vector<256x512xf32>
    %c0_28 = arith.constant 0 : index
    %c1024_29 = arith.constant 1024 : index
    %36 = vector.load %arg6[%c0_28, %c1024_29] : memref<2x2048xf32, #tpu.memory_space<vmem>>, vector<2x512xf32>
    %37 = vector.shape_cast %35 : vector<256x512xf32> to vector<2x128x512xf32>
    %cst_30 = arith.constant dense<0.000000e+00> : vector<2x512xf32>
    %38 = vector.multi_reduction <add>, %37, %cst_30 [1] : vector<2x128x512xf32> to vector<2x512xf32>
    %39 = arith.addf %36, %38 : vector<2x512xf32>
    %c0_31 = arith.constant 0 : index
    %c1024_32 = arith.constant 1024 : index
    %40 = vector.load %arg6[%c0_31, %c1024_32] : memref<2x2048xf32, #tpu.memory_space<vmem>>, vector<2x512xf32>
    tpu.vector_store %arg6[%c0_31, %c1024_32], %39 {strides = array<i32>} : memref<2x2048xf32, #tpu.memory_space<vmem>>, vector<2x512xf32>,
    %c0_33 = arith.constant 0 : index
    %c1536 = arith.constant 1536 : index
    %41 = vector.load %arg3[%c0_33, %c1536] : memref<8x2048xbf16, #tpu.memory_space<vmem>>, vector<8x512xbf16>
    %cst_34 = arith.constant dense<0.000000e+00> : vector<256x512xf32>
    %42 = tpu.matmul %4, %41, %cst_34 {dimension_numbers = #tpu.dot_dimension_numbers<[1], [0], [0], [1], [0, 0, 1, 1], [], []>} : vector<256x8xbf16>, vector<8x512xbf16>, vector<256x512xf32> -> vector<256x512xf32>
    %c0_35 = arith.constant 0 : index
    %c1536_36 = arith.constant 1536 : index
    %43 = vector.load %arg4[%c0_35, %c1536_36] : memref<1x2048xf32, #tpu.memory_space<vmem>>, vector<1x512xf32>
    %44 = vector.broadcast %43 : vector<1x512xf32> to vector<256x512xf32>
    %45 = arith.addf %42, %44 : vector<256x512xf32>
    %cst_37 = arith.constant 0.000000e+00 : f32
    %46 = vector.broadcast %cst_37 : f32 to vector<256x512xf32>
    %47 = arith.maximumf %45, %46 : vector<256x512xf32>
    %c0_38 = arith.constant 0 : index
    %c1536_39 = arith.constant 1536 : index
    %48 = vector.load %arg6[%c0_38, %c1536_39] : memref<2x2048xf32, #tpu.memory_space<vmem>>, vector<2x512xf32>
    %49 = vector.shape_cast %47 : vector<256x512xf32> to vector<2x128x512xf32>
    %cst_40 = arith.constant dense<0.000000e+00> : vector<2x512xf32>
    %50 = vector.multi_reduction <add>, %49, %cst_40 [1] : vector<2x128x512xf32> to vector<2x512xf32>
    %51 = arith.addf %48, %50 : vector<2x512xf32>
    %c0_41 = arith.constant 0 : index
    %c1536_42 = arith.constant 1536 : index
    %52 = vector.load %arg6[%c0_41, %c1536_42] : memref<2x2048xf32, #tpu.memory_space<vmem>>, vector<2x512xf32>
    tpu.vector_store %arg6[%c0_41, %c1536_42], %51 {strides = array<i32>} : memref<2x2048xf32, #tpu.memory_space<vmem>>, vector<2x512xf32>,
    %c0_i32_43 = arith.constant 0 : i32
    %53 = arith.cmpi eq, %arg1, %c0_i32_43 : i32
    %54 = arith.extui %53 : i1 to i32
    %c0_i32_44 = arith.constant 0 : i32
    %55 = arith.cmpi ne, %54, %c0_i32_44 : i32
    scf.if %55 {
      %c0_45 = arith.constant 0 : index
      %c0_46 = arith.constant 0 : index
      %56 = vector.load %arg6[%c0_45, %c0_46] : memref<2x2048xf32, #tpu.memory_space<vmem>>, vector<2x2048xf32>
      %57 = vector.shape_cast %56 : vector<2x2048xf32> to vector<1x2x2048xf32>
      %c0_47 = arith.constant 0 : index
      %c0_48 = arith.constant 0 : index
      %c0_49 = arith.constant 0 : index
      %58 = vector.load %arg5[%c0_47, %c0_48, %c0_49] : memref<1x2x2048xf32, #tpu.memory_space<vmem>>, vector<1x2x2048xf32>
      tpu.vector_store %arg5[%c0_47, %c0_48, %c0_49], %57 {strides = array<i32>} : memref<1x2x2048xf32, #tpu.memory_space<vmem>>, vector<1x2x2048xf32>,
    } else {
    }
    return
  }
  func.func @transform_0(%arg0: i32, %arg1: i32) -> (i32, i32, i32) {
    %c1_i32 = arith.constant 1 : i32
    %0 = arith.muli %arg0, %c1_i32 : i32
    %1 = arith.addi %0, %arg1 : i32
    %c0_i32 = arith.constant 0 : i32
    %c0_i32_0 = arith.constant 0 : i32
    %c0_i32_1 = arith.constant 0 : i32
    return %c0_i32, %1, %c0_i32_0 : i32, i32, i32
  }
  func.func @transform_1(%arg0: i32, %arg1: i32) -> (i32, i32) {
    %c0_i32 = arith.constant 0 : i32
    %c0_i32_0 = arith.constant 0 : i32
    %c0_i32_1 = arith.constant 0 : i32
    return %c0_i32, %c0_i32_0 : i32, i32
  }
  func.func @transform_2(%arg0: i32, %arg1: i32) -> (i32, i32) {
    %c0_i32 = arith.constant 0 : i32
    %c0_i32_0 = arith.constant 0 : i32
    %c0_i32_1 = arith.constant 0 : i32
    return %c0_i32, %c0_i32_0 : i32, i32
  }
  func.func @transform_3(%arg0: i32, %arg1: i32) -> (i32, i32, i32) {
    %c0_i32 = arith.constant 0 : i32
    %c0_i32_0 = arith.constant 0 : i32
    %c0_i32_1 = arith.constant 0 : i32
    return %arg0, %c0_i32, %c0_i32_0 : i32, i32, i32
  }
}

</mosaic_0001>

<llo_original>
// kernel: tpu_custom_call.1
$region0: #{tpu_custom_call.1}
  #allocation0 [shape = 'u32[]', space=smem, size = 0x4, offset = 0x4, fixed_abs, tag = 'smem constant byte address 0x4 - core index']
  #allocation1 [shape = 'u32[144,128]{1,0:T(1,128)}', space=vmem, size = 0x12000, scoped, tag = 'internal scratch']
  %s0 = inlined_call_operand.hbm [shape: f32[8,128], index: 0, kind: input, shape index: {}]
  %s1 = inlined_call_operand.hbm [shape: f32[8,128], index: 1, kind: output, shape index: {}]
  %s2 = sld [smem:[#allocation0]]
  $region18: #{tpu_custom_call.1} parent=0
    _
  %s4 = ssub.s32 1, %s2
  %s5 = scalar_select 0, %s4, %s2
  $region1: #{tpu_custom_call.1} parent=0
    #allocation2 [shape = 'u8[4096]{0}', space=vmem, size = 0x1000, scoped, tag = 'input window, operand 0, single buffered']
    #allocation3 [shape = 's32[1]{0}', space=sflag, size = 0x4, scoped, tag = 'scoped memory for tpu_custom_call.1']
    #allocation4 [shape = 's32[1]{0}', space=sflag, size = 0x4, scoped, tag = 'scoped memory for tpu_custom_call.1']
    #allocation5 [shape = 'u8[4096]{0}', space=vmem, size = 0x1000, scoped, tag = 'output window, operand 0, single buffered']
    %6 = vsyncpa [#allocation3], 0
    %7 = vsyncpa [#allocation4], 0
    // Predicated region
    $region2: #{tpu_custom_call.1} parent=1 // pred_check
      _
    $region3: #{tpu_custom_call.1} parent=1 // pred_check_branch
      %9 = sbr.rel (0) target = $region5
    $region4: #{tpu_custom_call.1} parent=1 // pred_region
      %s11 = ssub.s32 128, 128
      %12 = vsyncadd [#allocation3], %s11
      %s14 = sshll.u32 [#allocation2], 4
      %s15 = int_to_ptr.vmem [resolvable:$true] %s14
      %17 = dma.hbm_to_vmem [thread:$0]  %s0, 128, %s15, [#allocation3]
    $region5: #{tpu_custom_call.1} parent=1 // pred_fallthru
      _
    // Predicated region
    $region6: #{tpu_custom_call.1} parent=1 // pred_check
      _
    $region7: #{tpu_custom_call.1} parent=1 // pred_check_branch
      %19 = sbr.rel (0) target = $region9
    $region8: #{tpu_custom_call.1} parent=1 // pred_region
      %20 = dma.done [#allocation3], 128
    $region9: #{tpu_custom_call.1} parent=1 // pred_fallthru
      _
    %v21 = vld [vmem:[#allocation2] sm:$0xff]
    %22 = vst [vmem:[#allocation5] sm:$0xff] %v21
    // Predicated region
    $region10: #{tpu_custom_call.1} parent=1 // pred_check
      _
    $region11: #{tpu_custom_call.1} parent=1 // pred_check_branch
      %24 = sbr.rel (0) target = $region13
    $region12: #{tpu_custom_call.1} parent=1 // pred_region
      %s26 = ssub.s32 128, 128
      %27 = vsyncadd [#allocation4], %s26
      %s29 = sshll.u32 [#allocation5], 4
      %s30 = int_to_ptr.vmem [resolvable:$true] %s29
      %32 = dma.vmem_to_hbm [thread:$0]  %s30, 128, %s1, [#allocation4]
    $region13: #{tpu_custom_call.1} parent=1 // pred_fallthru
      _
    // Predicated region
    $region14: #{tpu_custom_call.1} parent=1 // pred_check
      _
    $region15: #{tpu_custom_call.1} parent=1 // pred_check_branch
      %34 = sbr.rel (0) target = $region17
    $region16: #{tpu_custom_call.1} parent=1 // pred_region
      %35 = dma.done [#allocation4], 128
    $region17: #{tpu_custom_call.1} parent=1 // pred_fallthru
      _
    %36 = vsyncpa [#allocation3], 1
    %37 = vsyncpa [#allocation4], 1

// kernel: tpu_custom_call.1
$region0: #{tpu_custom_call.1}
  #allocation0 [shape = 'u32[]', space=smem, size = 0x4, offset = 0x4, fixed_abs, tag = 'smem constant byte address 0x4 - core index']
  #allocation1 [shape = 'u32[144,128]{1,0:T(1,128)}', space=vmem, size = 0x12000, scoped, tag = 'internal scratch']
  #allocation2 [shape = 'f32[2,2048]{1,0:T(2,128)}', space=vmem, size = 0x4000, scoped, tag = 'scratch operand']
  %s0 = inlined_call_operand.vmem [shape: bf16[2,256,8], index: 0, kind: input, shape index: {}]
  %s1 = inlined_call_operand.vmem [shape: bf16[8,2048], index: 1, kind: input, shape index: {}]
  %s2 = inlined_call_operand.vmem [shape: f32[1,2048], index: 2, kind: input, shape index: {}]
  %s3 = inlined_call_operand.hbm [shape: f32[2,2,2048], index: 3, kind: output, shape index: {}]
  %s4 = sld [smem:[#allocation0]]
  $region94: #{tpu_custom_call.1} parent=0
    _
  %s6 = ssub.s32 1, %s4
  %s7 = scalar_select 0, %s6, %s4
  $region1: #{tpu_custom_call.1} parent=0
    #allocation3 [shape = 'u8[131072]{0}', space=vmem, size = 0x20000, scoped, tag = 'input window, operand 0']
    #allocation4 [shape = 'u8[32768]{0}', space=vmem, size = 0x8000, scoped, tag = 'output window, operand 0']
    #allocation5 [shape = 's32[2]{0}', space=sflag, size = 0x8, scoped, tag = 'scoped memory for tpu_custom_call.1']
    %8 = vsyncpa [#allocation5], 0
    %s9 = scalar_lea.sflag [#allocation5], 1
    %10 = vsyncpa %s9, 0
    loop: start=0, step=1, limit=4
    $region2: #{tpu_custom_call.1} parent=1 // loop_pre_header
      _
    $region3: #{tpu_custom_call.1} parent=1 // loop_header
      %s12 = sphi 0, %s16
      %p13 = scmp.ge.s32.totalorder %s12, 4
      %s19 = sphi 0, %s31
      %s20 = sphi 0, %s27
      %s21 = sphi 0, %s19
      %s22 = sphi 0, %s20
      %s23 = sphi 0, %s21
      %s24 = sphi 0, %s22
      %s36 = sphi 0, %s38
      %s39 = sphi 0, %s36
      %s40 = sphi 0, %s39
      %s56 = sphi 0, %s40
      %s60 = sphi 0, %s60
      %s62 = sphi 0, %s60
      %s63 = sphi 0, %s62
      %s77 = sphi 0, %s63
      %s81 = sphi 0, %s81
      %s83 = sphi 0, %s81
      %s84 = sphi 0, %s83
      %s98 = sphi 0, %s84
      %s104 = sphi 0, %s106
      %s107 = sphi 0, %s104
      %s108 = sphi 0, %s107
      %s124 = sphi 0, %s108
    $region4: #{tpu_custom_call.1} parent=1 // loop_header_branch
      %15 = sbr.rel (%p13) target = $region8
    $region5: #{tpu_custom_call.1} parent=1 // loop_body
      %s17 = ssub.s32 %s12, 1
      %s18 = ssub.s32 %s12, 2
      %s25 = sadd.s32 1, %s20
      %p26 = scmp.ge.s32.totalorder %s25, 1
      %s27 = scalar_select %p26, 0, %s25
      %s28 = sadd.s32 1, %s19
      %s29 = scalar_select %p26, %s28, %s19
      %p30 = scmp.ge.s32.totalorder %s29, 2
      %s31 = scalar_select %p30, 0, %s29
      %s32 = sadd.s32 %s19, %s20
      %s33 = sadd.s32 %s31, %s27
      %s34 = ssub.s32 %s32, %s33
      %p35 = scmp.eq.s32.totalorder %s34, 0
      %s37 = sadd.s32 %s36, 1
      %s38 = scalar_select %p35, %s36, %s37
      %p41 = pneg %p35
      %p42 = scmp.eq.s32.totalorder %s12, 1
      %p43 = por %p41, %p42
      %p44 = scmp.ne.s32.totalorder %s36, %s39
      %p45 = scmp.eq.s32.totalorder %s12, 0
      %p46 = por %p44, %p45
      %p47 = scmp.ne.s32.totalorder %s36, %s39
      %p48 = scmp.eq.s32.totalorder %s17, 1
      %p49 = por %p47, %p48
      %p50 = scmp.ne.s32.totalorder %s39, %s40
      %p51 = scmp.eq.s32.totalorder %s17, 0
      %p52 = por %p50, %p51
      %p53 = scmp.ne.s32.totalorder %s39, %s40
      %p54 = scmp.eq.s32.totalorder %s18, 1
      %p55 = por %p53, %p54
      %p57 = scmp.ne.s32.totalorder %s40, %s56
      %p58 = scmp.eq.s32.totalorder %s18, 0
      %p59 = por %p57, %p58
      %s61 = sadd.s32 %s60, 1
      %p64 = scmp.eq.s32.totalorder %s12, 1
      %p65 = scmp.ne.s32.totalorder %s60, %s62
      %p66 = scmp.eq.s32.totalorder %s12, 0
      %p67 = por %p65, %p66
      %p68 = scmp.ne.s32.totalorder %s60, %s62
      %p69 = scmp.eq.s32.totalorder %s17, 1
      %p70 = por %p68, %p69
      %p71 = scmp.ne.s32.totalorder %s62, %s63
      %p72 = scmp.eq.s32.totalorder %s17, 0
      %p73 = por %p71, %p72
      %p74 = scmp.ne.s32.totalorder %s62, %s63
      %p75 = scmp.eq.s32.totalorder %s18, 1
      %p76 = por %p74, %p75
      %p78 = scmp.ne.s32.totalorder %s63, %s77
      %p79 = scmp.eq.s32.totalorder %s18, 0
      %p80 = por %p78, %p79
      %s82 = sadd.s32 %s81, 1
      %p85 = scmp.eq.s32.totalorder %s12, 1
      %p86 = scmp.ne.s32.totalorder %s81, %s83
      %p87 = scmp.eq.s32.totalorder %s12, 0
      %p88 = por %p86, %p87
      %p89 = scmp.ne.s32.totalorder %s81, %s83
      %p90 = scmp.eq.s32.totalorder %s17, 1
      %p91 = por %p89, %p90
      %p92 = scmp.ne.s32.totalorder %s83, %s84
      %p93 = scmp.eq.s32.totalorder %s17, 0
      %p94 = por %p92, %p93
      %p95 = scmp.ne.s32.totalorder %s83, %s84
      %p96 = scmp.eq.s32.totalorder %s18, 1
      %p97 = por %p95, %p96
      %p99 = scmp.ne.s32.totalorder %s84, %s98
      %p100 = scmp.eq.s32.totalorder %s18, 0
      %p101 = por %p99, %p100
      %s102 = ssub.s32 %s19, %s31
      %p103 = scmp.eq.s32.totalorder %s102, 0
      %s105 = sadd.s32 %s104, 1
      %s106 = scalar_select %p103, %s104, %s105
      %p109 = pneg %p103
      %p110 = scmp.eq.s32.totalorder %s12, 1
      %p111 = por %p109, %p110
      %p112 = scmp.ne.s32.totalorder %s104, %s107
      %p113 = scmp.eq.s32.totalorder %s12, 0
      %p114 = por %p112, %p113
      %p115 = scmp.ne.s32.totalorder %s104, %s107
      %p116 = scmp.eq.s32.totalorder %s17, 1
      %p117 = por %p115, %p116
      %p118 = scmp.ne.s32.totalorder %s107, %s108
      %p119 = scmp.eq.s32.totalorder %s17, 0
      %p120 = por %p118, %p119
      %p121 = scmp.ne.s32.totalorder %s107, %s108
      %p122 = scmp.eq.s32.totalorder %s18, 1
      %p123 = por %p121, %p122
      %p125 = scmp.ne.s32.totalorder %s108, %s124
      %p126 = scmp.eq.s32.totalorder %s18, 0
      %p127 = por %p125, %p126
      %p128 = scmp.le.s32.totalorder 1, %s12
      %p129 = scmp.lt.s32.totalorder %s12, 3
      %p130 = pnand %p128, %p129
      %p131 = pneg %p130
      // Predicated region
      $region9: #{tpu_custom_call.1} parent=5 // pred_check
        _
      $region10: #{tpu_custom_call.1} parent=5 // pred_check_branch
        %133 = sbr.rel (%p130) target = $region12
      $region11: #{tpu_custom_call.1} parent=5 // pred_region
        %s134 = ssub.s32 %s12, 1
        // Predicated region
        $region13: #{tpu_custom_call.1} parent=11 // pred_check
          %p135 = pneg %p73
        $region14: #{tpu_custom_call.1} parent=11 // pred_check_branch
          %137 = sbr.rel (%p135) target = $region16
        $region15: #{tpu_custom_call.1} parent=11 // pred_region
          _
        $region16: #{tpu_custom_call.1} parent=11 // pred_fallthru
          _
        // Predicated region
        $region17: #{tpu_custom_call.1} parent=11 // pred_check
          %p138 = pneg %p94
        $region18: #{tpu_custom_call.1} parent=11 // pred_check_branch
          %140 = sbr.rel (%p138) target = $region20
        $region19: #{tpu_custom_call.1} parent=11 // pred_region
          _
        $region20: #{tpu_custom_call.1} parent=11 // pred_fallthru
          _
      $region12: #{tpu_custom_call.1} parent=5 // pred_fallthru
        _
      %p141 = scmp.lt.s32.totalorder %s12, 2
      // Predicated region
      $region21: #{tpu_custom_call.1} parent=5 // pred_check
        %p142 = pneg %p141
      $region22: #{tpu_custom_call.1} parent=5 // pred_check_branch
        %144 = sbr.rel (%p142) target = $region24
      $region23: #{tpu_custom_call.1} parent=5 // pred_region
        // Predicated region
        $region25: #{tpu_custom_call.1} parent=23 // pred_check
          %p145 = pneg %p46
        $region26: #{tpu_custom_call.1} parent=23 // pred_check_branch
          %147 = sbr.rel (%p145) target = $region28
        $region27: #{tpu_custom_call.1} parent=23 // pred_region
          %s148 = sand.u32 %s36, 1
          %s149 = sand.u32 %s36, 1
          %s150 = smul.addr %s149, 128
          %s151 = scalar_lea.vmem [#allocation3], %s150
          %s152 = sadd.s32 %s19, %s20
          %s153 = smul.u32 16, %s152
          %s154 = smul.addr %s153, 4
          %s155 = scalar_lea.vmem %s0, %s154
          // Predicated region
          $region29: #{tpu_custom_call.1} parent=27 // pred_check
            _
          $region30: #{tpu_custom_call.1} parent=27 // pred_check_branch
            %157 = sbr.rel (0) target = $region32
          $region31: #{tpu_custom_call.1} parent=27 // pred_region
            // Predicated region
            $region33: #{tpu_custom_call.1} parent=31 // pred_check
              _
            $region34: #{tpu_custom_call.1} parent=31 // pred_check_branch
              %159 = sbr.rel target = $region36
            $region35: #{tpu_custom_call.1} parent=31 // pred_region
              // Predicated region
              $region48: #{tpu_custom_call.1} parent=35 // pred_check
                _
              $region49: #{tpu_custom_call.1} parent=35 // pred_check_branch
                %237 = sbr.rel (0) target = $region51
              $region50: #{tpu_custom_call.1} parent=35 // pred_region
                loop: start=0, step=1, limit=1
                $region52: #{tpu_custom_call.1} parent=50 // loop_pre_header
                  _
                $region53: #{tpu_custom_call.1} parent=50 // loop_header
                  %s239 = sphi 0, %s243
                  %p240 = scmp.ge.s32.totalorder %s239, 1
                  %s244 = sphi %s155, %s155
                  %s245 = sphi %s151, %s151
                $region54: #{tpu_custom_call.1} parent=50 // loop_header_branch
                  %242 = sbr.rel (%p240) target = $region58
                $region55: #{tpu_custom_call.1} parent=50 // loop_body
                  _
                $region56: #{tpu_custom_call.1} parent=50 // loop_footer
                  %s243 = sadd.s32 1, %s239
                $region57: #{tpu_custom_call.1} parent=50 // loop_footer_branch
                  %238 = sbr.rel target = $region53
                $region58: #{tpu_custom_call.1} parent=50 // loop_exit
                  _
                %s247 = ssub.s32 16, 1
                loop: start=0, step=1, limit=1
                $region59: #{tpu_custom_call.1} parent=50 // loop_pre_header
                  _
                $region60: #{tpu_custom_call.1} parent=50 // loop_header
                  %s249 = sphi 0, %s253
                  %p250 = scmp.ge.s32.totalorder %s249, 1
                  %s254 = sphi %s155, %s155
                  %s255 = sphi %s151, %s151
                $region61: #{tpu_custom_call.1} parent=50 // loop_header_branch
                  %252 = sbr.rel (%p250) target = $region65
                $region62: #{tpu_custom_call.1} parent=50 // loop_body
                  %v256 = vld [vmem:[%s254] sm:%s247]
                  %257 = vst [vmem:[%s255] sm:%s247] %v256
                  %v258 = vld [vmem:[%s254 + $0x4] sm:%s247]
                  %259 = vst [vmem:[%s255 + $0x4] sm:%s247] %v258
                  %v260 = vld [vmem:[%s254 + $0x8] sm:%s247]
                  %261 = vst [vmem:[%s255 + $0x8] sm:%s247] %v260
                  %v262 = vld [vmem:[%s254 + $0xc] sm:%s247]
                  %263 = vst [vmem:[%s255 + $0xc] sm:%s247] %v262
                  %v264 = vld [vmem:[%s254 + $0x10] sm:%s247]
                  %265 = vst [vmem:[%s255 + $0x10] sm:%s247] %v264
                  %v266 = vld [vmem:[%s254 + $0x14] sm:%s247]
                  %267 = vst [vmem:[%s255 + $0x14] sm:%s247] %v266
                  %v268 = vld [vmem:[%s254 + $0x18] sm:%s247]
                  %269 = vst [vmem:[%s255 + $0x18] sm:%s247] %v268
                  %v270 = vld [vmem:[%s254 + $0x1c] sm:%s247]
                  %271 = vst [vmem:[%s255 + $0x1c] sm:%s247] %v270
                  %v272 = vld [vmem:[%s254 + $0x20] sm:%s247]
                  %273 = vst [vmem:[%s255 + $0x20] sm:%s247] %v272
                  %v274 = vld [vmem:[%s254 + $0x24] sm:%s247]
                  %275 = vst [vmem:[%s255 + $0x24] sm:%s247] %v274
                  %v276 = vld [vmem:[%s254 + $0x28] sm:%s247]
                  %277 = vst [vmem:[%s255 + $0x28] sm:%s247] %v276
                  %v278 = vld [vmem:[%s254 + $0x2c] sm:%s247]
                  %279 = vst [vmem:[%s255 + $0x2c] sm:%s247] %v278
                  %v280 = vld [vmem:[%s254 + $0x30] sm:%s247]
                  %281 = vst [vmem:[%s255 + $0x30] sm:%s247] %v280
                  %v282 = vld [vmem:[%s254 + $0x34] sm:%s247]
                  %283 = vst [vmem:[%s255 + $0x34] sm:%s247] %v282
                  %v284 = vld [vmem:[%s254 + $0x38] sm:%s247]
                  %285 = vst [vmem:[%s255 + $0x38] sm:%s247] %v284
                  %v286 = vld [vmem:[%s254 + $0x3c] sm:%s247]
                  %287 = vst [vmem:[%s255 + $0x3c] sm:%s247] %v286
                  %v288 = vld [vmem:[%s254 + $0x80] sm:%s247]
                  %289 = vst [vmem:[%s255 + $0x40] sm:%s247] %v288
                  %v290 = vld [vmem:[%s254 + $0x84] sm:%s247]
                  %291 = vst [vmem:[%s255 + $0x44] sm:%s247] %v290
                  %v292 = vld [vmem:[%s254 + $0x88] sm:%s247]
                  %293 = vst [vmem:[%s255 + $0x48] sm:%s247] %v292
                  %v294 = vld [vmem:[%s254 + $0x8c] sm:%s247]
                  %295 = vst [vmem:[%s255 + $0x4c] sm:%s247] %v294
                  %v296 = vld [vmem:[%s254 + $0x90] sm:%s247]
                  %297 = vst [vmem:[%s255 + $0x50] sm:%s247] %v296
                  %v298 = vld [vmem:[%s254 + $0x94] sm:%s247]
                  %299 = vst [vmem:[%s255 + $0x54] sm:%s247] %v298
                  %v300 = vld [vmem:[%s254 + $0x98] sm:%s247]
                  %301 = vst [vmem:[%s255 + $0x58] sm:%s247] %v300
                  %v302 = vld [vmem:[%s254 + $0x9c] sm:%s247]
                  %303 = vst [vmem:[%s255 + $0x5c] sm:%s247] %v302
                  %v304 = vld [vmem:[%s254 + $0xa0] sm:%s247]
                  %305 = vst [vmem:[%s255 + $0x60] sm:%s247] %v304
                  %v306 = vld [vmem:[%s254 + $0xa4] sm:%s247]
                  %307 = vst [vmem:[%s255 + $0x64] sm:%s247] %v306
                  %v308 = vld [vmem:[%s254 + $0xa8] sm:%s247]
                  %309 = vst [vmem:[%s255 + $0x68] sm:%s247] %v308
                  %v310 = vld [vmem:[%s254 + $0xac] sm:%s247]
                  %311 = vst [vmem:[%s255 + $0x6c] sm:%s247] %v310
                  %v312 = vld [vmem:[%s254 + $0xb0] sm:%s247]
                  %313 = vst [vmem:[%s255 + $0x70] sm:%s247] %v312
                  %v314 = vld [vmem:[%s254 + $0xb4] sm:%s247]
                  %315 = vst [vmem:[%s255 + $0x74] sm:%s247] %v314
                  %v316 = vld [vmem:[%s254 + $0xb8] sm:%s247]
                  %317 = vst [vmem:[%s255 + $0x78] sm:%s247] %v316
                  %v318 = vld [vmem:[%s254 + $0xbc] sm:%s247]
                  %319 = vst [vmem:[%s255 + $0x7c] sm:%s247] %v318
                $region63: #{tpu_custom_call.1} parent=50 // loop_footer
                  %s253 = sadd.s32 1, %s249
                $region64: #{tpu_custom_call.1} parent=50 // loop_footer_branch
                  %248 = sbr.rel target = $region60
                $region65: #{tpu_custom_call.1} parent=50 // loop_exit
                  _
              $region51: #{tpu_custom_call.1} parent=35 // pred_fallthru
                _
            $region36: #{tpu_custom_call.1} parent=31 // pred_fallthru
              _
            // Predicated region
            $region37: #{tpu_custom_call.1} parent=31 // pred_check
              _
            $region38: #{tpu_custom_call.1} parent=31 // pred_check_branch
              %161 = sbr.rel (0) target = $region40
            $region39: #{tpu_custom_call.1} parent=31 // pred_region
              %s163 = ssub.s32 16, 1
              loop: start=0, step=1, limit=1
              $region41: #{tpu_custom_call.1} parent=39 // loop_pre_header
                _
              $region42: #{tpu_custom_call.1} parent=39 // loop_header
                %s165 = sphi 0, %s169
                %p166 = scmp.ge.s32.totalorder %s165, 1
                %s170 = sphi %s155, %s155
                %s171 = sphi %s151, %s151
              $region43: #{tpu_custom_call.1} parent=39 // loop_header_branch
                %168 = sbr.rel (%p166) target = $region47
              $region44: #{tpu_custom_call.1} parent=39 // loop_body
                %v172 = vld [vmem:[%s170] sm:%s163]
                %173 = vst [vmem:[%s171] sm:%s163] %v172
                %v174 = vld [vmem:[%s170 + $0x4] sm:%s163]
                %175 = vst [vmem:[%s171 + $0x4] sm:%s163] %v174
                %v176 = vld [vmem:[%s170 + $0x8] sm:%s163]
                %177 = vst [vmem:[%s171 + $0x8] sm:%s163] %v176
                %v178 = vld [vmem:[%s170 + $0xc] sm:%s163]
                %179 = vst [vmem:[%s171 + $0xc] sm:%s163] %v178
                %v180 = vld [vmem:[%s170 + $0x10] sm:%s163]
                %181 = vst [vmem:[%s171 + $0x10] sm:%s163] %v180
                %v182 = vld [vmem:[%s170 + $0x14] sm:%s163]
                %183 = vst [vmem:[%s171 + $0x14] sm:%s163] %v182
                %v184 = vld [vmem:[%s170 + $0x18] sm:%s163]
                %185 = vst [vmem:[%s171 + $0x18] sm:%s163] %v184
                %v186 = vld [vmem:[%s170 + $0x1c] sm:%s163]
                %187 = vst [vmem:[%s171 + $0x1c] sm:%s163] %v186
                %v188 = vld [vmem:[%s170 + $0x20] sm:%s163]
                %189 = vst [vmem:[%s171 + $0x20] sm:%s163] %v188
                %v190 = vld [vmem:[%s170 + $0x24] sm:%s163]
                %191 = vst [vmem:[%s171 + $0x24] sm:%s163] %v190
                %v192 = vld [vmem:[%s170 + $0x28] sm:%s163]
                %193 = vst [vmem:[%s171 + $0x28] sm:%s163] %v192
                %v194 = vld [vmem:[%s170 + $0x2c] sm:%s163]
                %195 = vst [vmem:[%s171 + $0x2c] sm:%s163] %v194
                %v196 = vld [vmem:[%s170 + $0x30] sm:%s163]
                %197 = vst [vmem:[%s171 + $0x30] sm:%s163] %v196
                %v198 = vld [vmem:[%s170 + $0x34] sm:%s163]
                %199 = vst [vmem:[%s171 + $0x34] sm:%s163] %v198
                %v200 = vld [vmem:[%s170 + $0x38] sm:%s163]
                %201 = vst [vmem:[%s171 + $0x38] sm:%s163] %v200
                %v202 = vld [vmem:[%s170 + $0x3c] sm:%s163]
                %203 = vst [vmem:[%s171 + $0x3c] sm:%s163] %v202
                %v204 = vld [vmem:[%s170 + $0x80] sm:%s163]
                %205 = vst [vmem:[%s171 + $0x40] sm:%s163] %v204
                %v206 = vld [vmem:[%s170 + $0x84] sm:%s163]
                %207 = vst [vmem:[%s171 + $0x44] sm:%s163] %v206
                %v208 = vld [vmem:[%s170 + $0x88] sm:%s163]
                %209 = vst [vmem:[%s171 + $0x48] sm:%s163] %v208
                %v210 = vld [vmem:[%s170 + $0x8c] sm:%s163]
                %211 = vst [vmem:[%s171 + $0x4c] sm:%s163] %v210
                %v212 = vld [vmem:[%s170 + $0x90] sm:%s163]
                %213 = vst [vmem:[%s171 + $0x50] sm:%s163] %v212
                %v214 = vld [vmem:[%s170 + $0x94] sm:%s163]
                %215 = vst [vmem:[%s171 + $0x54] sm:%s163] %v214
                %v216 = vld [vmem:[%s170 + $0x98] sm:%s163]
                %217 = vst [vmem:[%s171 + $0x58] sm:%s163] %v216
                %v218 = vld [vmem:[%s170 + $0x9c] sm:%s163]
                %219 = vst [vmem:[%s171 + $0x5c] sm:%s163] %v218
                %v220 = vld [vmem:[%s170 + $0xa0] sm:%s163]
                %221 = vst [vmem:[%s171 + $0x60] sm:%s163] %v220
                %v222 = vld [vmem:[%s170 + $0xa4] sm:%s163]
                %223 = vst [vmem:[%s171 + $0x64] sm:%s163] %v222
                %v224 = vld [vmem:[%s170 + $0xa8] sm:%s163]
                %225 = vst [vmem:[%s171 + $0x68] sm:%s163] %v224
                %v226 = vld [vmem:[%s170 + $0xac] sm:%s163]
                %227 = vst [vmem:[%s171 + $0x6c] sm:%s163] %v226
                %v228 = vld [vmem:[%s170 + $0xb0] sm:%s163]
                %229 = vst [vmem:[%s171 + $0x70] sm:%s163] %v228
                %v230 = vld [vmem:[%s170 + $0xb4] sm:%s163]
                %231 = vst [vmem:[%s171 + $0x74] sm:%s163] %v230
                %v232 = vld [vmem:[%s170 + $0xb8] sm:%s163]
                %233 = vst [vmem:[%s171 + $0x78] sm:%s163] %v232
                %v234 = vld [vmem:[%s170 + $0xbc] sm:%s163]
                %235 = vst [vmem:[%s171 + $0x7c] sm:%s163] %v234
              $region45: #{tpu_custom_call.1} parent=39 // loop_footer
                %s169 = sadd.s32 1, %s165
              $region46: #{tpu_custom_call.1} parent=39 // loop_footer_branch
                %164 = sbr.rel target = $region42
              $region47: #{tpu_custom_call.1} parent=39 // loop_exit
                _
            $region40: #{tpu_custom_call.1} parent=31 // pred_fallthru
              _
          $region32: #{tpu_custom_call.1} parent=27 // pred_fallthru
            _
          %320 = vnop
        $region28: #{tpu_custom_call.1} parent=23 // pred_fallthru
          _
      $region24: #{tpu_custom_call.1} parent=5 // pred_fallthru
        _
      %p321 = scmp.le.s32.totalorder 1, %s12
      %p322 = scmp.lt.s32.totalorder %s12, 3
      %p323 = pnand %p321, %p322
      %p324 = pneg %p323
      // Predicated region
      $region66: #{tpu_custom_call.1} parent=5 // pred_check
        _
      $region67: #{tpu_custom_call.1} parent=5 // pred_check_branch
        %326 = sbr.rel (%p323) target = $region69
      $region68: #{tpu_custom_call.1} parent=5 // pred_region
        %s327 = ssub.s32 %s12, 1
        %s328 = sand.u32 %s39, 1
        %s329 = sand.u32 %s39, 1
        %s330 = smul.addr %s329, 128
        %s331 = scalar_lea.vmem [#allocation3], %s330
        // Predicated region
        $region70: #{tpu_custom_call.1} parent=68 // pred_check
          %p332 = pneg %p52
        $region71: #{tpu_custom_call.1} parent=68 // pred_check_branch
          %334 = sbr.rel (%p332) target = $region73
        $region72: #{tpu_custom_call.1} parent=68 // pred_region
          _
        $region73: #{tpu_custom_call.1} parent=68 // pred_fallthru
          _
        %s335 = sand.u32 %s39, 1
        %s336 = sand.u32 %s39, 1
        %s337 = smul.addr %s336, 128
        %s338 = scalar_lea.vmem [#allocation3], %s337
        %p339 = pneg %p52
        %p340 = pneg %p49
        %p341 = pneg %p73
        %p342 = pneg %p70
        %p343 = pneg %p94
        %p344 = pneg %p91
        %p345 = pneg %p120
        %p346 = pneg %p117
        %s347 = sand.u32 %s107, 1
        %s348 = scalar_lea.sflag [#allocation5], %s347
        %s349 = sand.u32 %s107, 1
        %s350 = smul.addr %s349, 32
        %s351 = scalar_lea.vmem [#allocation4], %s350
        %s352 = sadd.s32 %s21, %s22
        %s353 = smul.u32 16, %s352
        %p355 = scmp.eq.s32.totalorder %s22, 0
        // Predicated region
        $region74: #{tpu_custom_call.1} parent=68 // pred_check
          %p356 = pneg %p355
        $region75: #{tpu_custom_call.1} parent=68 // pred_check_branch
          %358 = sbr.rel (%p356) target = $region77
        $region76: #{tpu_custom_call.1} parent=68 // pred_region
          %359 = vst [vmem:[#allocation2] sm:$0xff] 0.0
          %360 = vst [vmem:[#allocation2 + $0x8] sm:$0xff] 0.0
          %361 = vst [vmem:[#allocation2 + $0x10] sm:$0xff] 0.0
          %362 = vst [vmem:[#allocation2 + $0x18] sm:$0xff] 0.0
        $region77: #{tpu_custom_call.1} parent=68 // pred_fallthru
          _
        %v363 = vld [vmem:[%s331] sm:$0xf]
        %v364 = vld [vmem:[%s331 + $0x4] sm:$0xf]
        %v365 = vld [vmem:[%s331 + $0x8] sm:$0xf]
        %v366 = vld [vmem:[%s331 + $0xc] sm:$0xf]
        %v367 = vld [vmem:[%s331 + $0x10] sm:$0xf]
        %v368 = vld [vmem:[%s331 + $0x14] sm:$0xf]
        %v369 = vld [vmem:[%s331 + $0x18] sm:$0xf]
        %v370 = vld [vmem:[%s331 + $0x1c] sm:$0xf]
        %v371 = vld [vmem:[%s331 + $0x20] sm:$0xf]
        %v372 = vld [vmem:[%s331 + $0x24] sm:$0xf]
        %v373 = vld [vmem:[%s331 + $0x28] sm:$0xf]
        %v374 = vld [vmem:[%s331 + $0x2c] sm:$0xf]
        %v375 = vld [vmem:[%s331 + $0x30] sm:$0xf]
        %v376 = vld [vmem:[%s331 + $0x34] sm:$0xf]
        %v377 = vld [vmem:[%s331 + $0x38] sm:$0xf]
        %v378 = vld [vmem:[%s331 + $0x3c] sm:$0xf]
        %v379 = vld [vmem:[%s331 + $0x40] sm:$0xf]
        %v380 = vld [vmem:[%s331 + $0x44] sm:$0xf]
        %v381 = vld [vmem:[%s331 + $0x48] sm:$0xf]
        %v382 = vld [vmem:[%s331 + $0x4c] sm:$0xf]
        %v383 = vld [vmem:[%s331 + $0x50] sm:$0xf]
        %v384 = vld [vmem:[%s331 + $0x54] sm:$0xf]
        %v385 = vld [vmem:[%s331 + $0x58] sm:$0xf]
        %v386 = vld [vmem:[%s331 + $0x5c] sm:$0xf]
        %v387 = vld [vmem:[%s331 + $0x60] sm:$0xf]
        %v388 = vld [vmem:[%s331 + $0x64] sm:$0xf]
        %v389 = vld [vmem:[%s331 + $0x68] sm:$0xf]
        %v390 = vld [vmem:[%s331 + $0x6c] sm:$0xf]
        %v391 = vld [vmem:[%s331 + $0x70] sm:$0xf]
        %v392 = vld [vmem:[%s331 + $0x74] sm:$0xf]
        %v393 = vld [vmem:[%s331 + $0x78] sm:$0xf]
        %v394 = vld [vmem:[%s331 + $0x7c] sm:$0xf]
        %v395 = vld [vmem:[%s1] sm:$0xff]
        %v396 = vld [vmem:[%s1 + $0x8] sm:$0xff]
        %v397 = vld [vmem:[%s2] sm:$0xf]
        %v399 = vlaneseq
        %v400 = vshrl.u32 %v399, 7
        %v401 = vsub.s32 0, %v400
        %v402 = vrot.slane %v397, %v401
        %v403 = vlaneseq
        %v404 = vshrl.u32 %v403, 7
        %v405 = vsub.s32 1, %v404
        %v406 = vrot.slane %v397, %v405
        %v407 = vlaneseq
        %v408 = vshrl.u32 %v407, 7
        %v409 = vsub.s32 2, %v408
        %v410 = vrot.slane %v397, %v409
        %v411 = vlaneseq
        %v412 = vshrl.u32 %v411, 7
        %v413 = vsub.s32 3, %v412
        %v414 = vrot.slane %v397, %v413
        %v451 = vunpack.c.l.b16 %v363
        %v452 = vunpack.c.l.b16 %v364
        %v453 = vunpack.c.l.b16 %v365
        %v454 = vunpack.c.l.b16 %v366
        %v455 = vunpack.c.l.b16 %v367
        %v456 = vunpack.c.l.b16 %v368
        %v457 = vunpack.c.l.b16 %v369
        %v458 = vunpack.c.l.b16 %v370
        %v459 = vunpack.c.l.b16 %v371
        %v460 = vunpack.c.l.b16 %v372
        %v461 = vunpack.c.l.b16 %v373
        %v462 = vunpack.c.l.b16 %v374
        %v463 = vunpack.c.l.b16 %v375
        %v464 = vunpack.c.l.b16 %v376
        %v465 = vunpack.c.l.b16 %v377
        %v466 = vunpack.c.l.b16 %v378
        %v467 = vunpack.c.l.b16 %v379
        %v468 = vunpack.c.l.b16 %v380
        %v469 = vunpack.c.l.b16 %v381
        %v470 = vunpack.c.l.b16 %v382
        %v471 = vunpack.c.l.b16 %v383
        %v472 = vunpack.c.l.b16 %v384
        %v473 = vunpack.c.l.b16 %v385
        %v474 = vunpack.c.l.b16 %v386
        %v475 = vunpack.c.l.b16 %v387
        %v476 = vunpack.c.l.b16 %v388
        %v477 = vunpack.c.l.b16 %v389
        %v478 = vunpack.c.l.b16 %v390
        %v479 = vunpack.c.l.b16 %v391
        %v480 = vunpack.c.l.b16 %v392
        %v481 = vunpack.c.l.b16 %v393
        %v482 = vunpack.c.l.b16 %v394
        %v483 = vpack.c.b16 %v452, %v451
        %v484 = vpack.c.b16 %v454, %v453
        %v485 = vpack.c.b16 %v456, %v455
        %v486 = vpack.c.b16 %v458, %v457
        %v487 = vpack.c.b16 %v460, %v459
        %v488 = vpack.c.b16 %v462, %v461
        %v489 = vpack.c.b16 %v464, %v463
        %v490 = vpack.c.b16 %v466, %v465
        %v491 = vpack.c.b16 %v468, %v467
        %v492 = vpack.c.b16 %v470, %v469
        %v493 = vpack.c.b16 %v472, %v471
        %v494 = vpack.c.b16 %v474, %v473
        %v495 = vpack.c.b16 %v476, %v475
        %v496 = vpack.c.b16 %v478, %v477
        %v497 = vpack.c.b16 %v480, %v479
        %v498 = vpack.c.b16 %v482, %v481
        %v501 = vunpack.c.l.b16 %v395
        %v502 = vunpack.c.h.b16 %v395
        %v503 = vunpack.c.l.b16 %v396
        %v504 = vunpack.c.h.b16 %v396
        %v505 = vpack.c.b16 %v501, %v501
        %v506 = vpack.c.b16 %v502, %v502
        %v507 = vpack.c.b16 %v503, %v503
        %v508 = vpack.c.b16 %v504, %v504
        %vm509 = vcmask 64512
        %v511 = vsel %vm509, %v483, 0
        %v514 = vsel %vm509, %v484, 0
        %v517 = vsel %vm509, %v485, 0
        %v520 = vsel %vm509, %v486, 0
        %v523 = vsel %vm509, %v487, 0
        %v526 = vsel %vm509, %v488, 0
        %v529 = vsel %vm509, %v489, 0
        %v532 = vsel %vm509, %v490, 0
        %v535 = vsel %vm509, %v491, 0
        %v538 = vsel %vm509, %v492, 0
        %v541 = vsel %vm509, %v493, 0
        %v544 = vsel %vm509, %v494, 0
        %v547 = vsel %vm509, %v495, 0
        %v550 = vsel %vm509, %v496, 0
        %v553 = vsel %vm509, %v497, 0
        %v556 = vsel %vm509, %v498, 0
        %vm558 = vcmask 1043456
        %v560 = vsel %vm558, %v505, 0
        %v563 = vsel %vm558, %v506, 0
        %v566 = vsel %vm558, %v507, 0
        %v569 = vsel %vm558, %v508, 0
        %571 = vmatprep.subr.bf16.mxu0 0
        %572 = vmatpush1.bf16.msra.mxu0 0
        %573 = vmatprep.subr.bf16.mxu0 0
        %574 = vmatpush1.bf16.msra.mxu0 0
        %575 = vmatprep.subr.bf16.mxu0 0
        %576 = vmatpush1.bf16.msra.mxu0 0
        %577 = vmatprep.subr.bf16.mxu0 0
        %578 = vmatpush1.bf16.msra.mxu0 0
        %579 = vmatprep.subr.bf16.mxu0 0
        %580 = vmatpush1.bf16.msra.mxu0 0
        %581 = vmatprep.subr.bf16.mxu0 0
        %582 = vmatpush1.bf16.msra.mxu0 0
        %583 = vmatprep.subr.bf16.mxu0 0
        %584 = vmatpush1.bf16.msra.mxu0 0
        %585 = vmatprep.subr.bf16.mxu0 %v563
        %586 = vmatpush1.bf16.msra.mxu0 %v560
        %587 = vmatprep.subr.bf16.mxu0 0
        %588 = vmatpush2.bf16.msra.mxu0 0
        %589 = vmatprep.subr.bf16.mxu0 0
        %590 = vmatpush2.bf16.msra.mxu0 0
        %591 = vmatprep.subr.bf16.mxu0 0
        %592 = vmatpush2.bf16.msra.mxu0 0
        %593 = vmatprep.subr.bf16.mxu0 0
        %594 = vmatpush2.bf16.msra.mxu0 0
        %595 = vmatprep.subr.bf16.mxu0 0
        %596 = vmatpush2.bf16.msra.mxu0 0
        %597 = vmatprep.subr.bf16.mxu0 0
        %598 = vmatpush2.bf16.msra.mxu0 0
        %599 = vmatprep.subr.bf16.mxu0 0
        %600 = vmatpush2.bf16.msra.mxu0 0
        %601 = vmatprep.subr.bf16.mxu0 0
        %602 = vmatpush2.bf16.msra.mxu0 0
        %603 = vmatprep.mubr.bf16.mxu0 0
        %604 = vmatmul.mubr.bf16.gmra.mxu0 %v511
        %v605 = vpop.f32.mrf.mxu0
        %v606 = vadd.f32 %v402, %v605
        %v607 = vpop.f32.mrf.mxu0
        %v608 = vadd.f32 %v406, %v607
        %v609 = vpop.f32.mrf.mxu0
        %v610 = vadd.f32 %v402, %v609
        %v611 = vpop.f32.mrf.mxu0
        %v612 = vadd.f32 %v406, %v611
        %613 = vmatprep.mubr.bf16.mxu0 0
        %614 = vmatmul.mubr.bf16.gmra.mxu0 %v514
        %v615 = vpop.f32.mrf.mxu0
        %v616 = vadd.f32 %v402, %v615
        %v617 = vpop.f32.mrf.mxu0
        %v618 = vadd.f32 %v406, %v617
        %v619 = vpop.f32.mrf.mxu0
        %v620 = vadd.f32 %v402, %v619
        %v621 = vpop.f32.mrf.mxu0
        %v622 = vadd.f32 %v406, %v621
        %623 = vmatprep.mubr.bf16.mxu0 0
        %624 = vmatmul.mubr.bf16.gmra.mxu0 %v517
        %v625 = vpop.f32.mrf.mxu0
        %v626 = vadd.f32 %v402, %v625
        %v627 = vpop.f32.mrf.mxu0
        %v628 = vadd.f32 %v406, %v627
        %v629 = vpop.f32.mrf.mxu0
        %v630 = vadd.f32 %v402, %v629
        %v631 = vpop.f32.mrf.mxu0
        %v632 = vadd.f32 %v406, %v631
        %633 = vmatprep.mubr.bf16.mxu0 0
        %634 = vmatmul.mubr.bf16.gmra.mxu0 %v520
        %v635 = vpop.f32.mrf.mxu0
        %v636 = vadd.f32 %v402, %v635
        %v637 = vpop.f32.mrf.mxu0
        %v638 = vadd.f32 %v406, %v637
        %v639 = vpop.f32.mrf.mxu0
        %v640 = vadd.f32 %v402, %v639
        %v641 = vpop.f32.mrf.mxu0
        %v642 = vadd.f32 %v406, %v641
        %643 = vmatprep.mubr.bf16.mxu0 0
        %644 = vmatmul.mubr.bf16.gmra.mxu0 %v523
        %v645 = vpop.f32.mrf.mxu0
        %v646 = vadd.f32 %v402, %v645
        %v647 = vpop.f32.mrf.mxu0
        %v648 = vadd.f32 %v406, %v647
        %v649 = vpop.f32.mrf.mxu0
        %v650 = vadd.f32 %v402, %v649
        %v651 = vpop.f32.mrf.mxu0
        %v652 = vadd.f32 %v406, %v651
        %653 = vmatprep.mubr.bf16.mxu0 0
        %654 = vmatmul.mubr.bf16.gmra.mxu0 %v526
        %v655 = vpop.f32.mrf.mxu0
        %v656 = vadd.f32 %v402, %v655
        %v657 = vpop.f32.mrf.mxu0
        %v658 = vadd.f32 %v406, %v657
        %v659 = vpop.f32.mrf.mxu0
        %v660 = vadd.f32 %v402, %v659
        %v661 = vpop.f32.mrf.mxu0
        %v662 = vadd.f32 %v406, %v661
        %663 = vmatprep.mubr.bf16.mxu0 0
        %664 = vmatmul.mubr.bf16.gmra.mxu0 %v529
        %v665 = vpop.f32.mrf.mxu0
        %v666 = vadd.f32 %v402, %v665
        %v667 = vpop.f32.mrf.mxu0
        %v668 = vadd.f32 %v406, %v667
        %v669 = vpop.f32.mrf.mxu0
        %v670 = vadd.f32 %v402, %v669
        %v671 = vpop.f32.mrf.mxu0
        %v672 = vadd.f32 %v406, %v671
        %673 = vmatprep.mubr.bf16.mxu0 0
        %674 = vmatmul.mubr.bf16.gmra.mxu0 %v532
        %v675 = vpop.f32.mrf.mxu0
        %v676 = vadd.f32 %v402, %v675
        %v677 = vpop.f32.mrf.mxu0
        %v678 = vadd.f32 %v406, %v677
        %v679 = vpop.f32.mrf.mxu0
        %v680 = vadd.f32 %v402, %v679
        %v681 = vpop.f32.mrf.mxu0
        %v682 = vadd.f32 %v406, %v681
        %683 = vmatprep.mubr.bf16.mxu0 0
        %684 = vmatmul.mubr.bf16.gmra.mxu0 %v535
        %v685 = vpop.f32.mrf.mxu0
        %v686 = vadd.f32 %v402, %v685
        %v687 = vpop.f32.mrf.mxu0
        %v688 = vadd.f32 %v406, %v687
        %v689 = vpop.f32.mrf.mxu0
        %v690 = vadd.f32 %v402, %v689
        %v691 = vpop.f32.mrf.mxu0
        %v692 = vadd.f32 %v406, %v691
        %693 = vmatprep.mubr.bf16.mxu0 0
        %694 = vmatmul.mubr.bf16.gmra.mxu0 %v538
        %v695 = vpop.f32.mrf.mxu0
        %v696 = vadd.f32 %v402, %v695
        %v697 = vpop.f32.mrf.mxu0
        %v698 = vadd.f32 %v406, %v697
        %v699 = vpop.f32.mrf.mxu0
        %v700 = vadd.f32 %v402, %v699
        %v701 = vpop.f32.mrf.mxu0
        %v702 = vadd.f32 %v406, %v701
        %703 = vmatprep.mubr.bf16.mxu0 0
        %704 = vmatmul.mubr.bf16.gmra.mxu0 %v541
        %v705 = vpop.f32.mrf.mxu0
        %v706 = vadd.f32 %v402, %v705
        %v707 = vpop.f32.mrf.mxu0
        %v708 = vadd.f32 %v406, %v707
        %v709 = vpop.f32.mrf.mxu0
        %v710 = vadd.f32 %v402, %v709
        %v711 = vpop.f32.mrf.mxu0
        %v712 = vadd.f32 %v406, %v711
        %713 = vmatprep.mubr.bf16.mxu0 0
        %714 = vmatmul.mubr.bf16.gmra.mxu0 %v544
        %v715 = vpop.f32.mrf.mxu0
        %v716 = vadd.f32 %v402, %v715
        %v717 = vpop.f32.mrf.mxu0
        %v718 = vadd.f32 %v406, %v717
        %v719 = vpop.f32.mrf.mxu0
        %v720 = vadd.f32 %v402, %v719
        %v721 = vpop.f32.mrf.mxu0
        %v722 = vadd.f32 %v406, %v721
        %723 = vmatprep.mubr.bf16.mxu0 0
        %724 = vmatmul.mubr.bf16.gmra.mxu0 %v547
        %v725 = vpop.f32.mrf.mxu0
        %v726 = vadd.f32 %v402, %v725
        %v727 = vpop.f32.mrf.mxu0
        %v728 = vadd.f32 %v406, %v727
        %v729 = vpop.f32.mrf.mxu0
        %v730 = vadd.f32 %v402, %v729
        %v731 = vpop.f32.mrf.mxu0
        %v732 = vadd.f32 %v406, %v731
        %733 = vmatprep.mubr.bf16.mxu0 0
        %734 = vmatmul.mubr.bf16.gmra.mxu0 %v550
        %v735 = vpop.f32.mrf.mxu0
        %v736 = vadd.f32 %v402, %v735
        %v737 = vpop.f32.mrf.mxu0
        %v738 = vadd.f32 %v406, %v737
        %v739 = vpop.f32.mrf.mxu0
        %v740 = vadd.f32 %v402, %v739
        %v741 = vpop.f32.mrf.mxu0
        %v742 = vadd.f32 %v406, %v741
        %743 = vmatprep.mubr.bf16.mxu0 0
        %744 = vmatmul.mubr.bf16.gmra.mxu0 %v553
        %v745 = vpop.f32.mrf.mxu0
        %v746 = vadd.f32 %v402, %v745
        %v747 = vpop.f32.mrf.mxu0
        %v748 = vadd.f32 %v406, %v747
        %v749 = vpop.f32.mrf.mxu0
        %v750 = vadd.f32 %v402, %v749
        %v751 = vpop.f32.mrf.mxu0
        %v752 = vadd.f32 %v406, %v751
        %753 = vmatprep.mubr.bf16.mxu0 0
        %754 = vmatmul.mubr.bf16.gmra.mxu0 %v556
        %v755 = vpop.f32.mrf.mxu0
        %v756 = vadd.f32 %v402, %v755
        %v757 = vpop.f32.mrf.mxu0
        %v758 = vadd.f32 %v406, %v757
        %v759 = vpop.f32.mrf.mxu0
        %v760 = vadd.f32 %v402, %v759
        %v761 = vpop.f32.mrf.mxu0
        %v762 = vadd.f32 %v406, %v761
        %763 = vdwg.mxu0
        %764 = vmatprep.subr.bf16.mxu0 0
        %765 = vmatpush1.bf16.msra.mxu0 0
        %766 = vmatprep.subr.bf16.mxu0 0
        %767 = vmatpush1.bf16.msra.mxu0 0
        %768 = vmatprep.subr.bf16.mxu0 0
        %769 = vmatpush1.bf16.msra.mxu0 0
        %770 = vmatprep.subr.bf16.mxu0 0
        %771 = vmatpush1.bf16.msra.mxu0 0
        %772 = vmatprep.subr.bf16.mxu0 0
        %773 = vmatpush1.bf16.msra.mxu0 0
        %774 = vmatprep.subr.bf16.mxu0 0
        %775 = vmatpush1.bf16.msra.mxu0 0
        %776 = vmatprep.subr.bf16.mxu0 0
        %777 = vmatpush1.bf16.msra.mxu0 0
        %778 = vmatprep.subr.bf16.mxu0 %v569
        %779 = vmatpush1.bf16.msra.mxu0 %v566
        %780 = vmatprep.subr.bf16.mxu0 0
        %781 = vmatpush2.bf16.msra.mxu0 0
        %782 = vmatprep.subr.bf16.mxu0 0
        %783 = vmatpush2.bf16.msra.mxu0 0
        %784 = vmatprep.subr.bf16.mxu0 0
        %785 = vmatpush2.bf16.msra.mxu0 0
        %786 = vmatprep.subr.bf16.mxu0 0
        %787 = vmatpush2.bf16.msra.mxu0 0
        %788 = vmatprep.subr.bf16.mxu0 0
        %789 = vmatpush2.bf16.msra.mxu0 0
        %790 = vmatprep.subr.bf16.mxu0 0
        %791 = vmatpush2.bf16.msra.mxu0 0
        %792 = vmatprep.subr.bf16.mxu0 0
        %793 = vmatpush2.bf16.msra.mxu0 0
        %794 = vmatprep.subr.bf16.mxu0 0
        %795 = vmatpush2.bf16.msra.mxu0 0
        %796 = vmatprep.mubr.bf16.mxu0 0
        %797 = vmatmul.mubr.bf16.gmra.mxu0 %v511
        %v798 = vpop.f32.mrf.mxu0
        %v799 = vadd.f32 %v410, %v798
        %v800 = vpop.f32.mrf.mxu0
        %v801 = vadd.f32 %v414, %v800
        %v802 = vpop.f32.mrf.mxu0
        %v803 = vadd.f32 %v410, %v802
        %v804 = vpop.f32.mrf.mxu0
        %v805 = vadd.f32 %v414, %v804
        %806 = vmatprep.mubr.bf16.mxu0 0
        %807 = vmatmul.mubr.bf16.gmra.mxu0 %v514
        %v808 = vpop.f32.mrf.mxu0
        %v809 = vadd.f32 %v410, %v808
        %v810 = vpop.f32.mrf.mxu0
        %v811 = vadd.f32 %v414, %v810
        %v812 = vpop.f32.mrf.mxu0
        %v813 = vadd.f32 %v410, %v812
        %v814 = vpop.f32.mrf.mxu0
        %v815 = vadd.f32 %v414, %v814
        %816 = vmatprep.mubr.bf16.mxu0 0
        %817 = vmatmul.mubr.bf16.gmra.mxu0 %v517
        %v818 = vpop.f32.mrf.mxu0
        %v819 = vadd.f32 %v410, %v818
        %v820 = vpop.f32.mrf.mxu0
        %v821 = vadd.f32 %v414, %v820
        %v822 = vpop.f32.mrf.mxu0
        %v823 = vadd.f32 %v410, %v822
        %v824 = vpop.f32.mrf.mxu0
        %v825 = vadd.f32 %v414, %v824
        %826 = vmatprep.mubr.bf16.mxu0 0
        %827 = vmatmul.mubr.bf16.gmra.mxu0 %v520
        %v828 = vpop.f32.mrf.mxu0
        %v829 = vadd.f32 %v410, %v828
        %v830 = vpop.f32.mrf.mxu0
        %v831 = vadd.f32 %v414, %v830
        %v832 = vpop.f32.mrf.mxu0
        %v833 = vadd.f32 %v410, %v832
        %v834 = vpop.f32.mrf.mxu0
        %v835 = vadd.f32 %v414, %v834
        %836 = vmatprep.mubr.bf16.mxu0 0
        %837 = vmatmul.mubr.bf16.gmra.mxu0 %v523
        %v838 = vpop.f32.mrf.mxu0
        %v839 = vadd.f32 %v410, %v838
        %v840 = vpop.f32.mrf.mxu0
        %v841 = vadd.f32 %v414, %v840
        %v842 = vpop.f32.mrf.mxu0
        %v843 = vadd.f32 %v410, %v842
        %v844 = vpop.f32.mrf.mxu0
        %v845 = vadd.f32 %v414, %v844
        %846 = vmatprep.mubr.bf16.mxu0 0
        %847 = vmatmul.mubr.bf16.gmra.mxu0 %v526
        %v848 = vpop.f32.mrf.mxu0
        %v849 = vadd.f32 %v410, %v848
        %v850 = vpop.f32.mrf.mxu0
        %v851 = vadd.f32 %v414, %v850
        %v852 = vpop.f32.mrf.mxu0
        %v853 = vadd.f32 %v410, %v852
        %v854 = vpop.f32.mrf.mxu0
        %v855 = vadd.f32 %v414, %v854
        %856 = vmatprep.mubr.bf16.mxu0 0
        %857 = vmatmul.mubr.bf16.gmra.mxu0 %v529
        %v858 = vpop.f32.mrf.mxu0
        %v859 = vadd.f32 %v410, %v858
        %v860 = vpop.f32.mrf.mxu0
        %v861 = vadd.f32 %v414, %v860
        %v862 = vpop.f32.mrf.mxu0
        %v863 = vadd.f32 %v410, %v862
        %v864 = vpop.f32.mrf.mxu0
        %v865 = vadd.f32 %v414, %v864
        %866 = vmatprep.mubr.bf16.mxu0 0
        %867 = vmatmul.mubr.bf16.gmra.mxu0 %v532
        %v868 = vpop.f32.mrf.mxu0
        %v869 = vadd.f32 %v410, %v868
        %v870 = vpop.f32.mrf.mxu0
        %v871 = vadd.f32 %v414, %v870
        %v872 = vpop.f32.mrf.mxu0
        %v873 = vadd.f32 %v410, %v872
        %v874 = vpop.f32.mrf.mxu0
        %v875 = vadd.f32 %v414, %v874
        %876 = vmatprep.mubr.bf16.mxu0 0
        %877 = vmatmul.mubr.bf16.gmra.mxu0 %v535
        %v878 = vpop.f32.mrf.mxu0
        %v879 = vadd.f32 %v410, %v878
        %v880 = vpop.f32.mrf.mxu0
        %v881 = vadd.f32 %v414, %v880
        %v882 = vpop.f32.mrf.mxu0
        %v883 = vadd.f32 %v410, %v882
        %v884 = vpop.f32.mrf.mxu0
        %v885 = vadd.f32 %v414, %v884
        %886 = vmatprep.mubr.bf16.mxu0 0
        %887 = vmatmul.mubr.bf16.gmra.mxu0 %v538
        %v888 = vpop.f32.mrf.mxu0
        %v889 = vadd.f32 %v410, %v888
        %v890 = vpop.f32.mrf.mxu0
        %v891 = vadd.f32 %v414, %v890
        %v892 = vpop.f32.mrf.mxu0
        %v893 = vadd.f32 %v410, %v892
        %v894 = vpop.f32.mrf.mxu0
        %v895 = vadd.f32 %v414, %v894
        %896 = vmatprep.mubr.bf16.mxu0 0
        %897 = vmatmul.mubr.bf16.gmra.mxu0 %v541
        %v898 = vpop.f32.mrf.mxu0
        %v899 = vadd.f32 %v410, %v898
        %v900 = vpop.f32.mrf.mxu0
        %v901 = vadd.f32 %v414, %v900
        %v902 = vpop.f32.mrf.mxu0
        %v903 = vadd.f32 %v410, %v902
        %v904 = vpop.f32.mrf.mxu0
        %v905 = vadd.f32 %v414, %v904
        %906 = vmatprep.mubr.bf16.mxu0 0
        %907 = vmatmul.mubr.bf16.gmra.mxu0 %v544
        %v908 = vpop.f32.mrf.mxu0
        %v909 = vadd.f32 %v410, %v908
        %v910 = vpop.f32.mrf.mxu0
        %v911 = vadd.f32 %v414, %v910
        %v912 = vpop.f32.mrf.mxu0
        %v913 = vadd.f32 %v410, %v912
        %v914 = vpop.f32.mrf.mxu0
        %v915 = vadd.f32 %v414, %v914
        %916 = vmatprep.mubr.bf16.mxu0 0
        %917 = vmatmul.mubr.bf16.gmra.mxu0 %v547
        %v918 = vpop.f32.mrf.mxu0
        %v919 = vadd.f32 %v410, %v918
        %v920 = vpop.f32.mrf.mxu0
        %v921 = vadd.f32 %v414, %v920
        %v922 = vpop.f32.mrf.mxu0
        %v923 = vadd.f32 %v410, %v922
        %v924 = vpop.f32.mrf.mxu0
        %v925 = vadd.f32 %v414, %v924
        %926 = vmatprep.mubr.bf16.mxu0 0
        %927 = vmatmul.mubr.bf16.gmra.mxu0 %v550
        %v928 = vpop.f32.mrf.mxu0
        %v929 = vadd.f32 %v410, %v928
        %v930 = vpop.f32.mrf.mxu0
        %v931 = vadd.f32 %v414, %v930
        %v932 = vpop.f32.mrf.mxu0
        %v933 = vadd.f32 %v410, %v932
        %v934 = vpop.f32.mrf.mxu0
        %v935 = vadd.f32 %v414, %v934
        %936 = vmatprep.mubr.bf16.mxu0 0
        %937 = vmatmul.mubr.bf16.gmra.mxu0 %v553
        %v938 = vpop.f32.mrf.mxu0
        %v939 = vadd.f32 %v410, %v938
        %v940 = vpop.f32.mrf.mxu0
        %v941 = vadd.f32 %v414, %v940
        %v942 = vpop.f32.mrf.mxu0
        %v943 = vadd.f32 %v410, %v942
        %v944 = vpop.f32.mrf.mxu0
        %v945 = vadd.f32 %v414, %v944
        %946 = vmatprep.mubr.bf16.mxu0 0
        %947 = vmatmul.mubr.bf16.gmra.mxu0 %v556
        %v948 = vpop.f32.mrf.mxu0
        %v949 = vadd.f32 %v410, %v948
        %v950 = vpop.f32.mrf.mxu0
        %v951 = vadd.f32 %v414, %v950
        %v952 = vpop.f32.mrf.mxu0
        %v953 = vadd.f32 %v410, %v952
        %v954 = vpop.f32.mrf.mxu0
        %v955 = vadd.f32 %v414, %v954
        %956 = vdwg.mxu0
        %v957 = vmax.f32 %v606, 0.0
        %v958 = vmax.f32 %v608, 0.0
        %v959 = vmax.f32 %v799, 0.0
        %v960 = vmax.f32 %v801, 0.0
        %v961 = vmax.f32 %v610, 0.0
        %v962 = vmax.f32 %v612, 0.0
        %v963 = vmax.f32 %v803, 0.0
        %v964 = vmax.f32 %v805, 0.0
        %v965 = vmax.f32 %v616, 0.0
        %v966 = vmax.f32 %v618, 0.0
        %v967 = vmax.f32 %v809, 0.0
        %v968 = vmax.f32 %v811, 0.0
        %v969 = vmax.f32 %v620, 0.0
        %v970 = vmax.f32 %v622, 0.0
        %v971 = vmax.f32 %v813, 0.0
        %v972 = vmax.f32 %v815, 0.0
        %v973 = vmax.f32 %v626, 0.0
        %v974 = vmax.f32 %v628, 0.0
        %v975 = vmax.f32 %v819, 0.0
        %v976 = vmax.f32 %v821, 0.0
        %v977 = vmax.f32 %v630, 0.0
        %v978 = vmax.f32 %v632, 0.0
        %v979 = vmax.f32 %v823, 0.0
        %v980 = vmax.f32 %v825, 0.0
        %v981 = vmax.f32 %v636, 0.0
        %v982 = vmax.f32 %v638, 0.0
        %v983 = vmax.f32 %v829, 0.0
        %v984 = vmax.f32 %v831, 0.0
        %v985 = vmax.f32 %v640, 0.0
        %v986 = vmax.f32 %v642, 0.0
        %v987 = vmax.f32 %v833, 0.0
        %v988 = vmax.f32 %v835, 0.0
        %v989 = vmax.f32 %v646, 0.0
        %v990 = vmax.f32 %v648, 0.0
        %v991 = vmax.f32 %v839, 0.0
        %v992 = vmax.f32 %v841, 0.0
        %v993 = vmax.f32 %v650, 0.0
        %v994 = vmax.f32 %v652, 0.0
        %v995 = vmax.f32 %v843, 0.0
        %v996 = vmax.f32 %v845, 0.0
        %v997 = vmax.f32 %v656, 0.0
        %v998 = vmax.f32 %v658, 0.0
        %v999 = vmax.f32 %v849, 0.0
        %v1000 = vmax.f32 %v851, 0.0
        %v1001 = vmax.f32 %v660, 0.0
        %v1002 = vmax.f32 %v662, 0.0
        %v1003 = vmax.f32 %v853, 0.0
        %v1004 = vmax.f32 %v855, 0.0
        %v1005 = vmax.f32 %v666, 0.0
        %v1006 = vmax.f32 %v668, 0.0
        %v1007 = vmax.f32 %v859, 0.0
        %v1008 = vmax.f32 %v861, 0.0
        %v1009 = vmax.f32 %v670, 0.0
        %v1010 = vmax.f32 %v672, 0.0
        %v1011 = vmax.f32 %v863, 0.0
        %v1012 = vmax.f32 %v865, 0.0
        %v1013 = vmax.f32 %v676, 0.0
        %v1014 = vmax.f32 %v678, 0.0
        %v1015 = vmax.f32 %v869, 0.0
        %v1016 = vmax.f32 %v871, 0.0
        %v1017 = vmax.f32 %v680, 0.0
        %v1018 = vmax.f32 %v682, 0.0
        %v1019 = vmax.f32 %v873, 0.0
        %v1020 = vmax.f32 %v875, 0.0
        %v1021 = vmax.f32 %v686, 0.0
        %v1022 = vmax.f32 %v688, 0.0
        %v1023 = vmax.f32 %v879, 0.0
        %v1024 = vmax.f32 %v881, 0.0
        %v1025 = vmax.f32 %v690, 0.0
        %v1026 = vmax.f32 %v692, 0.0
        %v1027 = vmax.f32 %v883, 0.0
        %v1028 = vmax.f32 %v885, 0.0
        %v1029 = vmax.f32 %v696, 0.0
        %v1030 = vmax.f32 %v698, 0.0
        %v1031 = vmax.f32 %v889, 0.0
        %v1032 = vmax.f32 %v891, 0.0
        %v1033 = vmax.f32 %v700, 0.0
        %v1034 = vmax.f32 %v702, 0.0
        %v1035 = vmax.f32 %v893, 0.0
        %v1036 = vmax.f32 %v895, 0.0
        %v1037 = vmax.f32 %v706, 0.0
        %v1038 = vmax.f32 %v708, 0.0
        %v1039 = vmax.f32 %v899, 0.0
        %v1040 = vmax.f32 %v901, 0.0
        %v1041 = vmax.f32 %v710, 0.0
        %v1042 = vmax.f32 %v712, 0.0
        %v1043 = vmax.f32 %v903, 0.0
        %v1044 = vmax.f32 %v905, 0.0
        %v1045 = vmax.f32 %v716, 0.0
        %v1046 = vmax.f32 %v718, 0.0
        %v1047 = vmax.f32 %v909, 0.0
        %v1048 = vmax.f32 %v911, 0.0
        %v1049 = vmax.f32 %v720, 0.0
        %v1050 = vmax.f32 %v722, 0.0
        %v1051 = vmax.f32 %v913, 0.0
        %v1052 = vmax.f32 %v915, 0.0
        %v1053 = vmax.f32 %v726, 0.0
        %v1054 = vmax.f32 %v728, 0.0
        %v1055 = vmax.f32 %v919, 0.0
        %v1056 = vmax.f32 %v921, 0.0
        %v1057 = vmax.f32 %v730, 0.0
        %v1058 = vmax.f32 %v732, 0.0
        %v1059 = vmax.f32 %v923, 0.0
        %v1060 = vmax.f32 %v925, 0.0
        %v1061 = vmax.f32 %v736, 0.0
        %v1062 = vmax.f32 %v738, 0.0
        %v1063 = vmax.f32 %v929, 0.0
        %v1064 = vmax.f32 %v931, 0.0
        %v1065 = vmax.f32 %v740, 0.0
        %v1066 = vmax.f32 %v742, 0.0
        %v1067 = vmax.f32 %v933, 0.0
        %v1068 = vmax.f32 %v935, 0.0
        %v1069 = vmax.f32 %v746, 0.0
        %v1070 = vmax.f32 %v748, 0.0
        %v1071 = vmax.f32 %v939, 0.0
        %v1072 = vmax.f32 %v941, 0.0
        %v1073 = vmax.f32 %v750, 0.0
        %v1074 = vmax.f32 %v752, 0.0
        %v1075 = vmax.f32 %v943, 0.0
        %v1076 = vmax.f32 %v945, 0.0
        %v1077 = vmax.f32 %v756, 0.0
        %v1078 = vmax.f32 %v758, 0.0
        %v1079 = vmax.f32 %v949, 0.0
        %v1080 = vmax.f32 %v951, 0.0
        %v1081 = vmax.f32 %v760, 0.0
        %v1082 = vmax.f32 %v762, 0.0
        %v1083 = vmax.f32 %v953, 0.0
        %v1084 = vmax.f32 %v955, 0.0
        %v1085 = vld [vmem:[#allocation2] sm:$0xff]
        %v1086 = vadd.f32 %v957, %v961
        %v1087 = vadd.f32 %v1086, %v965
        %v1088 = vadd.f32 %v1087, %v969
        %v1089 = vadd.f32 %v1088, %v973
        %v1090 = vadd.f32 %v1089, %v977
        %v1091 = vadd.f32 %v1090, %v981
        %v1092 = vadd.f32 %v1091, %v985
        %v1093 = vadd.f32 %v1092, %v989
        %v1094 = vadd.f32 %v1093, %v993
        %v1095 = vadd.f32 %v1094, %v997
        %v1096 = vadd.f32 %v1095, %v1001
        %v1097 = vadd.f32 %v1096, %v1005
        %v1098 = vadd.f32 %v1097, %v1009
        %v1099 = vadd.f32 %v1098, %v1013
        %v1100 = vadd.f32 %v1099, %v1017
        %v1101 = vrot.slane %v1100, 4
        %v1102 = vadd.f32 %v1100, %v1101
        %v1103 = vrot.slane %v1102, 2
        %v1104 = vadd.f32 %v1102, %v1103
        %v1105 = vrot.slane %v1104, 1
        %v1106 = vadd.f32 %v1104, %v1105
        %v1107 = vadd.f32 %v958, %v962
        %v1108 = vadd.f32 %v1107, %v966
        %v1109 = vadd.f32 %v1108, %v970
        %v1110 = vadd.f32 %v1109, %v974
        %v1111 = vadd.f32 %v1110, %v978
        %v1112 = vadd.f32 %v1111, %v982
        %v1113 = vadd.f32 %v1112, %v986
        %v1114 = vadd.f32 %v1113, %v990
        %v1115 = vadd.f32 %v1114, %v994
        %v1116 = vadd.f32 %v1115, %v998
        %v1117 = vadd.f32 %v1116, %v1002
        %v1118 = vadd.f32 %v1117, %v1006
        %v1119 = vadd.f32 %v1118, %v1010
        %v1120 = vadd.f32 %v1119, %v1014
        %v1121 = vadd.f32 %v1120, %v1018
        %v1122 = vrot.slane %v1121, 4
        %v1123 = vadd.f32 %v1121, %v1122
        %v1124 = vrot.slane %v1123, 2
        %v1125 = vadd.f32 %v1123, %v1124
        %v1126 = vrot.slane %v1125, 1
        %v1127 = vadd.f32 %v1125, %v1126
        %v1128 = vadd.f32 %v959, %v963
        %v1129 = vadd.f32 %v1128, %v967
        %v1130 = vadd.f32 %v1129, %v971
        %v1131 = vadd.f32 %v1130, %v975
        %v1132 = vadd.f32 %v1131, %v979
        %v1133 = vadd.f32 %v1132, %v983
        %v1134 = vadd.f32 %v1133, %v987
        %v1135 = vadd.f32 %v1134, %v991
        %v1136 = vadd.f32 %v1135, %v995
        %v1137 = vadd.f32 %v1136, %v999
        %v1138 = vadd.f32 %v1137, %v1003
        %v1139 = vadd.f32 %v1138, %v1007
        %v1140 = vadd.f32 %v1139, %v1011
        %v1141 = vadd.f32 %v1140, %v1015
        %v1142 = vadd.f32 %v1141, %v1019
        %v1143 = vrot.slane %v1142, 4
        %v1144 = vadd.f32 %v1142, %v1143
        %v1145 = vrot.slane %v1144, 2
        %v1146 = vadd.f32 %v1144, %v1145
        %v1147 = vrot.slane %v1146, 1
        %v1148 = vadd.f32 %v1146, %v1147
        %v1149 = vadd.f32 %v960, %v964
        %v1150 = vadd.f32 %v1149, %v968
        %v1151 = vadd.f32 %v1150, %v972
        %v1152 = vadd.f32 %v1151, %v976
        %v1153 = vadd.f32 %v1152, %v980
        %v1154 = vadd.f32 %v1153, %v984
        %v1155 = vadd.f32 %v1154, %v988
        %v1156 = vadd.f32 %v1155, %v992
        %v1157 = vadd.f32 %v1156, %v996
        %v1158 = vadd.f32 %v1157, %v1000
        %v1159 = vadd.f32 %v1158, %v1004
        %v1160 = vadd.f32 %v1159, %v1008
        %v1161 = vadd.f32 %v1160, %v1012
        %v1162 = vadd.f32 %v1161, %v1016
        %v1163 = vadd.f32 %v1162, %v1020
        %v1164 = vrot.slane %v1163, 4
        %v1165 = vadd.f32 %v1163, %v1164
        %v1166 = vrot.slane %v1165, 2
        %v1167 = vadd.f32 %v1165, %v1166
        %v1168 = vrot.slane %v1167, 1
        %v1169 = vadd.f32 %v1167, %v1168
        %v1170 = vadd.f32 %v1021, %v1025
        %v1171 = vadd.f32 %v1170, %v1029
        %v1172 = vadd.f32 %v1171, %v1033
        %v1173 = vadd.f32 %v1172, %v1037
        %v1174 = vadd.f32 %v1173, %v1041
        %v1175 = vadd.f32 %v1174, %v1045
        %v1176 = vadd.f32 %v1175, %v1049
        %v1177 = vadd.f32 %v1176, %v1053
        %v1178 = vadd.f32 %v1177, %v1057
        %v1179 = vadd.f32 %v1178, %v1061
        %v1180 = vadd.f32 %v1179, %v1065
        %v1181 = vadd.f32 %v1180, %v1069
        %v1182 = vadd.f32 %v1181, %v1073
        %v1183 = vadd.f32 %v1182, %v1077
        %v1184 = vadd.f32 %v1183, %v1081
        %v1185 = vrot.slane %v1184, 4
        %v1186 = vadd.f32 %v1184, %v1185
        %v1187 = vrot.slane %v1186, 2
        %v1188 = vadd.f32 %v1186, %v1187
        %v1189 = vrot.slane %v1188, 1
        %v1190 = vadd.f32 %v1188, %v1189
        %v1191 = vadd.f32 %v1022, %v1026
        %v1192 = vadd.f32 %v1191, %v1030
        %v1193 = vadd.f32 %v1192, %v1034
        %v1194 = vadd.f32 %v1193, %v1038
        %v1195 = vadd.f32 %v1194, %v1042
        %v1196 = vadd.f32 %v1195, %v1046
        %v1197 = vadd.f32 %v1196, %v1050
        %v1198 = vadd.f32 %v1197, %v1054
        %v1199 = vadd.f32 %v1198, %v1058
        %v1200 = vadd.f32 %v1199, %v1062
        %v1201 = vadd.f32 %v1200, %v1066
        %v1202 = vadd.f32 %v1201, %v1070
        %v1203 = vadd.f32 %v1202, %v1074
        %v1204 = vadd.f32 %v1203, %v1078
        %v1205 = vadd.f32 %v1204, %v1082
        %v1206 = vrot.slane %v1205, 4
        %v1207 = vadd.f32 %v1205, %v1206
        %v1208 = vrot.slane %v1207, 2
        %v1209 = vadd.f32 %v1207, %v1208
        %v1210 = vrot.slane %v1209, 1
        %v1211 = vadd.f32 %v1209, %v1210
        %v1212 = vadd.f32 %v1023, %v1027
        %v1213 = vadd.f32 %v1212, %v1031
        %v1214 = vadd.f32 %v1213, %v1035
        %v1215 = vadd.f32 %v1214, %v1039
        %v1216 = vadd.f32 %v1215, %v1043
        %v1217 = vadd.f32 %v1216, %v1047
        %v1218 = vadd.f32 %v1217, %v1051
        %v1219 = vadd.f32 %v1218, %v1055
        %v1220 = vadd.f32 %v1219, %v1059
        %v1221 = vadd.f32 %v1220, %v1063
        %v1222 = vadd.f32 %v1221, %v1067
        %v1223 = vadd.f32 %v1222, %v1071
        %v1224 = vadd.f32 %v1223, %v1075
        %v1225 = vadd.f32 %v1224, %v1079
        %v1226 = vadd.f32 %v1225, %v1083
        %v1227 = vrot.slane %v1226, 4
        %v1228 = vadd.f32 %v1226, %v1227
        %v1229 = vrot.slane %v1228, 2
        %v1230 = vadd.f32 %v1228, %v1229
        %v1231 = vrot.slane %v1230, 1
        %v1232 = vadd.f32 %v1230, %v1231
        %v1233 = vadd.f32 %v1024, %v1028
        %v1234 = vadd.f32 %v1233, %v1032
        %v1235 = vadd.f32 %v1234, %v1036
        %v1236 = vadd.f32 %v1235, %v1040
        %v1237 = vadd.f32 %v1236, %v1044
        %v1238 = vadd.f32 %v1237, %v1048
        %v1239 = vadd.f32 %v1238, %v1052
        %v1240 = vadd.f32 %v1239, %v1056
        %v1241 = vadd.f32 %v1240, %v1060
        %v1242 = vadd.f32 %v1241, %v1064
        %v1243 = vadd.f32 %v1242, %v1068
        %v1244 = vadd.f32 %v1243, %v1072
        %v1245 = vadd.f32 %v1244, %v1076
        %v1246 = vadd.f32 %v1245, %v1080
        %v1247 = vadd.f32 %v1246, %v1084
        %v1248 = vrot.slane %v1247, 4
        %v1249 = vadd.f32 %v1247, %v1248
        %v1250 = vrot.slane %v1249, 2
        %v1251 = vadd.f32 %v1249, %v1250
        %v1252 = vrot.slane %v1251, 1
        %v1253 = vadd.f32 %v1251, %v1252
        %v1262 = vcombine.low %v1106, %v1127
        %v1263 = vcombine.low %v1148, %v1169
        %v1265 = vunpack.c.l.s4 1983009808
        %v1266 = vunpack.c.0.s8 %v1265
        %v1267 = vlaneseq
        %v1268 = vshrl.u32 %v1267, 7
        %v1269 = vsub.s32 %v1266, %v1268
        %v1270 = vrot.slane %v1262, %v1269
        %v1272 = vunpack.c.l.s4 1983009808
        %v1273 = vunpack.c.0.s8 %v1272
        %v1274 = vlaneseq
        %v1275 = vshrl.u32 %v1274, 7
        %v1276 = vsub.s32 %v1273, %v1275
        %v1277 = vrot.slane %v1263, %v1276
        %v1278 = vcombine.low %v1270, %v1277
        %v1279 = vcombine.low %v1190, %v1211
        %v1280 = vcombine.low %v1232, %v1253
        %v1282 = vunpack.c.l.s4 1983009808
        %v1283 = vunpack.c.0.s8 %v1282
        %v1284 = vlaneseq
        %v1285 = vshrl.u32 %v1284, 7
        %v1286 = vsub.s32 %v1283, %v1285
        %v1287 = vrot.slane %v1279, %v1286
        %v1289 = vunpack.c.l.s4 1983009808
        %v1290 = vunpack.c.0.s8 %v1289
        %v1291 = vlaneseq
        %v1292 = vshrl.u32 %v1291, 7
        %v1293 = vsub.s32 %v1290, %v1292
        %v1294 = vrot.slane %v1280, %v1293
        %v1295 = vcombine.low %v1287, %v1294
        %vm1296 = vcmask 1044484
        %v1297 = vsel %vm1296, %v1278, %v1278
        %vm1298 = vcmask 1046534
        %v1299 = vsel %vm1298, %v1278, %v1297
        %v1300 = vrot.slane %v1295, 7
        %vm1301 = vcmask 1041409
        %v1302 = vsel %vm1301, %v1300, %v1299
        %vm1303 = vcmask 1043459
        %v1304 = vsel %vm1303, %v1300, %v1302
        %vm1305 = vcmask 1045509
        %v1306 = vsel %vm1305, %v1300, %v1304
        %vm1307 = vcmask 1047559
        %v1308 = vsel %vm1307, %v1300, %v1306
        %v1310 = vadd.f32 %v1085, %v1308
        %1311 = vst [vmem:[#allocation2] sm:$0xff] %v1310
        %v1312 = vld [vmem:[%s1 + $0x10] sm:$0xff]
        %v1313 = vld [vmem:[%s1 + $0x18] sm:$0xff]
        %v1314 = vld [vmem:[%s2 + $0x4] sm:$0xf]
        %v1316 = vlaneseq
        %v1317 = vshrl.u32 %v1316, 7
        %v1318 = vsub.s32 0, %v1317
        %v1319 = vrot.slane %v1314, %v1318
        %v1320 = vlaneseq
        %v1321 = vshrl.u32 %v1320, 7
        %v1322 = vsub.s32 1, %v1321
        %v1323 = vrot.slane %v1314, %v1322
        %v1324 = vlaneseq
        %v1325 = vshrl.u32 %v1324, 7
        %v1326 = vsub.s32 2, %v1325
        %v1327 = vrot.slane %v1314, %v1326
        %v1328 = vlaneseq
        %v1329 = vshrl.u32 %v1328, 7
        %v1330 = vsub.s32 3, %v1329
        %v1331 = vrot.slane %v1314, %v1330
        %v1338 = vunpack.c.l.b16 %v1312
        %v1339 = vunpack.c.h.b16 %v1312
        %v1340 = vunpack.c.l.b16 %v1313
        %v1341 = vunpack.c.h.b16 %v1313
        %v1342 = vpack.c.b16 %v1338, %v1338
        %v1343 = vpack.c.b16 %v1339, %v1339
        %v1344 = vpack.c.b16 %v1340, %v1340
        %v1345 = vpack.c.b16 %v1341, %v1341
        %v1347 = vsel %vm558, %v1342, 0
        %v1350 = vsel %vm558, %v1343, 0
        %v1353 = vsel %vm558, %v1344, 0
        %v1356 = vsel %vm558, %v1345, 0
        %1358 = vmatprep.subr.bf16.mxu0 0
        %1359 = vmatpush1.bf16.msra.mxu0 0
        %1360 = vmatprep.subr.bf16.mxu0 0
        %1361 = vmatpush1.bf16.msra.mxu0 0
        %1362 = vmatprep.subr.bf16.mxu0 0
        %1363 = vmatpush1.bf16.msra.mxu0 0
        %1364 = vmatprep.subr.bf16.mxu0 0
        %1365 = vmatpush1.bf16.msra.mxu0 0
        %1366 = vmatprep.subr.bf16.mxu0 0
        %1367 = vmatpush1.bf16.msra.mxu0 0
        %1368 = vmatprep.subr.bf16.mxu0 0
        %1369 = vmatpush1.bf16.msra.mxu0 0
        %1370 = vmatprep.subr.bf16.mxu0 0
        %1371 = vmatpush1.bf16.msra.mxu0 0
        %1372 = vmatprep.subr.bf16.mxu0 %v1350
        %1373 = vmatpush1.bf16.msra.mxu0 %v1347
        %1374 = vmatprep.subr.bf16.mxu0 0
        %1375 = vmatpush2.bf16.msra.mxu0 0
        %1376 = vmatprep.subr.bf16.mxu0 0
        %1377 = vmatpush2.bf16.msra.mxu0 0
        %1378 = vmatprep.subr.bf16.mxu0 0
        %1379 = vmatpush2.bf16.msra.mxu0 0
        %1380 = vmatprep.subr.bf16.mxu0 0
        %1381 = vmatpush2.bf16.msra.mxu0 0
        %1382 = vmatprep.subr.bf16.mxu0 0
        %1383 = vmatpush2.bf16.msra.mxu0 0
        %1384 = vmatprep.subr.bf16.mxu0 0
        %1385 = vmatpush2.bf16.msra.mxu0 0
        %1386 = vmatprep.subr.bf16.mxu0 0
        %1387 = vmatpush2.bf16.msra.mxu0 0
        %1388 = vmatprep.subr.bf16.mxu0 0
        %1389 = vmatpush2.bf16.msra.mxu0 0
        %1390 = vmatprep.mubr.bf16.mxu0 0
        %1391 = vmatmul.mubr.bf16.gmra.mxu0 %v511
        %v1392 = vpop.f32.mrf.mxu0
        %v1393 = vadd.f32 %v1319, %v1392
        %v1394 = vpop.f32.mrf.mxu0
        %v1395 = vadd.f32 %v1323, %v1394
        %v1396 = vpop.f32.mrf.mxu0
        %v1397 = vadd.f32 %v1319, %v1396
        %v1398 = vpop.f32.mrf.mxu0
        %v1399 = vadd.f32 %v1323, %v1398
        %1400 = vmatprep.mubr.bf16.mxu0 0
        %1401 = vmatmul.mubr.bf16.gmra.mxu0 %v514
        %v1402 = vpop.f32.mrf.mxu0
        %v1403 = vadd.f32 %v1319, %v1402
        %v1404 = vpop.f32.mrf.mxu0
        %v1405 = vadd.f32 %v1323, %v1404
        %v1406 = vpop.f32.mrf.mxu0
        %v1407 = vadd.f32 %v1319, %v1406
        %v1408 = vpop.f32.mrf.mxu0
        %v1409 = vadd.f32 %v1323, %v1408
        %1410 = vmatprep.mubr.bf16.mxu0 0
        %1411 = vmatmul.mubr.bf16.gmra.mxu0 %v517
        %v1412 = vpop.f32.mrf.mxu0
        %v1413 = vadd.f32 %v1319, %v1412
        %v1414 = vpop.f32.mrf.mxu0
        %v1415 = vadd.f32 %v1323, %v1414
        %v1416 = vpop.f32.mrf.mxu0
        %v1417 = vadd.f32 %v1319, %v1416
        %v1418 = vpop.f32.mrf.mxu0
        %v1419 = vadd.f32 %v1323, %v1418
        %1420 = vmatprep.mubr.bf16.mxu0 0
        %1421 = vmatmul.mubr.bf16.gmra.mxu0 %v520
        %v1422 = vpop.f32.mrf.mxu0
        %v1423 = vadd.f32 %v1319, %v1422
        %v1424 = vpop.f32.mrf.mxu0
        %v1425 = vadd.f32 %v1323, %v1424
        %v1426 = vpop.f32.mrf.mxu0
        %v1427 = vadd.f32 %v1319, %v1426
        %v1428 = vpop.f32.mrf.mxu0
        %v1429 = vadd.f32 %v1323, %v1428
        %1430 = vmatprep.mubr.bf16.mxu0 0
        %1431 = vmatmul.mubr.bf16.gmra.mxu0 %v523
        %v1432 = vpop.f32.mrf.mxu0
        %v1433 = vadd.f32 %v1319, %v1432
        %v1434 = vpop.f32.mrf.mxu0
        %v1435 = vadd.f32 %v1323, %v1434
        %v1436 = vpop.f32.mrf.mxu0
        %v1437 = vadd.f32 %v1319, %v1436
        %v1438 = vpop.f32.mrf.mxu0
        %v1439 = vadd.f32 %v1323, %v1438
        %1440 = vmatprep.mubr.bf16.mxu0 0
        %1441 = vmatmul.mubr.bf16.gmra.mxu0 %v526
        %v1442 = vpop.f32.mrf.mxu0
        %v1443 = vadd.f32 %v1319, %v1442
        %v1444 = vpop.f32.mrf.mxu0
        %v1445 = vadd.f32 %v1323, %v1444
        %v1446 = vpop.f32.mrf.mxu0
        %v1447 = vadd.f32 %v1319, %v1446
        %v1448 = vpop.f32.mrf.mxu0
        %v1449 = vadd.f32 %v1323, %v1448
        %1450 = vmatprep.mubr.bf16.mxu0 0
        %1451 = vmatmul.mubr.bf16.gmra.mxu0 %v529
        %v1452 = vpop.f32.mrf.mxu0
        %v1453 = vadd.f32 %v1319, %v1452
        %v1454 = vpop.f32.mrf.mxu0
        %v1455 = vadd.f32 %v1323, %v1454
        %v1456 = vpop.f32.mrf.mxu0
        %v1457 = vadd.f32 %v1319, %v1456
        %v1458 = vpop.f32.mrf.mxu0
        %v1459 = vadd.f32 %v1323, %v1458
        %1460 = vmatprep.mubr.bf16.mxu0 0
        %1461 = vmatmul.mubr.bf16.gmra.mxu0 %v532
        %v1462 = vpop.f32.mrf.mxu0
        %v1463 = vadd.f32 %v1319, %v1462
        %v1464 = vpop.f32.mrf.mxu0
        %v1465 = vadd.f32 %v1323, %v1464
        %v1466 = vpop.f32.mrf.mxu0
        %v1467 = vadd.f32 %v1319, %v1466
        %v1468 = vpop.f32.mrf.mxu0
        %v1469 = vadd.f32 %v1323, %v1468
        %1470 = vmatprep.mubr.bf16.mxu0 0
        %1471 = vmatmul.mubr.bf16.gmra.mxu0 %v535
        %v1472 = vpop.f32.mrf.mxu0
        %v1473 = vadd.f32 %v1319, %v1472
        %v1474 = vpop.f32.mrf.mxu0
        %v1475 = vadd.f32 %v1323, %v1474
        %v1476 = vpop.f32.mrf.mxu0
        %v1477 = vadd.f32 %v1319, %v1476
        %v1478 = vpop.f32.mrf.mxu0
        %v1479 = vadd.f32 %v1323, %v1478
        %1480 = vmatprep.mubr.bf16.mxu0 0
        %1481 = vmatmul.mubr.bf16.gmra.mxu0 %v538
        %v1482 = vpop.f32.mrf.mxu0
        %v1483 = vadd.f32 %v1319, %v1482
        %v1484 = vpop.f32.mrf.mxu0
        %v1485 = vadd.f32 %v1323, %v1484
        %v1486 = vpop.f32.mrf.mxu0
        %v1487 = vadd.f32 %v1319, %v1486
        %v1488 = vpop.f32.mrf.mxu0
        %v1489 = vadd.f32 %v1323, %v1488
        %1490 = vmatprep.mubr.bf16.mxu0 0
        %1491 = vmatmul.mubr.bf16.gmra.mxu0 %v541
        %v1492 = vpop.f32.mrf.mxu0
        %v1493 = vadd.f32 %v1319, %v1492
        %v1494 = vpop.f32.mrf.mxu0
        %v1495 = vadd.f32 %v1323, %v1494
        %v1496 = vpop.f32.mrf.mxu0
        %v1497 = vadd.f32 %v1319, %v1496
        %v1498 = vpop.f32.mrf.mxu0
        %v1499 = vadd.f32 %v1323, %v1498
        %1500 = vmatprep.mubr.bf16.mxu0 0
        %1501 = vmatmul.mubr.bf16.gmra.mxu0 %v544
        %v1502 = vpop.f32.mrf.mxu0
        %v1503 = vadd.f32 %v1319, %v1502
        %v1504 = vpop.f32.mrf.mxu0
        %v1505 = vadd.f32 %v1323, %v1504
        %v1506 = vpop.f32.mrf.mxu0
        %v1507 = vadd.f32 %v1319, %v1506
        %v1508 = vpop.f32.mrf.mxu0
        %v1509 = vadd.f32 %v1323, %v1508
        %1510 = vmatprep.mubr.bf16.mxu0 0
        %1511 = vmatmul.mubr.bf16.gmra.mxu0 %v547
        %v1512 = vpop.f32.mrf.mxu0
        %v1513 = vadd.f32 %v1319, %v1512
        %v1514 = vpop.f32.mrf.mxu0
        %v1515 = vadd.f32 %v1323, %v1514
        %v1516 = vpop.f32.mrf.mxu0
        %v1517 = vadd.f32 %v1319, %v1516
        %v1518 = vpop.f32.mrf.mxu0
        %v1519 = vadd.f32 %v1323, %v1518
        %1520 = vmatprep.mubr.bf16.mxu0 0
        %1521 = vmatmul.mubr.bf16.gmra.mxu0 %v550
        %v1522 = vpop.f32.mrf.mxu0
        %v1523 = vadd.f32 %v1319, %v1522
        %v1524 = vpop.f32.mrf.mxu0
        %v1525 = vadd.f32 %v1323, %v1524
        %v1526 = vpop.f32.mrf.mxu0
        %v1527 = vadd.f32 %v1319, %v1526
        %v1528 = vpop.f32.mrf.mxu0
        %v1529 = vadd.f32 %v1323, %v1528
        %1530 = vmatprep.mubr.bf16.mxu0 0
        %1531 = vmatmul.mubr.bf16.gmra.mxu0 %v553
        %v1532 = vpop.f32.mrf.mxu0
        %v1533 = vadd.f32 %v1319, %v1532
        %v1534 = vpop.f32.mrf.mxu0
        %v1535 = vadd.f32 %v1323, %v1534
        %v1536 = vpop.f32.mrf.mxu0
        %v1537 = vadd.f32 %v1319, %v1536
        %v1538 = vpop.f32.mrf.mxu0
        %v1539 = vadd.f32 %v1323, %v1538
        %1540 = vmatprep.mubr.bf16.mxu0 0
        %1541 = vmatmul.mubr.bf16.gmra.mxu0 %v556
        %v1542 = vpop.f32.mrf.mxu0
        %v1543 = vadd.f32 %v1319, %v1542
        %v1544 = vpop.f32.mrf.mxu0
        %v1545 = vadd.f32 %v1323, %v1544
        %v1546 = vpop.f32.mrf.mxu0
        %v1547 = vadd.f32 %v1319, %v1546
        %v1548 = vpop.f32.mrf.mxu0
        %v1549 = vadd.f32 %v1323, %v1548
        %1550 = vdwg.mxu0
        %1551 = vmatprep.subr.bf16.mxu0 0
        %1552 = vmatpush1.bf16.msra.mxu0 0
        %1553 = vmatprep.subr.bf16.mxu0 0
        %1554 = vmatpush1.bf16.msra.mxu0 0
        %1555 = vmatprep.subr.bf16.mxu0 0
        %1556 = vmatpush1.bf16.msra.mxu0 0
        %1557 = vmatprep.subr.bf16.mxu0 0
        %1558 = vmatpush1.bf16.msra.mxu0 0
        %1559 = vmatprep.subr.bf16.mxu0 0
        %1560 = vmatpush1.bf16.msra.mxu0 0
        %1561 = vmatprep.subr.bf16.mxu0 0
        %1562 = vmatpush1.bf16.msra.mxu0 0
        %1563 = vmatprep.subr.bf16.mxu0 0
        %1564 = vmatpush1.bf16.msra.mxu0 0
        %1565 = vmatprep.subr.bf16.mxu0 %v1356
        %1566 = vmatpush1.bf16.msra.mxu0 %v1353
        %1567 = vmatprep.subr.bf16.mxu0 0
        %1568 = vmatpush2.bf16.msra.mxu0 0
        %1569 = vmatprep.subr.bf16.mxu0 0
        %1570 = vmatpush2.bf16.msra.mxu0 0
        %1571 = vmatprep.subr.bf16.mxu0 0
        %1572 = vmatpush2.bf16.msra.mxu0 0
        %1573 = vmatprep.subr.bf16.mxu0 0
        %1574 = vmatpush2.bf16.msra.mxu0 0
        %1575 = vmatprep.subr.bf16.mxu0 0
        %1576 = vmatpush2.bf16.msra.mxu0 0
        %1577 = vmatprep.subr.bf16.mxu0 0
        %1578 = vmatpush2.bf16.msra.mxu0 0
        %1579 = vmatprep.subr.bf16.mxu0 0
        %1580 = vmatpush2.bf16.msra.mxu0 0
        %1581 = vmatprep.subr.bf16.mxu0 0
        %1582 = vmatpush2.bf16.msra.mxu0 0
        %1583 = vmatprep.mubr.bf16.mxu0 0
        %1584 = vmatmul.mubr.bf16.gmra.mxu0 %v511
        %v1585 = vpop.f32.mrf.mxu0
        %v1586 = vadd.f32 %v1327, %v1585
        %v1587 = vpop.f32.mrf.mxu0
        %v1588 = vadd.f32 %v1331, %v1587
        %v1589 = vpop.f32.mrf.mxu0
        %v1590 = vadd.f32 %v1327, %v1589
        %v1591 = vpop.f32.mrf.mxu0
        %v1592 = vadd.f32 %v1331, %v1591
        %1593 = vmatprep.mubr.bf16.mxu0 0
        %1594 = vmatmul.mubr.bf16.gmra.mxu0 %v514
        %v1595 = vpop.f32.mrf.mxu0
        %v1596 = vadd.f32 %v1327, %v1595
        %v1597 = vpop.f32.mrf.mxu0
        %v1598 = vadd.f32 %v1331, %v1597
        %v1599 = vpop.f32.mrf.mxu0
        %v1600 = vadd.f32 %v1327, %v1599
        %v1601 = vpop.f32.mrf.mxu0
        %v1602 = vadd.f32 %v1331, %v1601
        %1603 = vmatprep.mubr.bf16.mxu0 0
        %1604 = vmatmul.mubr.bf16.gmra.mxu0 %v517
        %v1605 = vpop.f32.mrf.mxu0
        %v1606 = vadd.f32 %v1327, %v1605
        %v1607 = vpop.f32.mrf.mxu0
        %v1608 = vadd.f32 %v1331, %v1607
        %v1609 = vpop.f32.mrf.mxu0
        %v1610 = vadd.f32 %v1327, %v1609
        %v1611 = vpop.f32.mrf.mxu0
        %v1612 = vadd.f32 %v1331, %v1611
        %1613 = vmatprep.mubr.bf16.mxu0 0
        %1614 = vmatmul.mubr.bf16.gmra.mxu0 %v520
        %v1615 = vpop.f32.mrf.mxu0
        %v1616 = vadd.f32 %v1327, %v1615
        %v1617 = vpop.f32.mrf.mxu0
        %v1618 = vadd.f32 %v1331, %v1617
        %v1619 = vpop.f32.mrf.mxu0
        %v1620 = vadd.f32 %v1327, %v1619
        %v1621 = vpop.f32.mrf.mxu0
        %v1622 = vadd.f32 %v1331, %v1621
        %1623 = vmatprep.mubr.bf16.mxu0 0
        %1624 = vmatmul.mubr.bf16.gmra.mxu0 %v523
        %v1625 = vpop.f32.mrf.mxu0
        %v1626 = vadd.f32 %v1327, %v1625
        %v1627 = vpop.f32.mrf.mxu0
        %v1628 = vadd.f32 %v1331, %v1627
        %v1629 = vpop.f32.mrf.mxu0
        %v1630 = vadd.f32 %v1327, %v1629
        %v1631 = vpop.f32.mrf.mxu0
        %v1632 = vadd.f32 %v1331, %v1631
        %1633 = vmatprep.mubr.bf16.mxu0 0
        %1634 = vmatmul.mubr.bf16.gmra.mxu0 %v526
        %v1635 = vpop.f32.mrf.mxu0
        %v1636 = vadd.f32 %v1327, %v1635
        %v1637 = vpop.f32.mrf.mxu0
        %v1638 = vadd.f32 %v1331, %v1637
        %v1639 = vpop.f32.mrf.mxu0
        %v1640 = vadd.f32 %v1327, %v1639
        %v1641 = vpop.f32.mrf.mxu0
        %v1642 = vadd.f32 %v1331, %v1641
        %1643 = vmatprep.mubr.bf16.mxu0 0
        %1644 = vmatmul.mubr.bf16.gmra.mxu0 %v529
        %v1645 = vpop.f32.mrf.mxu0
        %v1646 = vadd.f32 %v1327, %v1645
        %v1647 = vpop.f32.mrf.mxu0
        %v1648 = vadd.f32 %v1331, %v1647
        %v1649 = vpop.f32.mrf.mxu0
        %v1650 = vadd.f32 %v1327, %v1649
        %v1651 = vpop.f32.mrf.mxu0
        %v1652 = vadd.f32 %v1331, %v1651
        %1653 = vmatprep.mubr.bf16.mxu0 0
        %1654 = vmatmul.mubr.bf16.gmra.mxu0 %v532
        %v1655 = vpop.f32.mrf.mxu0
        %v1656 = vadd.f32 %v1327, %v1655
        %v1657 = vpop.f32.mrf.mxu0
        %v1658 = vadd.f32 %v1331, %v1657
        %v1659 = vpop.f32.mrf.mxu0
        %v1660 = vadd.f32 %v1327, %v1659
        %v1661 = vpop.f32.mrf.mxu0
        %v1662 = vadd.f32 %v1331, %v1661
        %1663 = vmatprep.mubr.bf16.mxu0 0
        %1664 = vmatmul.mubr.bf16.gmra.mxu0 %v535
        %v1665 = vpop.f32.mrf.mxu0
        %v1666 = vadd.f32 %v1327, %v1665
        %v1667 = vpop.f32.mrf.mxu0
        %v1668 = vadd.f32 %v1331, %v1667
        %v1669 = vpop.f32.mrf.mxu0
        %v1670 = vadd.f32 %v1327, %v1669
        %v1671 = vpop.f32.mrf.mxu0
        %v1672 = vadd.f32 %v1331, %v1671
        %1673 = vmatprep.mubr.bf16.mxu0 0
        %1674 = vmatmul.mubr.bf16.gmra.mxu0 %v538
        %v1675 = vpop.f32.mrf.mxu0
        %v1676 = vadd.f32 %v1327, %v1675
        %v1677 = vpop.f32.mrf.mxu0
        %v1678 = vadd.f32 %v1331, %v1677
        %v1679 = vpop.f32.mrf.mxu0
        %v1680 = vadd.f32 %v1327, %v1679
        %v1681 = vpop.f32.mrf.mxu0
        %v1682 = vadd.f32 %v1331, %v1681
        %1683 = vmatprep.mubr.bf16.mxu0 0
        %1684 = vmatmul.mubr.bf16.gmra.mxu0 %v541
        %v1685 = vpop.f32.mrf.mxu0
        %v1686 = vadd.f32 %v1327, %v1685
        %v1687 = vpop.f32.mrf.mxu0
        %v1688 = vadd.f32 %v1331, %v1687
        %v1689 = vpop.f32.mrf.mxu0
        %v1690 = vadd.f32 %v1327, %v1689
        %v1691 = vpop.f32.mrf.mxu0
        %v1692 = vadd.f32 %v1331, %v1691
        %1693 = vmatprep.mubr.bf16.mxu0 0
        %1694 = vmatmul.mubr.bf16.gmra.mxu0 %v544
        %v1695 = vpop.f32.mrf.mxu0
        %v1696 = vadd.f32 %v1327, %v1695
        %v1697 = vpop.f32.mrf.mxu0
        %v1698 = vadd.f32 %v1331, %v1697
        %v1699 = vpop.f32.mrf.mxu0
        %v1700 = vadd.f32 %v1327, %v1699
        %v1701 = vpop.f32.mrf.mxu0
        %v1702 = vadd.f32 %v1331, %v1701
        %1703 = vmatprep.mubr.bf16.mxu0 0
        %1704 = vmatmul.mubr.bf16.gmra.mxu0 %v547
        %v1705 = vpop.f32.mrf.mxu0
        %v1706 = vadd.f32 %v1327, %v1705
        %v1707 = vpop.f32.mrf.mxu0
        %v1708 = vadd.f32 %v1331, %v1707
        %v1709 = vpop.f32.mrf.mxu0
        %v1710 = vadd.f32 %v1327, %v1709
        %v1711 = vpop.f32.mrf.mxu0
        %v1712 = vadd.f32 %v1331, %v1711
        %1713 = vmatprep.mubr.bf16.mxu0 0
        %1714 = vmatmul.mubr.bf16.gmra.mxu0 %v550
        %v1715 = vpop.f32.mrf.mxu0
        %v1716 = vadd.f32 %v1327, %v1715
        %v1717 = vpop.f32.mrf.mxu0
        %v1718 = vadd.f32 %v1331, %v1717
        %v1719 = vpop.f32.mrf.mxu0
        %v1720 = vadd.f32 %v1327, %v1719
        %v1721 = vpop.f32.mrf.mxu0
        %v1722 = vadd.f32 %v1331, %v1721
        %1723 = vmatprep.mubr.bf16.mxu0 0
        %1724 = vmatmul.mubr.bf16.gmra.mxu0 %v553
        %v1725 = vpop.f32.mrf.mxu0
        %v1726 = vadd.f32 %v1327, %v1725
        %v1727 = vpop.f32.mrf.mxu0
        %v1728 = vadd.f32 %v1331, %v1727
        %v1729 = vpop.f32.mrf.mxu0
        %v1730 = vadd.f32 %v1327, %v1729
        %v1731 = vpop.f32.mrf.mxu0
        %v1732 = vadd.f32 %v1331, %v1731
        %1733 = vmatprep.mubr.bf16.mxu0 0
        %1734 = vmatmul.mubr.bf16.gmra.mxu0 %v556
        %v1735 = vpop.f32.mrf.mxu0
        %v1736 = vadd.f32 %v1327, %v1735
        %v1737 = vpop.f32.mrf.mxu0
        %v1738 = vadd.f32 %v1331, %v1737
        %v1739 = vpop.f32.mrf.mxu0
        %v1740 = vadd.f32 %v1327, %v1739
        %v1741 = vpop.f32.mrf.mxu0
        %v1742 = vadd.f32 %v1331, %v1741
        %1743 = vdwg.mxu0
        %v1744 = vmax.f32 %v1393, 0.0
        %v1745 = vmax.f32 %v1395, 0.0
        %v1746 = vmax.f32 %v1586, 0.0
        %v1747 = vmax.f32 %v1588, 0.0
        %v1748 = vmax.f32 %v1397, 0.0
        %v1749 = vmax.f32 %v1399, 0.0
        %v1750 = vmax.f32 %v1590, 0.0
        %v1751 = vmax.f32 %v1592, 0.0
        %v1752 = vmax.f32 %v1403, 0.0
        %v1753 = vmax.f32 %v1405, 0.0
        %v1754 = vmax.f32 %v1596, 0.0
        %v1755 = vmax.f32 %v1598, 0.0
        %v1756 = vmax.f32 %v1407, 0.0
        %v1757 = vmax.f32 %v1409, 0.0
        %v1758 = vmax.f32 %v1600, 0.0
        %v1759 = vmax.f32 %v1602, 0.0
        %v1760 = vmax.f32 %v1413, 0.0
        %v1761 = vmax.f32 %v1415, 0.0
        %v1762 = vmax.f32 %v1606, 0.0
        %v1763 = vmax.f32 %v1608, 0.0
        %v1764 = vmax.f32 %v1417, 0.0
        %v1765 = vmax.f32 %v1419, 0.0
        %v1766 = vmax.f32 %v1610, 0.0
        %v1767 = vmax.f32 %v1612, 0.0
        %v1768 = vmax.f32 %v1423, 0.0
        %v1769 = vmax.f32 %v1425, 0.0
        %v1770 = vmax.f32 %v1616, 0.0
        %v1771 = vmax.f32 %v1618, 0.0
        %v1772 = vmax.f32 %v1427, 0.0
        %v1773 = vmax.f32 %v1429, 0.0
        %v1774 = vmax.f32 %v1620, 0.0
        %v1775 = vmax.f32 %v1622, 0.0
        %v1776 = vmax.f32 %v1433, 0.0
        %v1777 = vmax.f32 %v1435, 0.0
        %v1778 = vmax.f32 %v1626, 0.0
        %v1779 = vmax.f32 %v1628, 0.0
        %v1780 = vmax.f32 %v1437, 0.0
        %v1781 = vmax.f32 %v1439, 0.0
        %v1782 = vmax.f32 %v1630, 0.0
        %v1783 = vmax.f32 %v1632, 0.0
        %v1784 = vmax.f32 %v1443, 0.0
        %v1785 = vmax.f32 %v1445, 0.0
        %v1786 = vmax.f32 %v1636, 0.0
        %v1787 = vmax.f32 %v1638, 0.0
        %v1788 = vmax.f32 %v1447, 0.0
        %v1789 = vmax.f32 %v1449, 0.0
        %v1790 = vmax.f32 %v1640, 0.0
        %v1791 = vmax.f32 %v1642, 0.0
        %v1792 = vmax.f32 %v1453, 0.0
        %v1793 = vmax.f32 %v1455, 0.0
        %v1794 = vmax.f32 %v1646, 0.0
        %v1795 = vmax.f32 %v1648, 0.0
        %v1796 = vmax.f32 %v1457, 0.0
        %v1797 = vmax.f32 %v1459, 0.0
        %v1798 = vmax.f32 %v1650, 0.0
        %v1799 = vmax.f32 %v1652, 0.0
        %v1800 = vmax.f32 %v1463, 0.0
        %v1801 = vmax.f32 %v1465, 0.0
        %v1802 = vmax.f32 %v1656, 0.0
        %v1803 = vmax.f32 %v1658, 0.0
        %v1804 = vmax.f32 %v1467, 0.0
        %v1805 = vmax.f32 %v1469, 0.0
        %v1806 = vmax.f32 %v1660, 0.0
        %v1807 = vmax.f32 %v1662, 0.0
        %v1808 = vmax.f32 %v1473, 0.0
        %v1809 = vmax.f32 %v1475, 0.0
        %v1810 = vmax.f32 %v1666, 0.0
        %v1811 = vmax.f32 %v1668, 0.0
        %v1812 = vmax.f32 %v1477, 0.0
        %v1813 = vmax.f32 %v1479, 0.0
        %v1814 = vmax.f32 %v1670, 0.0
        %v1815 = vmax.f32 %v1672, 0.0
        %v1816 = vmax.f32 %v1483, 0.0
        %v1817 = vmax.f32 %v1485, 0.0
        %v1818 = vmax.f32 %v1676, 0.0
        %v1819 = vmax.f32 %v1678, 0.0
        %v1820 = vmax.f32 %v1487, 0.0
        %v1821 = vmax.f32 %v1489, 0.0
        %v1822 = vmax.f32 %v1680, 0.0
        %v1823 = vmax.f32 %v1682, 0.0
        %v1824 = vmax.f32 %v1493, 0.0
        %v1825 = vmax.f32 %v1495, 0.0
        %v1826 = vmax.f32 %v1686, 0.0
        %v1827 = vmax.f32 %v1688, 0.0
        %v1828 = vmax.f32 %v1497, 0.0
        %v1829 = vmax.f32 %v1499, 0.0
        %v1830 = vmax.f32 %v1690, 0.0
        %v1831 = vmax.f32 %v1692, 0.0
        %v1832 = vmax.f32 %v1503, 0.0
        %v1833 = vmax.f32 %v1505, 0.0
        %v1834 = vmax.f32 %v1696, 0.0
        %v1835 = vmax.f32 %v1698, 0.0
        %v1836 = vmax.f32 %v1507, 0.0
        %v1837 = vmax.f32 %v1509, 0.0
        %v1838 = vmax.f32 %v1700, 0.0
        %v1839 = vmax.f32 %v1702, 0.0
        %v1840 = vmax.f32 %v1513, 0.0
        %v1841 = vmax.f32 %v1515, 0.0
        %v1842 = vmax.f32 %v1706, 0.0
        %v1843 = vmax.f32 %v1708, 0.0
        %v1844 = vmax.f32 %v1517, 0.0
        %v1845 = vmax.f32 %v1519, 0.0
        %v1846 = vmax.f32 %v1710, 0.0
        %v1847 = vmax.f32 %v1712, 0.0
        %v1848 = vmax.f32 %v1523, 0.0
        %v1849 = vmax.f32 %v1525, 0.0
        %v1850 = vmax.f32 %v1716, 0.0
        %v1851 = vmax.f32 %v1718, 0.0
        %v1852 = vmax.f32 %v1527, 0.0
        %v1853 = vmax.f32 %v1529, 0.0
        %v1854 = vmax.f32 %v1720, 0.0
        %v1855 = vmax.f32 %v1722, 0.0
        %v1856 = vmax.f32 %v1533, 0.0
        %v1857 = vmax.f32 %v1535, 0.0
        %v1858 = vmax.f32 %v1726, 0.0
        %v1859 = vmax.f32 %v1728, 0.0
        %v1860 = vmax.f32 %v1537, 0.0
        %v1861 = vmax.f32 %v1539, 0.0
        %v1862 = vmax.f32 %v1730, 0.0
        %v1863 = vmax.f32 %v1732, 0.0
        %v1864 = vmax.f32 %v1543, 0.0
        %v1865 = vmax.f32 %v1545, 0.0
        %v1866 = vmax.f32 %v1736, 0.0
        %v1867 = vmax.f32 %v1738, 0.0
        %v1868 = vmax.f32 %v1547, 0.0
        %v1869 = vmax.f32 %v1549, 0.0
        %v1870 = vmax.f32 %v1740, 0.0
        %v1871 = vmax.f32 %v1742, 0.0
        %v1872 = vld [vmem:[#allocation2 + $0x8] sm:$0xff]
        %v1873 = vadd.f32 %v1744, %v1748
        %v1874 = vadd.f32 %v1873, %v1752
        %v1875 = vadd.f32 %v1874, %v1756
        %v1876 = vadd.f32 %v1875, %v1760
        %v1877 = vadd.f32 %v1876, %v1764
        %v1878 = vadd.f32 %v1877, %v1768
        %v1879 = vadd.f32 %v1878, %v1772
        %v1880 = vadd.f32 %v1879, %v1776
        %v1881 = vadd.f32 %v1880, %v1780
        %v1882 = vadd.f32 %v1881, %v1784
        %v1883 = vadd.f32 %v1882, %v1788
        %v1884 = vadd.f32 %v1883, %v1792
        %v1885 = vadd.f32 %v1884, %v1796
        %v1886 = vadd.f32 %v1885, %v1800
        %v1887 = vadd.f32 %v1886, %v1804
        %v1888 = vrot.slane %v1887, 4
        %v1889 = vadd.f32 %v1887, %v1888
        %v1890 = vrot.slane %v1889, 2
        %v1891 = vadd.f32 %v1889, %v1890
        %v1892 = vrot.slane %v1891, 1
        %v1893 = vadd.f32 %v1891, %v1892
        %v1894 = vadd.f32 %v1745, %v1749
        %v1895 = vadd.f32 %v1894, %v1753
        %v1896 = vadd.f32 %v1895, %v1757
        %v1897 = vadd.f32 %v1896, %v1761
        %v1898 = vadd.f32 %v1897, %v1765
        %v1899 = vadd.f32 %v1898, %v1769
        %v1900 = vadd.f32 %v1899, %v1773
        %v1901 = vadd.f32 %v1900, %v1777
        %v1902 = vadd.f32 %v1901, %v1781
        %v1903 = vadd.f32 %v1902, %v1785
        %v1904 = vadd.f32 %v1903, %v1789
        %v1905 = vadd.f32 %v1904, %v1793
        %v1906 = vadd.f32 %v1905, %v1797
        %v1907 = vadd.f32 %v1906, %v1801
        %v1908 = vadd.f32 %v1907, %v1805
        %v1909 = vrot.slane %v1908, 4
        %v1910 = vadd.f32 %v1908, %v1909
        %v1911 = vrot.slane %v1910, 2
        %v1912 = vadd.f32 %v1910, %v1911
        %v1913 = vrot.slane %v1912, 1
        %v1914 = vadd.f32 %v1912, %v1913
        %v1915 = vadd.f32 %v1746, %v1750
        %v1916 = vadd.f32 %v1915, %v1754
        %v1917 = vadd.f32 %v1916, %v1758
        %v1918 = vadd.f32 %v1917, %v1762
        %v1919 = vadd.f32 %v1918, %v1766
        %v1920 = vadd.f32 %v1919, %v1770
        %v1921 = vadd.f32 %v1920, %v1774
        %v1922 = vadd.f32 %v1921, %v1778
        %v1923 = vadd.f32 %v1922, %v1782
        %v1924 = vadd.f32 %v1923, %v1786
        %v1925 = vadd.f32 %v1924, %v1790
        %v1926 = vadd.f32 %v1925, %v1794
        %v1927 = vadd.f32 %v1926, %v1798
        %v1928 = vadd.f32 %v1927, %v1802
        %v1929 = vadd.f32 %v1928, %v1806
        %v1930 = vrot.slane %v1929, 4
        %v1931 = vadd.f32 %v1929, %v1930
        %v1932 = vrot.slane %v1931, 2
        %v1933 = vadd.f32 %v1931, %v1932
        %v1934 = vrot.slane %v1933, 1
        %v1935 = vadd.f32 %v1933, %v1934
        %v1936 = vadd.f32 %v1747, %v1751
        %v1937 = vadd.f32 %v1936, %v1755
        %v1938 = vadd.f32 %v1937, %v1759
        %v1939 = vadd.f32 %v1938, %v1763
        %v1940 = vadd.f32 %v1939, %v1767
        %v1941 = vadd.f32 %v1940, %v1771
        %v1942 = vadd.f32 %v1941, %v1775
        %v1943 = vadd.f32 %v1942, %v1779
        %v1944 = vadd.f32 %v1943, %v1783
        %v1945 = vadd.f32 %v1944, %v1787
        %v1946 = vadd.f32 %v1945, %v1791
        %v1947 = vadd.f32 %v1946, %v1795
        %v1948 = vadd.f32 %v1947, %v1799
        %v1949 = vadd.f32 %v1948, %v1803
        %v1950 = vadd.f32 %v1949, %v1807
        %v1951 = vrot.slane %v1950, 4
        %v1952 = vadd.f32 %v1950, %v1951
        %v1953 = vrot.slane %v1952, 2
        %v1954 = vadd.f32 %v1952, %v1953
        %v1955 = vrot.slane %v1954, 1
        %v1956 = vadd.f32 %v1954, %v1955
        %v1957 = vadd.f32 %v1808, %v1812
        %v1958 = vadd.f32 %v1957, %v1816
        %v1959 = vadd.f32 %v1958, %v1820
        %v1960 = vadd.f32 %v1959, %v1824
        %v1961 = vadd.f32 %v1960, %v1828
        %v1962 = vadd.f32 %v1961, %v1832
        %v1963 = vadd.f32 %v1962, %v1836
        %v1964 = vadd.f32 %v1963, %v1840
        %v1965 = vadd.f32 %v1964, %v1844
        %v1966 = vadd.f32 %v1965, %v1848
        %v1967 = vadd.f32 %v1966, %v1852
        %v1968 = vadd.f32 %v1967, %v1856
        %v1969 = vadd.f32 %v1968, %v1860
        %v1970 = vadd.f32 %v1969, %v1864
        %v1971 = vadd.f32 %v1970, %v1868
        %v1972 = vrot.slane %v1971, 4
        %v1973 = vadd.f32 %v1971, %v1972
        %v1974 = vrot.slane %v1973, 2
        %v1975 = vadd.f32 %v1973, %v1974
        %v1976 = vrot.slane %v1975, 1
        %v1977 = vadd.f32 %v1975, %v1976
        %v1978 = vadd.f32 %v1809, %v1813
        %v1979 = vadd.f32 %v1978, %v1817
        %v1980 = vadd.f32 %v1979, %v1821
        %v1981 = vadd.f32 %v1980, %v1825
        %v1982 = vadd.f32 %v1981, %v1829
        %v1983 = vadd.f32 %v1982, %v1833
        %v1984 = vadd.f32 %v1983, %v1837
        %v1985 = vadd.f32 %v1984, %v1841
        %v1986 = vadd.f32 %v1985, %v1845
        %v1987 = vadd.f32 %v1986, %v1849
        %v1988 = vadd.f32 %v1987, %v1853
        %v1989 = vadd.f32 %v1988, %v1857
        %v1990 = vadd.f32 %v1989, %v1861
        %v1991 = vadd.f32 %v1990, %v1865
        %v1992 = vadd.f32 %v1991, %v1869
        %v1993 = vrot.slane %v1992, 4
        %v1994 = vadd.f32 %v1992, %v1993
        %v1995 = vrot.slane %v1994, 2
        %v1996 = vadd.f32 %v1994, %v1995
        %v1997 = vrot.slane %v1996, 1
        %v1998 = vadd.f32 %v1996, %v1997
        %v1999 = vadd.f32 %v1810, %v1814
        %v2000 = vadd.f32 %v1999, %v1818
        %v2001 = vadd.f32 %v2000, %v1822
        %v2002 = vadd.f32 %v2001, %v1826
        %v2003 = vadd.f32 %v2002, %v1830
        %v2004 = vadd.f32 %v2003, %v1834
        %v2005 = vadd.f32 %v2004, %v1838
        %v2006 = vadd.f32 %v2005, %v1842
        %v2007 = vadd.f32 %v2006, %v1846
        %v2008 = vadd.f32 %v2007, %v1850
        %v2009 = vadd.f32 %v2008, %v1854
        %v2010 = vadd.f32 %v2009, %v1858
        %v2011 = vadd.f32 %v2010, %v1862
        %v2012 = vadd.f32 %v2011, %v1866
        %v2013 = vadd.f32 %v2012, %v1870
        %v2014 = vrot.slane %v2013, 4
        %v2015 = vadd.f32 %v2013, %v2014
        %v2016 = vrot.slane %v2015, 2
        %v2017 = vadd.f32 %v2015, %v2016
        %v2018 = vrot.slane %v2017, 1
        %v2019 = vadd.f32 %v2017, %v2018
        %v2020 = vadd.f32 %v1811, %v1815
        %v2021 = vadd.f32 %v2020, %v1819
        %v2022 = vadd.f32 %v2021, %v1823
        %v2023 = vadd.f32 %v2022, %v1827
        %v2024 = vadd.f32 %v2023, %v1831
        %v2025 = vadd.f32 %v2024, %v1835
        %v2026 = vadd.f32 %v2025, %v1839
        %v2027 = vadd.f32 %v2026, %v1843
        %v2028 = vadd.f32 %v2027, %v1847
        %v2029 = vadd.f32 %v2028, %v1851
        %v2030 = vadd.f32 %v2029, %v1855
        %v2031 = vadd.f32 %v2030, %v1859
        %v2032 = vadd.f32 %v2031, %v1863
        %v2033 = vadd.f32 %v2032, %v1867
        %v2034 = vadd.f32 %v2033, %v1871
        %v2035 = vrot.slane %v2034, 4
        %v2036 = vadd.f32 %v2034, %v2035
        %v2037 = vrot.slane %v2036, 2
        %v2038 = vadd.f32 %v2036, %v2037
        %v2039 = vrot.slane %v2038, 1
        %v2040 = vadd.f32 %v2038, %v2039
        %v2049 = vcombine.low %v1893, %v1914
        %v2050 = vcombine.low %v1935, %v1956
        %v2052 = vunpack.c.l.s4 1983009808
        %v2053 = vunpack.c.0.s8 %v2052
        %v2054 = vlaneseq
        %v2055 = vshrl.u32 %v2054, 7
        %v2056 = vsub.s32 %v2053, %v2055
        %v2057 = vrot.slane %v2049, %v2056
        %v2059 = vunpack.c.l.s4 1983009808
        %v2060 = vunpack.c.0.s8 %v2059
        %v2061 = vlaneseq
        %v2062 = vshrl.u32 %v2061, 7
        %v2063 = vsub.s32 %v2060, %v2062
        %v2064 = vrot.slane %v2050, %v2063
        %v2065 = vcombine.low %v2057, %v2064
        %v2066 = vcombine.low %v1977, %v1998
        %v2067 = vcombine.low %v2019, %v2040
        %v2069 = vunpack.c.l.s4 1983009808
        %v2070 = vunpack.c.0.s8 %v2069
        %v2071 = vlaneseq
        %v2072 = vshrl.u32 %v2071, 7
        %v2073 = vsub.s32 %v2070, %v2072
        %v2074 = vrot.slane %v2066, %v2073
        %v2076 = vunpack.c.l.s4 1983009808
        %v2077 = vunpack.c.0.s8 %v2076
        %v2078 = vlaneseq
        %v2079 = vshrl.u32 %v2078, 7
        %v2080 = vsub.s32 %v2077, %v2079
        %v2081 = vrot.slane %v2067, %v2080
        %v2082 = vcombine.low %v2074, %v2081
        %v2083 = vsel %vm1296, %v2065, %v2065
        %v2084 = vsel %vm1298, %v2065, %v2083
        %v2085 = vrot.slane %v2082, 7
        %v2086 = vsel %vm1301, %v2085, %v2084
        %v2087 = vsel %vm1303, %v2085, %v2086
        %v2088 = vsel %vm1305, %v2085, %v2087
        %v2089 = vsel %vm1307, %v2085, %v2088
        %v2091 = vadd.f32 %v1872, %v2089
        %2092 = vst [vmem:[#allocation2 + $0x8] sm:$0xff] %v2091
        %v2093 = vld [vmem:[%s1 + $0x20] sm:$0xff]
        %v2094 = vld [vmem:[%s1 + $0x28] sm:$0xff]
        %v2095 = vld [vmem:[%s2 + $0x8] sm:$0xf]
        %v2097 = vlaneseq
        %v2098 = vshrl.u32 %v2097, 7
        %v2099 = vsub.s32 0, %v2098
        %v2100 = vrot.slane %v2095, %v2099
        %v2101 = vlaneseq
        %v2102 = vshrl.u32 %v2101, 7
        %v2103 = vsub.s32 1, %v2102
        %v2104 = vrot.slane %v2095, %v2103
        %v2105 = vlaneseq
        %v2106 = vshrl.u32 %v2105, 7
        %v2107 = vsub.s32 2, %v2106
        %v2108 = vrot.slane %v2095, %v2107
        %v2109 = vlaneseq
        %v2110 = vshrl.u32 %v2109, 7
        %v2111 = vsub.s32 3, %v2110
        %v2112 = vrot.slane %v2095, %v2111
        %v2119 = vunpack.c.l.b16 %v2093
        %v2120 = vunpack.c.h.b16 %v2093
        %v2121 = vunpack.c.l.b16 %v2094
        %v2122 = vunpack.c.h.b16 %v2094
        %v2123 = vpack.c.b16 %v2119, %v2119
        %v2124 = vpack.c.b16 %v2120, %v2120
        %v2125 = vpack.c.b16 %v2121, %v2121
        %v2126 = vpack.c.b16 %v2122, %v2122
        %v2128 = vsel %vm558, %v2123, 0
        %v2131 = vsel %vm558, %v2124, 0
        %v2134 = vsel %vm558, %v2125, 0
        %v2137 = vsel %vm558, %v2126, 0
        %2139 = vmatprep.subr.bf16.mxu0 0
        %2140 = vmatpush1.bf16.msra.mxu0 0
        %2141 = vmatprep.subr.bf16.mxu0 0
        %2142 = vmatpush1.bf16.msra.mxu0 0
        %2143 = vmatprep.subr.bf16.mxu0 0
        %2144 = vmatpush1.bf16.msra.mxu0 0
        %2145 = vmatprep.subr.bf16.mxu0 0
        %2146 = vmatpush1.bf16.msra.mxu0 0
        %2147 = vmatprep.subr.bf16.mxu0 0
        %2148 = vmatpush1.bf16.msra.mxu0 0
        %2149 = vmatprep.subr.bf16.mxu0 0
        %2150 = vmatpush1.bf16.msra.mxu0 0
        %2151 = vmatprep.subr.bf16.mxu0 0
        %2152 = vmatpush1.bf16.msra.mxu0 0
        %2153 = vmatprep.subr.bf16.mxu0 %v2131
        %2154 = vmatpush1.bf16.msra.mxu0 %v2128
        %2155 = vmatprep.subr.bf16.mxu0 0
        %2156 = vmatpush2.bf16.msra.mxu0 0
        %2157 = vmatprep.subr.bf16.mxu0 0
        %2158 = vmatpush2.bf16.msra.mxu0 0
        %2159 = vmatprep.subr.bf16.mxu0 0
        %2160 = vmatpush2.bf16.msra.mxu0 0
        %2161 = vmatprep.subr.bf16.mxu0 0
        %2162 = vmatpush2.bf16.msra.mxu0 0
        %2163 = vmatprep.subr.bf16.mxu0 0
        %2164 = vmatpush2.bf16.msra.mxu0 0
        %2165 = vmatprep.subr.bf16.mxu0 0
        %2166 = vmatpush2.bf16.msra.mxu0 0
        %2167 = vmatprep.subr.bf16.mxu0 0
        %2168 = vmatpush2.bf16.msra.mxu0 0
        %2169 = vmatprep.subr.bf16.mxu0 0
        %2170 = vmatpush2.bf16.msra.mxu0 0
        %2171 = vmatprep.mubr.bf16.mxu0 0
        %2172 = vmatmul.mubr.bf16.gmra.mxu0 %v511
        %v2173 = vpop.f32.mrf.mxu0
        %v2174 = vadd.f32 %v2100, %v2173
        %v2175 = vpop.f32.mrf.mxu0
        %v2176 = vadd.f32 %v2104, %v2175
        %v2177 = vpop.f32.mrf.mxu0
        %v2178 = vadd.f32 %v2100, %v2177
        %v2179 = vpop.f32.mrf.mxu0
        %v2180 = vadd.f32 %v2104, %v2179
        %2181 = vmatprep.mubr.bf16.mxu0 0
        %2182 = vmatmul.mubr.bf16.gmra.mxu0 %v514
        %v2183 = vpop.f32.mrf.mxu0
        %v2184 = vadd.f32 %v2100, %v2183
        %v2185 = vpop.f32.mrf.mxu0
        %v2186 = vadd.f32 %v2104, %v2185
        %v2187 = vpop.f32.mrf.mxu0
        %v2188 = vadd.f32 %v2100, %v2187
        %v2189 = vpop.f32.mrf.mxu0
        %v2190 = vadd.f32 %v2104, %v2189
        %2191 = vmatprep.mubr.bf16.mxu0 0
        %2192 = vmatmul.mubr.bf16.gmra.mxu0 %v517
        %v2193 = vpop.f32.mrf.mxu0
        %v2194 = vadd.f32 %v2100, %v2193
        %v2195 = vpop.f32.mrf.mxu0
        %v2196 = vadd.f32 %v2104, %v2195
        %v2197 = vpop.f32.mrf.mxu0
        %v2198 = vadd.f32 %v2100, %v2197
        %v2199 = vpop.f32.mrf.mxu0
        %v2200 = vadd.f32 %v2104, %v2199
        %2201 = vmatprep.mubr.bf16.mxu0 0
        %2202 = vmatmul.mubr.bf16.gmra.mxu0 %v520
        %v2203 = vpop.f32.mrf.mxu0
        %v2204 = vadd.f32 %v2100, %v2203
        %v2205 = vpop.f32.mrf.mxu0
        %v2206 = vadd.f32 %v2104, %v2205
        %v2207 = vpop.f32.mrf.mxu0
        %v2208 = vadd.f32 %v2100, %v2207
        %v2209 = vpop.f32.mrf.mxu0
        %v2210 = vadd.f32 %v2104, %v2209
        %2211 = vmatprep.mubr.bf16.mxu0 0
        %2212 = vmatmul.mubr.bf16.gmra.mxu0 %v523
        %v2213 = vpop.f32.mrf.mxu0
        %v2214 = vadd.f32 %v2100, %v2213
        %v2215 = vpop.f32.mrf.mxu0
        %v2216 = vadd.f32 %v2104, %v2215
        %v2217 = vpop.f32.mrf.mxu0
        %v2218 = vadd.f32 %v2100, %v2217
        %v2219 = vpop.f32.mrf.mxu0
        %v2220 = vadd.f32 %v2104, %v2219
        %2221 = vmatprep.mubr.bf16.mxu0 0
        %2222 = vmatmul.mubr.bf16.gmra.mxu0 %v526
        %v2223 = vpop.f32.mrf.mxu0
        %v2224 = vadd.f32 %v2100, %v2223
        %v2225 = vpop.f32.mrf.mxu0
        %v2226 = vadd.f32 %v2104, %v2225
        %v2227 = vpop.f32.mrf.mxu0
        %v2228 = vadd.f32 %v2100, %v2227
        %v2229 = vpop.f32.mrf.mxu0
        %v2230 = vadd.f32 %v2104, %v2229
        %2231 = vmatprep.mubr.bf16.mxu0 0
        %2232 = vmatmul.mubr.bf16.gmra.mxu0 %v529
        %v2233 = vpop.f32.mrf.mxu0
        %v2234 = vadd.f32 %v2100, %v2233
        %v2235 = vpop.f32.mrf.mxu0
        %v2236 = vadd.f32 %v2104, %v2235
        %v2237 = vpop.f32.mrf.mxu0
        %v2238 = vadd.f32 %v2100, %v2237
        %v2239 = vpop.f32.mrf.mxu0
        %v2240 = vadd.f32 %v2104, %v2239
        %2241 = vmatprep.mubr.bf16.mxu0 0
        %2242 = vmatmul.mubr.bf16.gmra.mxu0 %v532
        %v2243 = vpop.f32.mrf.mxu0
        %v2244 = vadd.f32 %v2100, %v2243
        %v2245 = vpop.f32.mrf.mxu0
        %v2246 = vadd.f32 %v2104, %v2245
        %v2247 = vpop.f32.mrf.mxu0
        %v2248 = vadd.f32 %v2100, %v2247
        %v2249 = vpop.f32.mrf.mxu0
        %v2250 = vadd.f32 %v2104, %v2249
        %2251 = vmatprep.mubr.bf16.mxu0 0
        %2252 = vmatmul.mubr.bf16.gmra.mxu0 %v535
        %v2253 = vpop.f32.mrf.mxu0
        %v2254 = vadd.f32 %v2100, %v2253
        %v2255 = vpop.f32.mrf.mxu0
        %v2256 = vadd.f32 %v2104, %v2255
        %v2257 = vpop.f32.mrf.mxu0
        %v2258 = vadd.f32 %v2100, %v2257
        %v2259 = vpop.f32.mrf.mxu0
        %v2260 = vadd.f32 %v2104, %v2259
        %2261 = vmatprep.mubr.bf16.mxu0 0
        %2262 = vmatmul.mubr.bf16.gmra.mxu0 %v538
        %v2263 = vpop.f32.mrf.mxu0
        %v2264 = vadd.f32 %v2100, %v2263
        %v2265 = vpop.f32.mrf.mxu0
        %v2266 = vadd.f32 %v2104, %v2265
        %v2267 = vpop.f32.mrf.mxu0
        %v2268 = vadd.f32 %v2100, %v2267
        %v2269 = vpop.f32.mrf.mxu0
        %v2270 = vadd.f32 %v2104, %v2269
        %2271 = vmatprep.mubr.bf16.mxu0 0
        %2272 = vmatmul.mubr.bf16.gmra.mxu0 %v541
        %v2273 = vpop.f32.mrf.mxu0
        %v2274 = vadd.f32 %v2100, %v2273
        %v2275 = vpop.f32.mrf.mxu0
        %v2276 = vadd.f32 %v2104, %v2275
        %v2277 = vpop.f32.mrf.mxu0
        %v2278 = vadd.f32 %v2100, %v2277
        %v2279 = vpop.f32.mrf.mxu0
        %v2280 = vadd.f32 %v2104, %v2279
        %2281 = vmatprep.mubr.bf16.mxu0 0
        %2282 = vmatmul.mubr.bf16.gmra.mxu0 %v544
        %v2283 = vpop.f32.mrf.mxu0
        %v2284 = vadd.f32 %v2100, %v2283
        %v2285 = vpop.f32.mrf.mxu0
        %v2286 = vadd.f32 %v2104, %v2285
        %v2287 = vpop.f32.mrf.mxu0
        %v2288 = vadd.f32 %v2100, %v2287
        %v2289 = vpop.f32.mrf.mxu0
        %v2290 = vadd.f32 %v2104, %v2289
        %2291 = vmatprep.mubr.bf16.mxu0 0
        %2292 = vmatmul.mubr.bf16.gmra.mxu0 %v547
        %v2293 = vpop.f32.mrf.mxu0
        %v2294 = vadd.f32 %v2100, %v2293
        %v2295 = vpop.f32.mrf.mxu0
        %v2296 = vadd.f32 %v2104, %v2295
        %v2297 = vpop.f32.mrf.mxu0
        %v2298 = vadd.f32 %v2100, %v2297
        %v2299 = vpop.f32.mrf.mxu0
        %v2300 = vadd.f32 %v2104, %v2299
        %2301 = vmatprep.mubr.bf16.mxu0 0
        %2302 = vmatmul.mubr.bf16.gmra.mxu0 %v550
        %v2303 = vpop.f32.mrf.mxu0
        %v2304 = vadd.f32 %v2100, %v2303
        %v2305 = vpop.f32.mrf.mxu0
        %v2306 = vadd.f32 %v2104, %v2305
        %v2307 = vpop.f32.mrf.mxu0
        %v2308 = vadd.f32 %v2100, %v2307
        %v2309 = vpop.f32.mrf.mxu0
        %v2310 = vadd.f32 %v2104, %v2309
        %2311 = vmatprep.mubr.bf16.mxu0 0
        %2312 = vmatmul.mubr.bf16.gmra.mxu0 %v553
        %v2313 = vpop.f32.mrf.mxu0
        %v2314 = vadd.f32 %v2100, %v2313
        %v2315 = vpop.f32.mrf.mxu0
        %v2316 = vadd.f32 %v2104, %v2315
        %v2317 = vpop.f32.mrf.mxu0
        %v2318 = vadd.f32 %v2100, %v2317
        %v2319 = vpop.f32.mrf.mxu0
        %v2320 = vadd.f32 %v2104, %v2319
        %2321 = vmatprep.mubr.bf16.mxu0 0
        %2322 = vmatmul.mubr.bf16.gmra.mxu0 %v556
        %v2323 = vpop.f32.mrf.mxu0
        %v2324 = vadd.f32 %v2100, %v2323
        %v2325 = vpop.f32.mrf.mxu0
        %v2326 = vadd.f32 %v2104, %v2325
        %v2327 = vpop.f32.mrf.mxu0
        %v2328 = vadd.f32 %v2100, %v2327
        %v2329 = vpop.f32.mrf.mxu0
        %v2330 = vadd.f32 %v2104, %v2329
        %2331 = vdwg.mxu0
        %2332 = vmatprep.subr.bf16.mxu0 0
        %2333 = vmatpush1.bf16.msra.mxu0 0
        %2334 = vmatprep.subr.bf16.mxu0 0
        %2335 = vmatpush1.bf16.msra.mxu0 0
        %2336 = vmatprep.subr.bf16.mxu0 0
        %2337 = vmatpush1.bf16.msra.mxu0 0
        %2338 = vmatprep.subr.bf16.mxu0 0
        %2339 = vmatpush1.bf16.msra.mxu0 0
        %2340 = vmatprep.subr.bf16.mxu0 0
        %2341 = vmatpush1.bf16.msra.mxu0 0
        %2342 = vmatprep.subr.bf16.mxu0 0
        %2343 = vmatpush1.bf16.msra.mxu0 0
        %2344 = vmatprep.subr.bf16.mxu0 0
        %2345 = vmatpush1.bf16.msra.mxu0 0
        %2346 = vmatprep.subr.bf16.mxu0 %v2137
        %2347 = vmatpush1.bf16.msra.mxu0 %v2134
        %2348 = vmatprep.subr.bf16.mxu0 0
        %2349 = vmatpush2.bf16.msra.mxu0 0
        %2350 = vmatprep.subr.bf16.mxu0 0
        %2351 = vmatpush2.bf16.msra.mxu0 0
        %2352 = vmatprep.subr.bf16.mxu0 0
        %2353 = vmatpush2.bf16.msra.mxu0 0
        %2354 = vmatprep.subr.bf16.mxu0 0
        %2355 = vmatpush2.bf16.msra.mxu0 0
        %2356 = vmatprep.subr.bf16.mxu0 0
        %2357 = vmatpush2.bf16.msra.mxu0 0
        %2358 = vmatprep.subr.bf16.mxu0 0
        %2359 = vmatpush2.bf16.msra.mxu0 0
        %2360 = vmatprep.subr.bf16.mxu0 0
        %2361 = vmatpush2.bf16.msra.mxu0 0
        %2362 = vmatprep.subr.bf16.mxu0 0
        %2363 = vmatpush2.bf16.msra.mxu0 0
        %2364 = vmatprep.mubr.bf16.mxu0 0
        %2365 = vmatmul.mubr.bf16.gmra.mxu0 %v511
        %v2366 = vpop.f32.mrf.mxu0
        %v2367 = vadd.f32 %v2108, %v2366
        %v2368 = vpop.f32.mrf.mxu0
        %v2369 = vadd.f32 %v2112, %v2368
        %v2370 = vpop.f32.mrf.mxu0
        %v2371 = vadd.f32 %v2108, %v2370
        %v2372 = vpop.f32.mrf.mxu0
        %v2373 = vadd.f32 %v2112, %v2372
        %2374 = vmatprep.mubr.bf16.mxu0 0
        %2375 = vmatmul.mubr.bf16.gmra.mxu0 %v514
        %v2376 = vpop.f32.mrf.mxu0
        %v2377 = vadd.f32 %v2108, %v2376
        %v2378 = vpop.f32.mrf.mxu0
        %v2379 = vadd.f32 %v2112, %v2378
        %v2380 = vpop.f32.mrf.mxu0
        %v2381 = vadd.f32 %v2108, %v2380
        %v2382 = vpop.f32.mrf.mxu0
        %v2383 = vadd.f32 %v2112, %v2382
        %2384 = vmatprep.mubr.bf16.mxu0 0
        %2385 = vmatmul.mubr.bf16.gmra.mxu0 %v517
        %v2386 = vpop.f32.mrf.mxu0
        %v2387 = vadd.f32 %v2108, %v2386
        %v2388 = vpop.f32.mrf.mxu0
        %v2389 = vadd.f32 %v2112, %v2388
        %v2390 = vpop.f32.mrf.mxu0
        %v2391 = vadd.f32 %v2108, %v2390
        %v2392 = vpop.f32.mrf.mxu0
        %v2393 = vadd.f32 %v2112, %v2392
        %2394 = vmatprep.mubr.bf16.mxu0 0
        %2395 = vmatmul.mubr.bf16.gmra.mxu0 %v520
        %v2396 = vpop.f32.mrf.mxu0
        %v2397 = vadd.f32 %v2108, %v2396
        %v2398 = vpop.f32.mrf.mxu0
        %v2399 = vadd.f32 %v2112, %v2398
        %v2400 = vpop.f32.mrf.mxu0
        %v2401 = vadd.f32 %v2108, %v2400
        %v2402 = vpop.f32.mrf.mxu0
        %v2403 = vadd.f32 %v2112, %v2402
        %2404 = vmatprep.mubr.bf16.mxu0 0
        %2405 = vmatmul.mubr.bf16.gmra.mxu0 %v523
        %v2406 = vpop.f32.mrf.mxu0
        %v2407 = vadd.f32 %v2108, %v2406
        %v2408 = vpop.f32.mrf.mxu0
        %v2409 = vadd.f32 %v2112, %v2408
        %v2410 = vpop.f32.mrf.mxu0
        %v2411 = vadd.f32 %v2108, %v2410
        %v2412 = vpop.f32.mrf.mxu0
        %v2413 = vadd.f32 %v2112, %v2412
        %2414 = vmatprep.mubr.bf16.mxu0 0
        %2415 = vmatmul.mubr.bf16.gmra.mxu0 %v526
        %v2416 = vpop.f32.mrf.mxu0
        %v2417 = vadd.f32 %v2108, %v2416
        %v2418 = vpop.f32.mrf.mxu0
        %v2419 = vadd.f32 %v2112, %v2418
        %v2420 = vpop.f32.mrf.mxu0
        %v2421 = vadd.f32 %v2108, %v2420
        %v2422 = vpop.f32.mrf.mxu0
        %v2423 = vadd.f32 %v2112, %v2422
        %2424 = vmatprep.mubr.bf16.mxu0 0
        %2425 = vmatmul.mubr.bf16.gmra.mxu0 %v529
        %v2426 = vpop.f32.mrf.mxu0
        %v2427 = vadd.f32 %v2108, %v2426
        %v2428 = vpop.f32.mrf.mxu0
        %v2429 = vadd.f32 %v2112, %v2428
        %v2430 = vpop.f32.mrf.mxu0
        %v2431 = vadd.f32 %v2108, %v2430
        %v2432 = vpop.f32.mrf.mxu0
        %v2433 = vadd.f32 %v2112, %v2432
        %2434 = vmatprep.mubr.bf16.mxu0 0
        %2435 = vmatmul.mubr.bf16.gmra.mxu0 %v532
        %v2436 = vpop.f32.mrf.mxu0
        %v2437 = vadd.f32 %v2108, %v2436
        %v2438 = vpop.f32.mrf.mxu0
        %v2439 = vadd.f32 %v2112, %v2438
        %v2440 = vpop.f32.mrf.mxu0
        %v2441 = vadd.f32 %v2108, %v2440
        %v2442 = vpop.f32.mrf.mxu0
        %v2443 = vadd.f32 %v2112, %v2442
        %2444 = vmatprep.mubr.bf16.mxu0 0
        %2445 = vmatmul.mubr.bf16.gmra.mxu0 %v535
        %v2446 = vpop.f32.mrf.mxu0
        %v2447 = vadd.f32 %v2108, %v2446
        %v2448 = vpop.f32.mrf.mxu0
        %v2449 = vadd.f32 %v2112, %v2448
        %v2450 = vpop.f32.mrf.mxu0
        %v2451 = vadd.f32 %v2108, %v2450
        %v2452 = vpop.f32.mrf.mxu0
        %v2453 = vadd.f32 %v2112, %v2452
        %2454 = vmatprep.mubr.bf16.mxu0 0
        %2455 = vmatmul.mubr.bf16.gmra.mxu0 %v538
        %v2456 = vpop.f32.mrf.mxu0
        %v2457 = vadd.f32 %v2108, %v2456
        %v2458 = vpop.f32.mrf.mxu0
        %v2459 = vadd.f32 %v2112, %v2458
        %v2460 = vpop.f32.mrf.mxu0
        %v2461 = vadd.f32 %v2108, %v2460
        %v2462 = vpop.f32.mrf.mxu0
        %v2463 = vadd.f32 %v2112, %v2462
        %2464 = vmatprep.mubr.bf16.mxu0 0
        %2465 = vmatmul.mubr.bf16.gmra.mxu0 %v541
        %v2466 = vpop.f32.mrf.mxu0
        %v2467 = vadd.f32 %v2108, %v2466
        %v2468 = vpop.f32.mrf.mxu0
        %v2469 = vadd.f32 %v2112, %v2468
        %v2470 = vpop.f32.mrf.mxu0
        %v2471 = vadd.f32 %v2108, %v2470
        %v2472 = vpop.f32.mrf.mxu0
        %v2473 = vadd.f32 %v2112, %v2472
        %2474 = vmatprep.mubr.bf16.mxu0 0
        %2475 = vmatmul.mubr.bf16.gmra.mxu0 %v544
        %v2476 = vpop.f32.mrf.mxu0
        %v2477 = vadd.f32 %v2108, %v2476
        %v2478 = vpop.f32.mrf.mxu0
        %v2479 = vadd.f32 %v2112, %v2478
        %v2480 = vpop.f32.mrf.mxu0
        %v2481 = vadd.f32 %v2108, %v2480
        %v2482 = vpop.f32.mrf.mxu0
        %v2483 = vadd.f32 %v2112, %v2482
        %2484 = vmatprep.mubr.bf16.mxu0 0
        %2485 = vmatmul.mubr.bf16.gmra.mxu0 %v547
        %v2486 = vpop.f32.mrf.mxu0
        %v2487 = vadd.f32 %v2108, %v2486
        %v2488 = vpop.f32.mrf.mxu0
        %v2489 = vadd.f32 %v2112, %v2488
        %v2490 = vpop.f32.mrf.mxu0
        %v2491 = vadd.f32 %v2108, %v2490
        %v2492 = vpop.f32.mrf.mxu0
        %v2493 = vadd.f32 %v2112, %v2492
        %2494 = vmatprep.mubr.bf16.mxu0 0
        %2495 = vmatmul.mubr.bf16.gmra.mxu0 %v550
        %v2496 = vpop.f32.mrf.mxu0
        %v2497 = vadd.f32 %v2108, %v2496
        %v2498 = vpop.f32.mrf.mxu0
        %v2499 = vadd.f32 %v2112, %v2498
        %v2500 = vpop.f32.mrf.mxu0
        %v2501 = vadd.f32 %v2108, %v2500
        %v2502 = vpop.f32.mrf.mxu0
        %v2503 = vadd.f32 %v2112, %v2502
        %2504 = vmatprep.mubr.bf16.mxu0 0
        %2505 = vmatmul.mubr.bf16.gmra.mxu0 %v553
        %v2506 = vpop.f32.mrf.mxu0
        %v2507 = vadd.f32 %v2108, %v2506
        %v2508 = vpop.f32.mrf.mxu0
        %v2509 = vadd.f32 %v2112, %v2508
        %v2510 = vpop.f32.mrf.mxu0
        %v2511 = vadd.f32 %v2108, %v2510
        %v2512 = vpop.f32.mrf.mxu0
        %v2513 = vadd.f32 %v2112, %v2512
        %2514 = vmatprep.mubr.bf16.mxu0 0
        %2515 = vmatmul.mubr.bf16.gmra.mxu0 %v556
        %v2516 = vpop.f32.mrf.mxu0
        %v2517 = vadd.f32 %v2108, %v2516
        %v2518 = vpop.f32.mrf.mxu0
        %v2519 = vadd.f32 %v2112, %v2518
        %v2520 = vpop.f32.mrf.mxu0
        %v2521 = vadd.f32 %v2108, %v2520
        %v2522 = vpop.f32.mrf.mxu0
        %v2523 = vadd.f32 %v2112, %v2522
        %2524 = vdwg.mxu0
        %v2525 = vmax.f32 %v2174, 0.0
        %v2526 = vmax.f32 %v2176, 0.0
        %v2527 = vmax.f32 %v2367, 0.0
        %v2528 = vmax.f32 %v2369, 0.0
        %v2529 = vmax.f32 %v2178, 0.0
        %v2530 = vmax.f32 %v2180, 0.0
        %v2531 = vmax.f32 %v2371, 0.0
        %v2532 = vmax.f32 %v2373, 0.0
        %v2533 = vmax.f32 %v2184, 0.0
        %v2534 = vmax.f32 %v2186, 0.0
        %v2535 = vmax.f32 %v2377, 0.0
        %v2536 = vmax.f32 %v2379, 0.0
        %v2537 = vmax.f32 %v2188, 0.0
        %v2538 = vmax.f32 %v2190, 0.0
        %v2539 = vmax.f32 %v2381, 0.0
        %v2540 = vmax.f32 %v2383, 0.0
        %v2541 = vmax.f32 %v2194, 0.0
        %v2542 = vmax.f32 %v2196, 0.0
        %v2543 = vmax.f32 %v2387, 0.0
        %v2544 = vmax.f32 %v2389, 0.0
        %v2545 = vmax.f32 %v2198, 0.0
        %v2546 = vmax.f32 %v2200, 0.0
        %v2547 = vmax.f32 %v2391, 0.0
        %v2548 = vmax.f32 %v2393, 0.0
        %v2549 = vmax.f32 %v2204, 0.0
        %v2550 = vmax.f32 %v2206, 0.0
        %v2551 = vmax.f32 %v2397, 0.0
        %v2552 = vmax.f32 %v2399, 0.0
        %v2553 = vmax.f32 %v2208, 0.0
        %v2554 = vmax.f32 %v2210, 0.0
        %v2555 = vmax.f32 %v2401, 0.0
        %v2556 = vmax.f32 %v2403, 0.0
        %v2557 = vmax.f32 %v2214, 0.0
        %v2558 = vmax.f32 %v2216, 0.0
        %v2559 = vmax.f32 %v2407, 0.0
        %v2560 = vmax.f32 %v2409, 0.0
        %v2561 = vmax.f32 %v2218, 0.0
        %v2562 = vmax.f32 %v2220, 0.0
        %v2563 = vmax.f32 %v2411, 0.0
        %v2564 = vmax.f32 %v2413, 0.0
        %v2565 = vmax.f32 %v2224, 0.0
        %v2566 = vmax.f32 %v2226, 0.0
        %v2567 = vmax.f32 %v2417, 0.0
        %v2568 = vmax.f32 %v2419, 0.0
        %v2569 = vmax.f32 %v2228, 0.0
        %v2570 = vmax.f32 %v2230, 0.0
        %v2571 = vmax.f32 %v2421, 0.0
        %v2572 = vmax.f32 %v2423, 0.0
        %v2573 = vmax.f32 %v2234, 0.0
        %v2574 = vmax.f32 %v2236, 0.0
        %v2575 = vmax.f32 %v2427, 0.0
        %v2576 = vmax.f32 %v2429, 0.0
        %v2577 = vmax.f32 %v2238, 0.0
        %v2578 = vmax.f32 %v2240, 0.0
        %v2579 = vmax.f32 %v2431, 0.0
        %v2580 = vmax.f32 %v2433, 0.0
        %v2581 = vmax.f32 %v2244, 0.0
        %v2582 = vmax.f32 %v2246, 0.0
        %v2583 = vmax.f32 %v2437, 0.0
        %v2584 = vmax.f32 %v2439, 0.0
        %v2585 = vmax.f32 %v2248, 0.0
        %v2586 = vmax.f32 %v2250, 0.0
        %v2587 = vmax.f32 %v2441, 0.0
        %v2588 = vmax.f32 %v2443, 0.0
        %v2589 = vmax.f32 %v2254, 0.0
        %v2590 = vmax.f32 %v2256, 0.0
        %v2591 = vmax.f32 %v2447, 0.0
        %v2592 = vmax.f32 %v2449, 0.0
        %v2593 = vmax.f32 %v2258, 0.0
        %v2594 = vmax.f32 %v2260, 0.0
        %v2595 = vmax.f32 %v2451, 0.0
        %v2596 = vmax.f32 %v2453, 0.0
        %v2597 = vmax.f32 %v2264, 0.0
        %v2598 = vmax.f32 %v2266, 0.0
        %v2599 = vmax.f32 %v2457, 0.0
        %v2600 = vmax.f32 %v2459, 0.0
        %v2601 = vmax.f32 %v2268, 0.0
        %v2602 = vmax.f32 %v2270, 0.0
        %v2603 = vmax.f32 %v2461, 0.0
        %v2604 = vmax.f32 %v2463, 0.0
        %v2605 = vmax.f32 %v2274, 0.0
        %v2606 = vmax.f32 %v2276, 0.0
        %v2607 = vmax.f32 %v2467, 0.0
        %v2608 = vmax.f32 %v2469, 0.0
        %v2609 = vmax.f32 %v2278, 0.0
        %v2610 = vmax.f32 %v2280, 0.0
        %v2611 = vmax.f32 %v2471, 0.0
        %v2612 = vmax.f32 %v2473, 0.0
        %v2613 = vmax.f32 %v2284, 0.0
        %v2614 = vmax.f32 %v2286, 0.0
        %v2615 = vmax.f32 %v2477, 0.0
        %v2616 = vmax.f32 %v2479, 0.0
        %v2617 = vmax.f32 %v2288, 0.0
        %v2618 = vmax.f32 %v2290, 0.0
        %v2619 = vmax.f32 %v2481, 0.0
        %v2620 = vmax.f32 %v2483, 0.0
        %v2621 = vmax.f32 %v2294, 0.0
        %v2622 = vmax.f32 %v2296, 0.0
        %v2623 = vmax.f32 %v2487, 0.0
        %v2624 = vmax.f32 %v2489, 0.0
        %v2625 = vmax.f32 %v2298, 0.0
        %v2626 = vmax.f32 %v2300, 0.0
        %v2627 = vmax.f32 %v2491, 0.0
        %v2628 = vmax.f32 %v2493, 0.0
        %v2629 = vmax.f32 %v2304, 0.0
        %v2630 = vmax.f32 %v2306, 0.0
        %v2631 = vmax.f32 %v2497, 0.0
        %v2632 = vmax.f32 %v2499, 0.0
        %v2633 = vmax.f32 %v2308, 0.0
        %v2634 = vmax.f32 %v2310, 0.0
        %v2635 = vmax.f32 %v2501, 0.0
        %v2636 = vmax.f32 %v2503, 0.0
        %v2637 = vmax.f32 %v2314, 0.0
        %v2638 = vmax.f32 %v2316, 0.0
        %v2639 = vmax.f32 %v2507, 0.0
        %v2640 = vmax.f32 %v2509, 0.0
        %v2641 = vmax.f32 %v2318, 0.0
        %v2642 = vmax.f32 %v2320, 0.0
        %v2643 = vmax.f32 %v2511, 0.0
        %v2644 = vmax.f32 %v2513, 0.0
        %v2645 = vmax.f32 %v2324, 0.0
        %v2646 = vmax.f32 %v2326, 0.0
        %v2647 = vmax.f32 %v2517, 0.0
        %v2648 = vmax.f32 %v2519, 0.0
        %v2649 = vmax.f32 %v2328, 0.0
        %v2650 = vmax.f32 %v2330, 0.0
        %v2651 = vmax.f32 %v2521, 0.0
        %v2652 = vmax.f32 %v2523, 0.0
        %v2653 = vld [vmem:[#allocation2 + $0x10] sm:$0xff]
        %v2654 = vadd.f32 %v2525, %v2529
        %v2655 = vadd.f32 %v2654, %v2533
        %v2656 = vadd.f32 %v2655, %v2537
        %v2657 = vadd.f32 %v2656, %v2541
        %v2658 = vadd.f32 %v2657, %v2545
        %v2659 = vadd.f32 %v2658, %v2549
        %v2660 = vadd.f32 %v2659, %v2553
        %v2661 = vadd.f32 %v2660, %v2557
        %v2662 = vadd.f32 %v2661, %v2561
        %v2663 = vadd.f32 %v2662, %v2565
        %v2664 = vadd.f32 %v2663, %v2569
        %v2665 = vadd.f32 %v2664, %v2573
        %v2666 = vadd.f32 %v2665, %v2577
        %v2667 = vadd.f32 %v2666, %v2581
        %v2668 = vadd.f32 %v2667, %v2585
        %v2669 = vrot.slane %v2668, 4
        %v2670 = vadd.f32 %v2668, %v2669
        %v2671 = vrot.slane %v2670, 2
        %v2672 = vadd.f32 %v2670, %v2671
        %v2673 = vrot.slane %v2672, 1
        %v2674 = vadd.f32 %v2672, %v2673
        %v2675 = vadd.f32 %v2526, %v2530
        %v2676 = vadd.f32 %v2675, %v2534
        %v2677 = vadd.f32 %v2676, %v2538
        %v2678 = vadd.f32 %v2677, %v2542
        %v2679 = vadd.f32 %v2678, %v2546
        %v2680 = vadd.f32 %v2679, %v2550
        %v2681 = vadd.f32 %v2680, %v2554
        %v2682 = vadd.f32 %v2681, %v2558
        %v2683 = vadd.f32 %v2682, %v2562
        %v2684 = vadd.f32 %v2683, %v2566
        %v2685 = vadd.f32 %v2684, %v2570
        %v2686 = vadd.f32 %v2685, %v2574
        %v2687 = vadd.f32 %v2686, %v2578
        %v2688 = vadd.f32 %v2687, %v2582
        %v2689 = vadd.f32 %v2688, %v2586
        %v2690 = vrot.slane %v2689, 4
        %v2691 = vadd.f32 %v2689, %v2690
        %v2692 = vrot.slane %v2691, 2
        %v2693 = vadd.f32 %v2691, %v2692
        %v2694 = vrot.slane %v2693, 1
        %v2695 = vadd.f32 %v2693, %v2694
        %v2696 = vadd.f32 %v2527, %v2531
        %v2697 = vadd.f32 %v2696, %v2535
        %v2698 = vadd.f32 %v2697, %v2539
        %v2699 = vadd.f32 %v2698, %v2543
        %v2700 = vadd.f32 %v2699, %v2547
        %v2701 = vadd.f32 %v2700, %v2551
        %v2702 = vadd.f32 %v2701, %v2555
        %v2703 = vadd.f32 %v2702, %v2559
        %v2704 = vadd.f32 %v2703, %v2563
        %v2705 = vadd.f32 %v2704, %v2567
        %v2706 = vadd.f32 %v2705, %v2571
        %v2707 = vadd.f32 %v2706, %v2575
        %v2708 = vadd.f32 %v2707, %v2579
        %v2709 = vadd.f32 %v2708, %v2583
        %v2710 = vadd.f32 %v2709, %v2587
        %v2711 = vrot.slane %v2710, 4
        %v2712 = vadd.f32 %v2710, %v2711
        %v2713 = vrot.slane %v2712, 2
        %v2714 = vadd.f32 %v2712, %v2713
        %v2715 = vrot.slane %v2714, 1
        %v2716 = vadd.f32 %v2714, %v2715
        %v2717 = vadd.f32 %v2528, %v2532
        %v2718 = vadd.f32 %v2717, %v2536
        %v2719 = vadd.f32 %v2718, %v2540
        %v2720 = vadd.f32 %v2719, %v2544
        %v2721 = vadd.f32 %v2720, %v2548
        %v2722 = vadd.f32 %v2721, %v2552
        %v2723 = vadd.f32 %v2722, %v2556
        %v2724 = vadd.f32 %v2723, %v2560
        %v2725 = vadd.f32 %v2724, %v2564
        %v2726 = vadd.f32 %v2725, %v2568
        %v2727 = vadd.f32 %v2726, %v2572
        %v2728 = vadd.f32 %v2727, %v2576
        %v2729 = vadd.f32 %v2728, %v2580
        %v2730 = vadd.f32 %v2729, %v2584
        %v2731 = vadd.f32 %v2730, %v2588
        %v2732 = vrot.slane %v2731, 4
        %v2733 = vadd.f32 %v2731, %v2732
        %v2734 = vrot.slane %v2733, 2
        %v2735 = vadd.f32 %v2733, %v2734
        %v2736 = vrot.slane %v2735, 1
        %v2737 = vadd.f32 %v2735, %v2736
        %v2738 = vadd.f32 %v2589, %v2593
        %v2739 = vadd.f32 %v2738, %v2597
        %v2740 = vadd.f32 %v2739, %v2601
        %v2741 = vadd.f32 %v2740, %v2605
        %v2742 = vadd.f32 %v2741, %v2609
        %v2743 = vadd.f32 %v2742, %v2613
        %v2744 = vadd.f32 %v2743, %v2617
        %v2745 = vadd.f32 %v2744, %v2621
        %v2746 = vadd.f32 %v2745, %v2625
        %v2747 = vadd.f32 %v2746, %v2629
        %v2748 = vadd.f32 %v2747, %v2633
        %v2749 = vadd.f32 %v2748, %v2637
        %v2750 = vadd.f32 %v2749, %v2641
        %v2751 = vadd.f32 %v2750, %v2645
        %v2752 = vadd.f32 %v2751, %v2649
        %v2753 = vrot.slane %v2752, 4
        %v2754 = vadd.f32 %v2752, %v2753
        %v2755 = vrot.slane %v2754, 2
        %v2756 = vadd.f32 %v2754, %v2755
        %v2757 = vrot.slane %v2756, 1
        %v2758 = vadd.f32 %v2756, %v2757
        %v2759 = vadd.f32 %v2590, %v2594
        %v2760 = vadd.f32 %v2759, %v2598
        %v2761 = vadd.f32 %v2760, %v2602
        %v2762 = vadd.f32 %v2761, %v2606
        %v2763 = vadd.f32 %v2762, %v2610
        %v2764 = vadd.f32 %v2763, %v2614
        %v2765 = vadd.f32 %v2764, %v2618
        %v2766 = vadd.f32 %v2765, %v2622
        %v2767 = vadd.f32 %v2766, %v2626
        %v2768 = vadd.f32 %v2767, %v2630
        %v2769 = vadd.f32 %v2768, %v2634
        %v2770 = vadd.f32 %v2769, %v2638
        %v2771 = vadd.f32 %v2770, %v2642
        %v2772 = vadd.f32 %v2771, %v2646
        %v2773 = vadd.f32 %v2772, %v2650
        %v2774 = vrot.slane %v2773, 4
        %v2775 = vadd.f32 %v2773, %v2774
        %v2776 = vrot.slane %v2775, 2
        %v2777 = vadd.f32 %v2775, %v2776
        %v2778 = vrot.slane %v2777, 1
        %v2779 = vadd.f32 %v2777, %v2778
        %v2780 = vadd.f32 %v2591, %v2595
        %v2781 = vadd.f32 %v2780, %v2599
        %v2782 = vadd.f32 %v2781, %v2603
        %v2783 = vadd.f32 %v2782, %v2607
        %v2784 = vadd.f32 %v2783, %v2611
        %v2785 = vadd.f32 %v2784, %v2615
        %v2786 = vadd.f32 %v2785, %v2619
        %v2787 = vadd.f32 %v2786, %v2623
        %v2788 = vadd.f32 %v2787, %v2627
        %v2789 = vadd.f32 %v2788, %v2631
        %v2790 = vadd.f32 %v2789, %v2635
        %v2791 = vadd.f32 %v2790, %v2639
        %v2792 = vadd.f32 %v2791, %v2643
        %v2793 = vadd.f32 %v2792, %v2647
        %v2794 = vadd.f32 %v2793, %v2651
        %v2795 = vrot.slane %v2794, 4
        %v2796 = vadd.f32 %v2794, %v2795
        %v2797 = vrot.slane %v2796, 2
        %v2798 = vadd.f32 %v2796, %v2797
        %v2799 = vrot.slane %v2798, 1
        %v2800 = vadd.f32 %v2798, %v2799
        %v2801 = vadd.f32 %v2592, %v2596
        %v2802 = vadd.f32 %v2801, %v2600
        %v2803 = vadd.f32 %v2802, %v2604
        %v2804 = vadd.f32 %v2803, %v2608
        %v2805 = vadd.f32 %v2804, %v2612
        %v2806 = vadd.f32 %v2805, %v2616
        %v2807 = vadd.f32 %v2806, %v2620
        %v2808 = vadd.f32 %v2807, %v2624
        %v2809 = vadd.f32 %v2808, %v2628
        %v2810 = vadd.f32 %v2809, %v2632
        %v2811 = vadd.f32 %v2810, %v2636
        %v2812 = vadd.f32 %v2811, %v2640
        %v2813 = vadd.f32 %v2812, %v2644
        %v2814 = vadd.f32 %v2813, %v2648
        %v2815 = vadd.f32 %v2814, %v2652
        %v2816 = vrot.slane %v2815, 4
        %v2817 = vadd.f32 %v2815, %v2816
        %v2818 = vrot.slane %v2817, 2
        %v2819 = vadd.f32 %v2817, %v2818
        %v2820 = vrot.slane %v2819, 1
        %v2821 = vadd.f32 %v2819, %v2820
        %v2830 = vcombine.low %v2674, %v2695
        %v2831 = vcombine.low %v2716, %v2737
        %v2833 = vunpack.c.l.s4 1983009808
        %v2834 = vunpack.c.0.s8 %v2833
        %v2835 = vlaneseq
        %v2836 = vshrl.u32 %v2835, 7
        %v2837 = vsub.s32 %v2834, %v2836
        %v2838 = vrot.slane %v2830, %v2837
        %v2840 = vunpack.c.l.s4 1983009808
        %v2841 = vunpack.c.0.s8 %v2840
        %v2842 = vlaneseq
        %v2843 = vshrl.u32 %v2842, 7
        %v2844 = vsub.s32 %v2841, %v2843
        %v2845 = vrot.slane %v2831, %v2844
        %v2846 = vcombine.low %v2838, %v2845
        %v2847 = vcombine.low %v2758, %v2779
        %v2848 = vcombine.low %v2800, %v2821
        %v2850 = vunpack.c.l.s4 1983009808
        %v2851 = vunpack.c.0.s8 %v2850
        %v2852 = vlaneseq
        %v2853 = vshrl.u32 %v2852, 7
        %v2854 = vsub.s32 %v2851, %v2853
        %v2855 = vrot.slane %v2847, %v2854
        %v2857 = vunpack.c.l.s4 1983009808
        %v2858 = vunpack.c.0.s8 %v2857
        %v2859 = vlaneseq
        %v2860 = vshrl.u32 %v2859, 7
        %v2861 = vsub.s32 %v2858, %v2860
        %v2862 = vrot.slane %v2848, %v2861
        %v2863 = vcombine.low %v2855, %v2862
        %v2864 = vsel %vm1296, %v2846, %v2846
        %v2865 = vsel %vm1298, %v2846, %v2864
        %v2866 = vrot.slane %v2863, 7
        %v2867 = vsel %vm1301, %v2866, %v2865
        %v2868 = vsel %vm1303, %v2866, %v2867
        %v2869 = vsel %vm1305, %v2866, %v2868
        %v2870 = vsel %vm1307, %v2866, %v2869
        %v2872 = vadd.f32 %v2653, %v2870
        %2873 = vst [vmem:[#allocation2 + $0x10] sm:$0xff] %v2872
        %v2874 = vld [vmem:[%s1 + $0x30] sm:$0xff]
        %v2875 = vld [vmem:[%s1 + $0x38] sm:$0xff]
        %v2876 = vld [vmem:[%s2 + $0xc] sm:$0xf]
        %v2878 = vlaneseq
        %v2879 = vshrl.u32 %v2878, 7
        %v2880 = vsub.s32 0, %v2879
        %v2881 = vrot.slane %v2876, %v2880
        %v2882 = vlaneseq
        %v2883 = vshrl.u32 %v2882, 7
        %v2884 = vsub.s32 1, %v2883
        %v2885 = vrot.slane %v2876, %v2884
        %v2886 = vlaneseq
        %v2887 = vshrl.u32 %v2886, 7
        %v2888 = vsub.s32 2, %v2887
        %v2889 = vrot.slane %v2876, %v2888
        %v2890 = vlaneseq
        %v2891 = vshrl.u32 %v2890, 7
        %v2892 = vsub.s32 3, %v2891
        %v2893 = vrot.slane %v2876, %v2892
        %v2900 = vunpack.c.l.b16 %v2874
        %v2901 = vunpack.c.h.b16 %v2874
        %v2902 = vunpack.c.l.b16 %v2875
        %v2903 = vunpack.c.h.b16 %v2875
        %v2904 = vpack.c.b16 %v2900, %v2900
        %v2905 = vpack.c.b16 %v2901, %v2901
        %v2906 = vpack.c.b16 %v2902, %v2902
        %v2907 = vpack.c.b16 %v2903, %v2903
        %v2909 = vsel %vm558, %v2904, 0
        %v2912 = vsel %vm558, %v2905, 0
        %v2915 = vsel %vm558, %v2906, 0
        %v2918 = vsel %vm558, %v2907, 0
        %2920 = vmatprep.subr.bf16.mxu0 0
        %2921 = vmatpush1.bf16.msra.mxu0 0
        %2922 = vmatprep.subr.bf16.mxu0 0
        %2923 = vmatpush1.bf16.msra.mxu0 0
        %2924 = vmatprep.subr.bf16.mxu0 0
        %2925 = vmatpush1.bf16.msra.mxu0 0
        %2926 = vmatprep.subr.bf16.mxu0 0
        %2927 = vmatpush1.bf16.msra.mxu0 0
        %2928 = vmatprep.subr.bf16.mxu0 0
        %2929 = vmatpush1.bf16.msra.mxu0 0
        %2930 = vmatprep.subr.bf16.mxu0 0
        %2931 = vmatpush1.bf16.msra.mxu0 0
        %2932 = vmatprep.subr.bf16.mxu0 0
        %2933 = vmatpush1.bf16.msra.mxu0 0
        %2934 = vmatprep.subr.bf16.mxu0 %v2912
        %2935 = vmatpush1.bf16.msra.mxu0 %v2909
        %2936 = vmatprep.subr.bf16.mxu0 0
        %2937 = vmatpush2.bf16.msra.mxu0 0
        %2938 = vmatprep.subr.bf16.mxu0 0
        %2939 = vmatpush2.bf16.msra.mxu0 0
        %2940 = vmatprep.subr.bf16.mxu0 0
        %2941 = vmatpush2.bf16.msra.mxu0 0
        %2942 = vmatprep.subr.bf16.mxu0 0
        %2943 = vmatpush2.bf16.msra.mxu0 0
        %2944 = vmatprep.subr.bf16.mxu0 0
        %2945 = vmatpush2.bf16.msra.mxu0 0
        %2946 = vmatprep.subr.bf16.mxu0 0
        %2947 = vmatpush2.bf16.msra.mxu0 0
        %2948 = vmatprep.subr.bf16.mxu0 0
        %2949 = vmatpush2.bf16.msra.mxu0 0
        %2950 = vmatprep.subr.bf16.mxu0 0
        %2951 = vmatpush2.bf16.msra.mxu0 0
        %2952 = vmatprep.mubr.bf16.mxu0 0
        %2953 = vmatmul.mubr.bf16.gmra.mxu0 %v511
        %v2954 = vpop.f32.mrf.mxu0
        %v2955 = vadd.f32 %v2881, %v2954
        %v2956 = vpop.f32.mrf.mxu0
        %v2957 = vadd.f32 %v2885, %v2956
        %v2958 = vpop.f32.mrf.mxu0
        %v2959 = vadd.f32 %v2881, %v2958
        %v2960 = vpop.f32.mrf.mxu0
        %v2961 = vadd.f32 %v2885, %v2960
        %2962 = vmatprep.mubr.bf16.mxu0 0
        %2963 = vmatmul.mubr.bf16.gmra.mxu0 %v514
        %v2964 = vpop.f32.mrf.mxu0
        %v2965 = vadd.f32 %v2881, %v2964
        %v2966 = vpop.f32.mrf.mxu0
        %v2967 = vadd.f32 %v2885, %v2966
        %v2968 = vpop.f32.mrf.mxu0
        %v2969 = vadd.f32 %v2881, %v2968
        %v2970 = vpop.f32.mrf.mxu0
        %v2971 = vadd.f32 %v2885, %v2970
        %2972 = vmatprep.mubr.bf16.mxu0 0
        %2973 = vmatmul.mubr.bf16.gmra.mxu0 %v517
        %v2974 = vpop.f32.mrf.mxu0
        %v2975 = vadd.f32 %v2881, %v2974
        %v2976 = vpop.f32.mrf.mxu0
        %v2977 = vadd.f32 %v2885, %v2976
        %v2978 = vpop.f32.mrf.mxu0
        %v2979 = vadd.f32 %v2881, %v2978
        %v2980 = vpop.f32.mrf.mxu0
        %v2981 = vadd.f32 %v2885, %v2980
        %2982 = vmatprep.mubr.bf16.mxu0 0
        %2983 = vmatmul.mubr.bf16.gmra.mxu0 %v520
        %v2984 = vpop.f32.mrf.mxu0
        %v2985 = vadd.f32 %v2881, %v2984
        %v2986 = vpop.f32.mrf.mxu0
        %v2987 = vadd.f32 %v2885, %v2986
        %v2988 = vpop.f32.mrf.mxu0
        %v2989 = vadd.f32 %v2881, %v2988
        %v2990 = vpop.f32.mrf.mxu0
        %v2991 = vadd.f32 %v2885, %v2990
        %2992 = vmatprep.mubr.bf16.mxu0 0
        %2993 = vmatmul.mubr.bf16.gmra.mxu0 %v523
        %v2994 = vpop.f32.mrf.mxu0
        %v2995 = vadd.f32 %v2881, %v2994
        %v2996 = vpop.f32.mrf.mxu0
        %v2997 = vadd.f32 %v2885, %v2996
        %v2998 = vpop.f32.mrf.mxu0
        %v2999 = vadd.f32 %v2881, %v2998
        %v3000 = vpop.f32.mrf.mxu0
        %v3001 = vadd.f32 %v2885, %v3000
        %3002 = vmatprep.mubr.bf16.mxu0 0
        %3003 = vmatmul.mubr.bf16.gmra.mxu0 %v526
        %v3004 = vpop.f32.mrf.mxu0
        %v3005 = vadd.f32 %v2881, %v3004
        %v3006 = vpop.f32.mrf.mxu0
        %v3007 = vadd.f32 %v2885, %v3006
        %v3008 = vpop.f32.mrf.mxu0
        %v3009 = vadd.f32 %v2881, %v3008
        %v3010 = vpop.f32.mrf.mxu0
        %v3011 = vadd.f32 %v2885, %v3010
        %3012 = vmatprep.mubr.bf16.mxu0 0
        %3013 = vmatmul.mubr.bf16.gmra.mxu0 %v529
        %v3014 = vpop.f32.mrf.mxu0
        %v3015 = vadd.f32 %v2881, %v3014
        %v3016 = vpop.f32.mrf.mxu0
        %v3017 = vadd.f32 %v2885, %v3016
        %v3018 = vpop.f32.mrf.mxu0
        %v3019 = vadd.f32 %v2881, %v3018
        %v3020 = vpop.f32.mrf.mxu0
        %v3021 = vadd.f32 %v2885, %v3020
        %3022 = vmatprep.mubr.bf16.mxu0 0
        %3023 = vmatmul.mubr.bf16.gmra.mxu0 %v532
        %v3024 = vpop.f32.mrf.mxu0
        %v3025 = vadd.f32 %v2881, %v3024
        %v3026 = vpop.f32.mrf.mxu0
        %v3027 = vadd.f32 %v2885, %v3026
        %v3028 = vpop.f32.mrf.mxu0
        %v3029 = vadd.f32 %v2881, %v3028
        %v3030 = vpop.f32.mrf.mxu0
        %v3031 = vadd.f32 %v2885, %v3030
        %3032 = vmatprep.mubr.bf16.mxu0 0
        %3033 = vmatmul.mubr.bf16.gmra.mxu0 %v535
        %v3034 = vpop.f32.mrf.mxu0
        %v3035 = vadd.f32 %v2881, %v3034
        %v3036 = vpop.f32.mrf.mxu0
        %v3037 = vadd.f32 %v2885, %v3036
        %v3038 = vpop.f32.mrf.mxu0
        %v3039 = vadd.f32 %v2881, %v3038
        %v3040 = vpop.f32.mrf.mxu0
        %v3041 = vadd.f32 %v2885, %v3040
        %3042 = vmatprep.mubr.bf16.mxu0 0
        %3043 = vmatmul.mubr.bf16.gmra.mxu0 %v538
        %v3044 = vpop.f32.mrf.mxu0
        %v3045 = vadd.f32 %v2881, %v3044
        %v3046 = vpop.f32.mrf.mxu0
        %v3047 = vadd.f32 %v2885, %v3046
        %v3048 = vpop.f32.mrf.mxu0
        %v3049 = vadd.f32 %v2881, %v3048
        %v3050 = vpop.f32.mrf.mxu0
        %v3051 = vadd.f32 %v2885, %v3050
        %3052 = vmatprep.mubr.bf16.mxu0 0
        %3053 = vmatmul.mubr.bf16.gmra.mxu0 %v541
        %v3054 = vpop.f32.mrf.mxu0
        %v3055 = vadd.f32 %v2881, %v3054
        %v3056 = vpop.f32.mrf.mxu0
        %v3057 = vadd.f32 %v2885, %v3056
        %v3058 = vpop.f32.mrf.mxu0
        %v3059 = vadd.f32 %v2881, %v3058
        %v3060 = vpop.f32.mrf.mxu0
        %v3061 = vadd.f32 %v2885, %v3060
        %3062 = vmatprep.mubr.bf16.mxu0 0
        %3063 = vmatmul.mubr.bf16.gmra.mxu0 %v544
        %v3064 = vpop.f32.mrf.mxu0
        %v3065 = vadd.f32 %v2881, %v3064
        %v3066 = vpop.f32.mrf.mxu0
        %v3067 = vadd.f32 %v2885, %v3066
        %v3068 = vpop.f32.mrf.mxu0
        %v3069 = vadd.f32 %v2881, %v3068
        %v3070 = vpop.f32.mrf.mxu0
        %v3071 = vadd.f32 %v2885, %v3070
        %3072 = vmatprep.mubr.bf16.mxu0 0
        %3073 = vmatmul.mubr.bf16.gmra.mxu0 %v547
        %v3074 = vpop.f32.mrf.mxu0
        %v3075 = vadd.f32 %v2881, %v3074
        %v3076 = vpop.f32.mrf.mxu0
        %v3077 = vadd.f32 %v2885, %v3076
        %v3078 = vpop.f32.mrf.mxu0
        %v3079 = vadd.f32 %v2881, %v3078
        %v3080 = vpop.f32.mrf.mxu0
        %v3081 = vadd.f32 %v2885, %v3080
        %3082 = vmatprep.mubr.bf16.mxu0 0
        %3083 = vmatmul.mubr.bf16.gmra.mxu0 %v550
        %v3084 = vpop.f32.mrf.mxu0
        %v3085 = vadd.f32 %v2881, %v3084
        %v3086 = vpop.f32.mrf.mxu0
        %v3087 = vadd.f32 %v2885, %v3086
        %v3088 = vpop.f32.mrf.mxu0
        %v3089 = vadd.f32 %v2881, %v3088
        %v3090 = vpop.f32.mrf.mxu0
        %v3091 = vadd.f32 %v2885, %v3090
        %3092 = vmatprep.mubr.bf16.mxu0 0
        %3093 = vmatmul.mubr.bf16.gmra.mxu0 %v553
        %v3094 = vpop.f32.mrf.mxu0
        %v3095 = vadd.f32 %v2881, %v3094
        %v3096 = vpop.f32.mrf.mxu0
        %v3097 = vadd.f32 %v2885, %v3096
        %v3098 = vpop.f32.mrf.mxu0
        %v3099 = vadd.f32 %v2881, %v3098
        %v3100 = vpop.f32.mrf.mxu0
        %v3101 = vadd.f32 %v2885, %v3100
        %3102 = vmatprep.mubr.bf16.mxu0 0
        %3103 = vmatmul.mubr.bf16.gmra.mxu0 %v556
        %v3104 = vpop.f32.mrf.mxu0
        %v3105 = vadd.f32 %v2881, %v3104
        %v3106 = vpop.f32.mrf.mxu0
        %v3107 = vadd.f32 %v2885, %v3106
        %v3108 = vpop.f32.mrf.mxu0
        %v3109 = vadd.f32 %v2881, %v3108
        %v3110 = vpop.f32.mrf.mxu0
        %v3111 = vadd.f32 %v2885, %v3110
        %3112 = vdwg.mxu0
        %3113 = vmatprep.subr.bf16.mxu0 0
        %3114 = vmatpush1.bf16.msra.mxu0 0
        %3115 = vmatprep.subr.bf16.mxu0 0
        %3116 = vmatpush1.bf16.msra.mxu0 0
        %3117 = vmatprep.subr.bf16.mxu0 0
        %3118 = vmatpush1.bf16.msra.mxu0 0
        %3119 = vmatprep.subr.bf16.mxu0 0
        %3120 = vmatpush1.bf16.msra.mxu0 0
        %3121 = vmatprep.subr.bf16.mxu0 0
        %3122 = vmatpush1.bf16.msra.mxu0 0
        %3123 = vmatprep.subr.bf16.mxu0 0
        %3124 = vmatpush1.bf16.msra.mxu0 0
        %3125 = vmatprep.subr.bf16.mxu0 0
        %3126 = vmatpush1.bf16.msra.mxu0 0
        %3127 = vmatprep.subr.bf16.mxu0 %v2918
        %3128 = vmatpush1.bf16.msra.mxu0 %v2915
        %3129 = vmatprep.subr.bf16.mxu0 0
        %3130 = vmatpush2.bf16.msra.mxu0 0
        %3131 = vmatprep.subr.bf16.mxu0 0
        %3132 = vmatpush2.bf16.msra.mxu0 0
        %3133 = vmatprep.subr.bf16.mxu0 0
        %3134 = vmatpush2.bf16.msra.mxu0 0
        %3135 = vmatprep.subr.bf16.mxu0 0
        %3136 = vmatpush2.bf16.msra.mxu0 0
        %3137 = vmatprep.subr.bf16.mxu0 0
        %3138 = vmatpush2.bf16.msra.mxu0 0
        %3139 = vmatprep.subr.bf16.mxu0 0
        %3140 = vmatpush2.bf16.msra.mxu0 0
        %3141 = vmatprep.subr.bf16.mxu0 0
        %3142 = vmatpush2.bf16.msra.mxu0 0
        %3143 = vmatprep.subr.bf16.mxu0 0
        %3144 = vmatpush2.bf16.msra.mxu0 0
        %3145 = vmatprep.mubr.bf16.mxu0 0
        %3146 = vmatmul.mubr.bf16.gmra.mxu0 %v511
        %v3147 = vpop.f32.mrf.mxu0
        %v3148 = vadd.f32 %v2889, %v3147
        %v3149 = vpop.f32.mrf.mxu0
        %v3150 = vadd.f32 %v2893, %v3149
        %v3151 = vpop.f32.mrf.mxu0
        %v3152 = vadd.f32 %v2889, %v3151
        %v3153 = vpop.f32.mrf.mxu0
        %v3154 = vadd.f32 %v2893, %v3153
        %3155 = vmatprep.mubr.bf16.mxu0 0
        %3156 = vmatmul.mubr.bf16.gmra.mxu0 %v514
        %v3157 = vpop.f32.mrf.mxu0
        %v3158 = vadd.f32 %v2889, %v3157
        %v3159 = vpop.f32.mrf.mxu0
        %v3160 = vadd.f32 %v2893, %v3159
        %v3161 = vpop.f32.mrf.mxu0
        %v3162 = vadd.f32 %v2889, %v3161
        %v3163 = vpop.f32.mrf.mxu0
        %v3164 = vadd.f32 %v2893, %v3163
        %3165 = vmatprep.mubr.bf16.mxu0 0
        %3166 = vmatmul.mubr.bf16.gmra.mxu0 %v517
        %v3167 = vpop.f32.mrf.mxu0
        %v3168 = vadd.f32 %v2889, %v3167
        %v3169 = vpop.f32.mrf.mxu0
        %v3170 = vadd.f32 %v2893, %v3169
        %v3171 = vpop.f32.mrf.mxu0
        %v3172 = vadd.f32 %v2889, %v3171
        %v3173 = vpop.f32.mrf.mxu0
        %v3174 = vadd.f32 %v2893, %v3173
        %3175 = vmatprep.mubr.bf16.mxu0 0
        %3176 = vmatmul.mubr.bf16.gmra.mxu0 %v520
        %v3177 = vpop.f32.mrf.mxu0
        %v3178 = vadd.f32 %v2889, %v3177
        %v3179 = vpop.f32.mrf.mxu0
        %v3180 = vadd.f32 %v2893, %v3179
        %v3181 = vpop.f32.mrf.mxu0
        %v3182 = vadd.f32 %v2889, %v3181
        %v3183 = vpop.f32.mrf.mxu0
        %v3184 = vadd.f32 %v2893, %v3183
        %3185 = vmatprep.mubr.bf16.mxu0 0
        %3186 = vmatmul.mubr.bf16.gmra.mxu0 %v523
        %v3187 = vpop.f32.mrf.mxu0
        %v3188 = vadd.f32 %v2889, %v3187
        %v3189 = vpop.f32.mrf.mxu0
        %v3190 = vadd.f32 %v2893, %v3189
        %v3191 = vpop.f32.mrf.mxu0
        %v3192 = vadd.f32 %v2889, %v3191
        %v3193 = vpop.f32.mrf.mxu0
        %v3194 = vadd.f32 %v2893, %v3193
        %3195 = vmatprep.mubr.bf16.mxu0 0
        %3196 = vmatmul.mubr.bf16.gmra.mxu0 %v526
        %v3197 = vpop.f32.mrf.mxu0
        %v3198 = vadd.f32 %v2889, %v3197
        %v3199 = vpop.f32.mrf.mxu0
        %v3200 = vadd.f32 %v2893, %v3199
        %v3201 = vpop.f32.mrf.mxu0
        %v3202 = vadd.f32 %v2889, %v3201
        %v3203 = vpop.f32.mrf.mxu0
        %v3204 = vadd.f32 %v2893, %v3203
        %3205 = vmatprep.mubr.bf16.mxu0 0
        %3206 = vmatmul.mubr.bf16.gmra.mxu0 %v529
        %v3207 = vpop.f32.mrf.mxu0
        %v3208 = vadd.f32 %v2889, %v3207
        %v3209 = vpop.f32.mrf.mxu0
        %v3210 = vadd.f32 %v2893, %v3209
        %v3211 = vpop.f32.mrf.mxu0
        %v3212 = vadd.f32 %v2889, %v3211
        %v3213 = vpop.f32.mrf.mxu0
        %v3214 = vadd.f32 %v2893, %v3213
        %3215 = vmatprep.mubr.bf16.mxu0 0
        %3216 = vmatmul.mubr.bf16.gmra.mxu0 %v532
        %v3217 = vpop.f32.mrf.mxu0
        %v3218 = vadd.f32 %v2889, %v3217
        %v3219 = vpop.f32.mrf.mxu0
        %v3220 = vadd.f32 %v2893, %v3219
        %v3221 = vpop.f32.mrf.mxu0
        %v3222 = vadd.f32 %v2889, %v3221
        %v3223 = vpop.f32.mrf.mxu0
        %v3224 = vadd.f32 %v2893, %v3223
        %3225 = vmatprep.mubr.bf16.mxu0 0
        %3226 = vmatmul.mubr.bf16.gmra.mxu0 %v535
        %v3227 = vpop.f32.mrf.mxu0
        %v3228 = vadd.f32 %v2889, %v3227
        %v3229 = vpop.f32.mrf.mxu0
        %v3230 = vadd.f32 %v2893, %v3229
        %v3231 = vpop.f32.mrf.mxu0
        %v3232 = vadd.f32 %v2889, %v3231
        %v3233 = vpop.f32.mrf.mxu0
        %v3234 = vadd.f32 %v2893, %v3233
        %3235 = vmatprep.mubr.bf16.mxu0 0
        %3236 = vmatmul.mubr.bf16.gmra.mxu0 %v538
        %v3237 = vpop.f32.mrf.mxu0
        %v3238 = vadd.f32 %v2889, %v3237
        %v3239 = vpop.f32.mrf.mxu0
        %v3240 = vadd.f32 %v2893, %v3239
        %v3241 = vpop.f32.mrf.mxu0
        %v3242 = vadd.f32 %v2889, %v3241
        %v3243 = vpop.f32.mrf.mxu0
        %v3244 = vadd.f32 %v2893, %v3243
        %3245 = vmatprep.mubr.bf16.mxu0 0
        %3246 = vmatmul.mubr.bf16.gmra.mxu0 %v541
        %v3247 = vpop.f32.mrf.mxu0
        %v3248 = vadd.f32 %v2889, %v3247
        %v3249 = vpop.f32.mrf.mxu0
        %v3250 = vadd.f32 %v2893, %v3249
        %v3251 = vpop.f32.mrf.mxu0
        %v3252 = vadd.f32 %v2889, %v3251
        %v3253 = vpop.f32.mrf.mxu0
        %v3254 = vadd.f32 %v2893, %v3253
        %3255 = vmatprep.mubr.bf16.mxu0 0
        %3256 = vmatmul.mubr.bf16.gmra.mxu0 %v544
        %v3257 = vpop.f32.mrf.mxu0
        %v3258 = vadd.f32 %v2889, %v3257
        %v3259 = vpop.f32.mrf.mxu0
        %v3260 = vadd.f32 %v2893, %v3259
        %v3261 = vpop.f32.mrf.mxu0
        %v3262 = vadd.f32 %v2889, %v3261
        %v3263 = vpop.f32.mrf.mxu0
        %v3264 = vadd.f32 %v2893, %v3263
        %3265 = vmatprep.mubr.bf16.mxu0 0
        %3266 = vmatmul.mubr.bf16.gmra.mxu0 %v547
        %v3267 = vpop.f32.mrf.mxu0
        %v3268 = vadd.f32 %v2889, %v3267
        %v3269 = vpop.f32.mrf.mxu0
        %v3270 = vadd.f32 %v2893, %v3269
        %v3271 = vpop.f32.mrf.mxu0
        %v3272 = vadd.f32 %v2889, %v3271
        %v3273 = vpop.f32.mrf.mxu0
        %v3274 = vadd.f32 %v2893, %v3273
        %3275 = vmatprep.mubr.bf16.mxu0 0
        %3276 = vmatmul.mubr.bf16.gmra.mxu0 %v550
        %v3277 = vpop.f32.mrf.mxu0
        %v3278 = vadd.f32 %v2889, %v3277
        %v3279 = vpop.f32.mrf.mxu0
        %v3280 = vadd.f32 %v2893, %v3279
        %v3281 = vpop.f32.mrf.mxu0
        %v3282 = vadd.f32 %v2889, %v3281
        %v3283 = vpop.f32.mrf.mxu0
        %v3284 = vadd.f32 %v2893, %v3283
        %3285 = vmatprep.mubr.bf16.mxu0 0
        %3286 = vmatmul.mubr.bf16.gmra.mxu0 %v553
        %v3287 = vpop.f32.mrf.mxu0
        %v3288 = vadd.f32 %v2889, %v3287
        %v3289 = vpop.f32.mrf.mxu0
        %v3290 = vadd.f32 %v2893, %v3289
        %v3291 = vpop.f32.mrf.mxu0
        %v3292 = vadd.f32 %v2889, %v3291
        %v3293 = vpop.f32.mrf.mxu0
        %v3294 = vadd.f32 %v2893, %v3293
        %3295 = vmatprep.mubr.bf16.mxu0 0
        %3296 = vmatmul.mubr.bf16.gmra.mxu0 %v556
        %v3297 = vpop.f32.mrf.mxu0
        %v3298 = vadd.f32 %v2889, %v3297
        %v3299 = vpop.f32.mrf.mxu0
        %v3300 = vadd.f32 %v2893, %v3299
        %v3301 = vpop.f32.mrf.mxu0
        %v3302 = vadd.f32 %v2889, %v3301
        %v3303 = vpop.f32.mrf.mxu0
        %v3304 = vadd.f32 %v2893, %v3303
        %3305 = vdwg.mxu0
        %v3306 = vmax.f32 %v2955, 0.0
        %v3307 = vmax.f32 %v2957, 0.0
        %v3308 = vmax.f32 %v3148, 0.0
        %v3309 = vmax.f32 %v3150, 0.0
        %v3310 = vmax.f32 %v2959, 0.0
        %v3311 = vmax.f32 %v2961, 0.0
        %v3312 = vmax.f32 %v3152, 0.0
        %v3313 = vmax.f32 %v3154, 0.0
        %v3314 = vmax.f32 %v2965, 0.0
        %v3315 = vmax.f32 %v2967, 0.0
        %v3316 = vmax.f32 %v3158, 0.0
        %v3317 = vmax.f32 %v3160, 0.0
        %v3318 = vmax.f32 %v2969, 0.0
        %v3319 = vmax.f32 %v2971, 0.0
        %v3320 = vmax.f32 %v3162, 0.0
        %v3321 = vmax.f32 %v3164, 0.0
        %v3322 = vmax.f32 %v2975, 0.0
        %v3323 = vmax.f32 %v2977, 0.0
        %v3324 = vmax.f32 %v3168, 0.0
        %v3325 = vmax.f32 %v3170, 0.0
        %v3326 = vmax.f32 %v2979, 0.0
        %v3327 = vmax.f32 %v2981, 0.0
        %v3328 = vmax.f32 %v3172, 0.0
        %v3329 = vmax.f32 %v3174, 0.0
        %v3330 = vmax.f32 %v2985, 0.0
        %v3331 = vmax.f32 %v2987, 0.0
        %v3332 = vmax.f32 %v3178, 0.0
        %v3333 = vmax.f32 %v3180, 0.0
        %v3334 = vmax.f32 %v2989, 0.0
        %v3335 = vmax.f32 %v2991, 0.0
        %v3336 = vmax.f32 %v3182, 0.0
        %v3337 = vmax.f32 %v3184, 0.0
        %v3338 = vmax.f32 %v2995, 0.0
        %v3339 = vmax.f32 %v2997, 0.0
        %v3340 = vmax.f32 %v3188, 0.0
        %v3341 = vmax.f32 %v3190, 0.0
        %v3342 = vmax.f32 %v2999, 0.0
        %v3343 = vmax.f32 %v3001, 0.0
        %v3344 = vmax.f32 %v3192, 0.0
        %v3345 = vmax.f32 %v3194, 0.0
        %v3346 = vmax.f32 %v3005, 0.0
        %v3347 = vmax.f32 %v3007, 0.0
        %v3348 = vmax.f32 %v3198, 0.0
        %v3349 = vmax.f32 %v3200, 0.0
        %v3350 = vmax.f32 %v3009, 0.0
        %v3351 = vmax.f32 %v3011, 0.0
        %v3352 = vmax.f32 %v3202, 0.0
        %v3353 = vmax.f32 %v3204, 0.0
        %v3354 = vmax.f32 %v3015, 0.0
        %v3355 = vmax.f32 %v3017, 0.0
        %v3356 = vmax.f32 %v3208, 0.0
        %v3357 = vmax.f32 %v3210, 0.0
        %v3358 = vmax.f32 %v3019, 0.0
        %v3359 = vmax.f32 %v3021, 0.0
        %v3360 = vmax.f32 %v3212, 0.0
        %v3361 = vmax.f32 %v3214, 0.0
        %v3362 = vmax.f32 %v3025, 0.0
        %v3363 = vmax.f32 %v3027, 0.0
        %v3364 = vmax.f32 %v3218, 0.0
        %v3365 = vmax.f32 %v3220, 0.0
        %v3366 = vmax.f32 %v3029, 0.0
        %v3367 = vmax.f32 %v3031, 0.0
        %v3368 = vmax.f32 %v3222, 0.0
        %v3369 = vmax.f32 %v3224, 0.0
        %v3370 = vmax.f32 %v3035, 0.0
        %v3371 = vmax.f32 %v3037, 0.0
        %v3372 = vmax.f32 %v3228, 0.0
        %v3373 = vmax.f32 %v3230, 0.0
        %v3374 = vmax.f32 %v3039, 0.0
        %v3375 = vmax.f32 %v3041, 0.0
        %v3376 = vmax.f32 %v3232, 0.0
        %v3377 = vmax.f32 %v3234, 0.0
        %v3378 = vmax.f32 %v3045, 0.0
        %v3379 = vmax.f32 %v3047, 0.0
        %v3380 = vmax.f32 %v3238, 0.0
        %v3381 = vmax.f32 %v3240, 0.0
        %v3382 = vmax.f32 %v3049, 0.0
        %v3383 = vmax.f32 %v3051, 0.0
        %v3384 = vmax.f32 %v3242, 0.0
        %v3385 = vmax.f32 %v3244, 0.0
        %v3386 = vmax.f32 %v3055, 0.0
        %v3387 = vmax.f32 %v3057, 0.0
        %v3388 = vmax.f32 %v3248, 0.0
        %v3389 = vmax.f32 %v3250, 0.0
        %v3390 = vmax.f32 %v3059, 0.0
        %v3391 = vmax.f32 %v3061, 0.0
        %v3392 = vmax.f32 %v3252, 0.0
        %v3393 = vmax.f32 %v3254, 0.0
        %v3394 = vmax.f32 %v3065, 0.0
        %v3395 = vmax.f32 %v3067, 0.0
        %v3396 = vmax.f32 %v3258, 0.0
        %v3397 = vmax.f32 %v3260, 0.0
        %v3398 = vmax.f32 %v3069, 0.0
        %v3399 = vmax.f32 %v3071, 0.0
        %v3400 = vmax.f32 %v3262, 0.0
        %v3401 = vmax.f32 %v3264, 0.0
        %v3402 = vmax.f32 %v3075, 0.0
        %v3403 = vmax.f32 %v3077, 0.0
        %v3404 = vmax.f32 %v3268, 0.0
        %v3405 = vmax.f32 %v3270, 0.0
        %v3406 = vmax.f32 %v3079, 0.0
        %v3407 = vmax.f32 %v3081, 0.0
        %v3408 = vmax.f32 %v3272, 0.0
        %v3409 = vmax.f32 %v3274, 0.0
        %v3410 = vmax.f32 %v3085, 0.0
        %v3411 = vmax.f32 %v3087, 0.0
        %v3412 = vmax.f32 %v3278, 0.0
        %v3413 = vmax.f32 %v3280, 0.0
        %v3414 = vmax.f32 %v3089, 0.0
        %v3415 = vmax.f32 %v3091, 0.0
        %v3416 = vmax.f32 %v3282, 0.0
        %v3417 = vmax.f32 %v3284, 0.0
        %v3418 = vmax.f32 %v3095, 0.0
        %v3419 = vmax.f32 %v3097, 0.0
        %v3420 = vmax.f32 %v3288, 0.0
        %v3421 = vmax.f32 %v3290, 0.0
        %v3422 = vmax.f32 %v3099, 0.0
        %v3423 = vmax.f32 %v3101, 0.0
        %v3424 = vmax.f32 %v3292, 0.0
        %v3425 = vmax.f32 %v3294, 0.0
        %v3426 = vmax.f32 %v3105, 0.0
        %v3427 = vmax.f32 %v3107, 0.0
        %v3428 = vmax.f32 %v3298, 0.0
        %v3429 = vmax.f32 %v3300, 0.0
        %v3430 = vmax.f32 %v3109, 0.0
        %v3431 = vmax.f32 %v3111, 0.0
        %v3432 = vmax.f32 %v3302, 0.0
        %v3433 = vmax.f32 %v3304, 0.0
        %v3434 = vld [vmem:[#allocation2 + $0x18] sm:$0xff]
        %v3435 = vadd.f32 %v3306, %v3310
        %v3436 = vadd.f32 %v3435, %v3314
        %v3437 = vadd.f32 %v3436, %v3318
        %v3438 = vadd.f32 %v3437, %v3322
        %v3439 = vadd.f32 %v3438, %v3326
        %v3440 = vadd.f32 %v3439, %v3330
        %v3441 = vadd.f32 %v3440, %v3334
        %v3442 = vadd.f32 %v3441, %v3338
        %v3443 = vadd.f32 %v3442, %v3342
        %v3444 = vadd.f32 %v3443, %v3346
        %v3445 = vadd.f32 %v3444, %v3350
        %v3446 = vadd.f32 %v3445, %v3354
        %v3447 = vadd.f32 %v3446, %v3358
        %v3448 = vadd.f32 %v3447, %v3362
        %v3449 = vadd.f32 %v3448, %v3366
        %v3450 = vrot.slane %v3449, 4
        %v3451 = vadd.f32 %v3449, %v3450
        %v3452 = vrot.slane %v3451, 2
        %v3453 = vadd.f32 %v3451, %v3452
        %v3454 = vrot.slane %v3453, 1
        %v3455 = vadd.f32 %v3453, %v3454
        %v3456 = vadd.f32 %v3307, %v3311
        %v3457 = vadd.f32 %v3456, %v3315
        %v3458 = vadd.f32 %v3457, %v3319
        %v3459 = vadd.f32 %v3458, %v3323
        %v3460 = vadd.f32 %v3459, %v3327
        %v3461 = vadd.f32 %v3460, %v3331
        %v3462 = vadd.f32 %v3461, %v3335
        %v3463 = vadd.f32 %v3462, %v3339
        %v3464 = vadd.f32 %v3463, %v3343
        %v3465 = vadd.f32 %v3464, %v3347
        %v3466 = vadd.f32 %v3465, %v3351
        %v3467 = vadd.f32 %v3466, %v3355
        %v3468 = vadd.f32 %v3467, %v3359
        %v3469 = vadd.f32 %v3468, %v3363
        %v3470 = vadd.f32 %v3469, %v3367
        %v3471 = vrot.slane %v3470, 4
        %v3472 = vadd.f32 %v3470, %v3471
        %v3473 = vrot.slane %v3472, 2
        %v3474 = vadd.f32 %v3472, %v3473
        %v3475 = vrot.slane %v3474, 1
        %v3476 = vadd.f32 %v3474, %v3475
        %v3477 = vadd.f32 %v3308, %v3312
        %v3478 = vadd.f32 %v3477, %v3316
        %v3479 = vadd.f32 %v3478, %v3320
        %v3480 = vadd.f32 %v3479, %v3324
        %v3481 = vadd.f32 %v3480, %v3328
        %v3482 = vadd.f32 %v3481, %v3332
        %v3483 = vadd.f32 %v3482, %v3336
        %v3484 = vadd.f32 %v3483, %v3340
        %v3485 = vadd.f32 %v3484, %v3344
        %v3486 = vadd.f32 %v3485, %v3348
        %v3487 = vadd.f32 %v3486, %v3352
        %v3488 = vadd.f32 %v3487, %v3356
        %v3489 = vadd.f32 %v3488, %v3360
        %v3490 = vadd.f32 %v3489, %v3364
        %v3491 = vadd.f32 %v3490, %v3368
        %v3492 = vrot.slane %v3491, 4
        %v3493 = vadd.f32 %v3491, %v3492
        %v3494 = vrot.slane %v3493, 2
        %v3495 = vadd.f32 %v3493, %v3494
        %v3496 = vrot.slane %v3495, 1
        %v3497 = vadd.f32 %v3495, %v3496
        %v3498 = vadd.f32 %v3309, %v3313
        %v3499 = vadd.f32 %v3498, %v3317
        %v3500 = vadd.f32 %v3499, %v3321
        %v3501 = vadd.f32 %v3500, %v3325
        %v3502 = vadd.f32 %v3501, %v3329
        %v3503 = vadd.f32 %v3502, %v3333
        %v3504 = vadd.f32 %v3503, %v3337
        %v3505 = vadd.f32 %v3504, %v3341
        %v3506 = vadd.f32 %v3505, %v3345
        %v3507 = vadd.f32 %v3506, %v3349
        %v3508 = vadd.f32 %v3507, %v3353
        %v3509 = vadd.f32 %v3508, %v3357
        %v3510 = vadd.f32 %v3509, %v3361
        %v3511 = vadd.f32 %v3510, %v3365
        %v3512 = vadd.f32 %v3511, %v3369
        %v3513 = vrot.slane %v3512, 4
        %v3514 = vadd.f32 %v3512, %v3513
        %v3515 = vrot.slane %v3514, 2
        %v3516 = vadd.f32 %v3514, %v3515
        %v3517 = vrot.slane %v3516, 1
        %v3518 = vadd.f32 %v3516, %v3517
        %v3519 = vadd.f32 %v3370, %v3374
        %v3520 = vadd.f32 %v3519, %v3378
        %v3521 = vadd.f32 %v3520, %v3382
        %v3522 = vadd.f32 %v3521, %v3386
        %v3523 = vadd.f32 %v3522, %v3390
        %v3524 = vadd.f32 %v3523, %v3394
        %v3525 = vadd.f32 %v3524, %v3398
        %v3526 = vadd.f32 %v3525, %v3402
        %v3527 = vadd.f32 %v3526, %v3406
        %v3528 = vadd.f32 %v3527, %v3410
        %v3529 = vadd.f32 %v3528, %v3414
        %v3530 = vadd.f32 %v3529, %v3418
        %v3531 = vadd.f32 %v3530, %v3422
        %v3532 = vadd.f32 %v3531, %v3426
        %v3533 = vadd.f32 %v3532, %v3430
        %v3534 = vrot.slane %v3533, 4
        %v3535 = vadd.f32 %v3533, %v3534
        %v3536 = vrot.slane %v3535, 2
        %v3537 = vadd.f32 %v3535, %v3536
        %v3538 = vrot.slane %v3537, 1
        %v3539 = vadd.f32 %v3537, %v3538
        %v3540 = vadd.f32 %v3371, %v3375
        %v3541 = vadd.f32 %v3540, %v3379
        %v3542 = vadd.f32 %v3541, %v3383
        %v3543 = vadd.f32 %v3542, %v3387
        %v3544 = vadd.f32 %v3543, %v3391
        %v3545 = vadd.f32 %v3544, %v3395
        %v3546 = vadd.f32 %v3545, %v3399
        %v3547 = vadd.f32 %v3546, %v3403
        %v3548 = vadd.f32 %v3547, %v3407
        %v3549 = vadd.f32 %v3548, %v3411
        %v3550 = vadd.f32 %v3549, %v3415
        %v3551 = vadd.f32 %v3550, %v3419
        %v3552 = vadd.f32 %v3551, %v3423
        %v3553 = vadd.f32 %v3552, %v3427
        %v3554 = vadd.f32 %v3553, %v3431
        %v3555 = vrot.slane %v3554, 4
        %v3556 = vadd.f32 %v3554, %v3555
        %v3557 = vrot.slane %v3556, 2
        %v3558 = vadd.f32 %v3556, %v3557
        %v3559 = vrot.slane %v3558, 1
        %v3560 = vadd.f32 %v3558, %v3559
        %v3561 = vadd.f32 %v3372, %v3376
        %v3562 = vadd.f32 %v3561, %v3380
        %v3563 = vadd.f32 %v3562, %v3384
        %v3564 = vadd.f32 %v3563, %v3388
        %v3565 = vadd.f32 %v3564, %v3392
        %v3566 = vadd.f32 %v3565, %v3396
        %v3567 = vadd.f32 %v3566, %v3400
        %v3568 = vadd.f32 %v3567, %v3404
        %v3569 = vadd.f32 %v3568, %v3408
        %v3570 = vadd.f32 %v3569, %v3412
        %v3571 = vadd.f32 %v3570, %v3416
        %v3572 = vadd.f32 %v3571, %v3420
        %v3573 = vadd.f32 %v3572, %v3424
        %v3574 = vadd.f32 %v3573, %v3428
        %v3575 = vadd.f32 %v3574, %v3432
        %v3576 = vrot.slane %v3575, 4
        %v3577 = vadd.f32 %v3575, %v3576
        %v3578 = vrot.slane %v3577, 2
        %v3579 = vadd.f32 %v3577, %v3578
        %v3580 = vrot.slane %v3579, 1
        %v3581 = vadd.f32 %v3579, %v3580
        %v3582 = vadd.f32 %v3373, %v3377
        %v3583 = vadd.f32 %v3582, %v3381
        %v3584 = vadd.f32 %v3583, %v3385
        %v3585 = vadd.f32 %v3584, %v3389
        %v3586 = vadd.f32 %v3585, %v3393
        %v3587 = vadd.f32 %v3586, %v3397
        %v3588 = vadd.f32 %v3587, %v3401
        %v3589 = vadd.f32 %v3588, %v3405
        %v3590 = vadd.f32 %v3589, %v3409
        %v3591 = vadd.f32 %v3590, %v3413
        %v3592 = vadd.f32 %v3591, %v3417
        %v3593 = vadd.f32 %v3592, %v3421
        %v3594 = vadd.f32 %v3593, %v3425
        %v3595 = vadd.f32 %v3594, %v3429
        %v3596 = vadd.f32 %v3595, %v3433
        %v3597 = vrot.slane %v3596, 4
        %v3598 = vadd.f32 %v3596, %v3597
        %v3599 = vrot.slane %v3598, 2
        %v3600 = vadd.f32 %v3598, %v3599
        %v3601 = vrot.slane %v3600, 1
        %v3602 = vadd.f32 %v3600, %v3601
        %v3611 = vcombine.low %v3455, %v3476
        %v3612 = vcombine.low %v3497, %v3518
        %v3614 = vunpack.c.l.s4 1983009808
        %v3615 = vunpack.c.0.s8 %v3614
        %v3616 = vlaneseq
        %v3617 = vshrl.u32 %v3616, 7
        %v3618 = vsub.s32 %v3615, %v3617
        %v3619 = vrot.slane %v3611, %v3618
        %v3621 = vunpack.c.l.s4 1983009808
        %v3622 = vunpack.c.0.s8 %v3621
        %v3623 = vlaneseq
        %v3624 = vshrl.u32 %v3623, 7
        %v3625 = vsub.s32 %v3622, %v3624
        %v3626 = vrot.slane %v3612, %v3625
        %v3627 = vcombine.low %v3619, %v3626
        %v3628 = vcombine.low %v3539, %v3560
        %v3629 = vcombine.low %v3581, %v3602
        %v3631 = vunpack.c.l.s4 1983009808
        %v3632 = vunpack.c.0.s8 %v3631
        %v3633 = vlaneseq
        %v3634 = vshrl.u32 %v3633, 7
        %v3635 = vsub.s32 %v3632, %v3634
        %v3636 = vrot.slane %v3628, %v3635
        %v3638 = vunpack.c.l.s4 1983009808
        %v3639 = vunpack.c.0.s8 %v3638
        %v3640 = vlaneseq
        %v3641 = vshrl.u32 %v3640, 7
        %v3642 = vsub.s32 %v3639, %v3641
        %v3643 = vrot.slane %v3629, %v3642
        %v3644 = vcombine.low %v3636, %v3643
        %v3645 = vsel %vm1296, %v3627, %v3627
        %v3646 = vsel %vm1298, %v3627, %v3645
        %v3647 = vrot.slane %v3644, 7
        %v3648 = vsel %vm1301, %v3647, %v3646
        %v3649 = vsel %vm1303, %v3647, %v3648
        %v3650 = vsel %vm1305, %v3647, %v3649
        %v3651 = vsel %vm1307, %v3647, %v3650
        %v3653 = vadd.f32 %v3434, %v3651
        %3654 = vst [vmem:[#allocation2 + $0x18] sm:$0xff] %v3653
        // Predicated region
        $region78: #{tpu_custom_call.1} parent=68 // pred_check
          %p3655 = pneg %p355
        $region79: #{tpu_custom_call.1} parent=68 // pred_check_branch
          %3657 = sbr.rel (%p3655) target = $region81
        $region80: #{tpu_custom_call.1} parent=68 // pred_region
          %v3658 = vld [vmem:[#allocation2] sm:$0xff]
          %v3659 = vld [vmem:[#allocation2 + $0x8] sm:$0xff]
          %v3660 = vld [vmem:[#allocation2 + $0x10] sm:$0xff]
          %v3661 = vld [vmem:[#allocation2 + $0x18] sm:$0xff]
          %3662 = vst [vmem:[%s351] sm:$0xff] %v3658
          %3663 = vst [vmem:[%s351 + $0x8] sm:$0xff] %v3659
          %3664 = vst [vmem:[%s351 + $0x10] sm:$0xff] %v3660
          %3665 = vst [vmem:[%s351 + $0x18] sm:$0xff] %v3661
        $region81: #{tpu_custom_call.1} parent=68 // pred_fallthru
          _
        %s3666 = sand.u32 %s107, 1
        %s3667 = scalar_lea.sflag [#allocation5], %s3666
        %s3668 = sand.u32 %s107, 1
        %s3669 = smul.addr %s3668, 32
        %s3670 = scalar_lea.vmem [#allocation4], %s3669
        // Predicated region
        $region82: #{tpu_custom_call.1} parent=68 // pred_check
          %p3671 = pneg %p117
        $region83: #{tpu_custom_call.1} parent=68 // pred_check_branch
          %3673 = sbr.rel (%p3671) target = $region85
        $region84: #{tpu_custom_call.1} parent=68 // pred_region
          %s3675 = ssub.s32 512, 512
          %3676 = vsyncadd %s3667, %s3675
          %s3677 = smul.addr %s21, 16
          %s3678 = smul.addr %s3677, 32
          %s3679 = scalar_lea.hbm %s3, %s3678
          %s3681 = sshll.u32 %s3670, 4
          %s3682 = int_to_ptr.vmem [resolvable:$true] %s3681
          %3684 = dma.vmem_to_hbm [thread:$0]  %s3682, 512, %s3679, %s3667
        $region85: #{tpu_custom_call.1} parent=68 // pred_fallthru
          _
      $region69: #{tpu_custom_call.1} parent=5 // pred_fallthru
        _
      %p3685 = scmp.le.s32.totalorder 2, %s12
      // Predicated region
      $region86: #{tpu_custom_call.1} parent=5 // pred_check
        %p3686 = pneg %p3685
      $region87: #{tpu_custom_call.1} parent=5 // pred_check_branch
        %3688 = sbr.rel (%p3686) target = $region89
      $region88: #{tpu_custom_call.1} parent=5 // pred_region
        %s3689 = ssub.s32 %s12, 2
        // Predicated region
        $region90: #{tpu_custom_call.1} parent=88 // pred_check
          %p3690 = pneg %p123
        $region91: #{tpu_custom_call.1} parent=88 // pred_check_branch
          %3692 = sbr.rel (%p3690) target = $region93
        $region92: #{tpu_custom_call.1} parent=88 // pred_region
          %s3693 = sand.u32 %s108, 1
          %s3694 = scalar_lea.sflag [#allocation5], %s3693
          %s3695 = sand.u32 %s108, 1
          %s3696 = smul.addr %s3695, 32
          %s3697 = scalar_lea.vmem [#allocation4], %s3696
          %3698 = dma.done %s3694, 512
        $region93: #{tpu_custom_call.1} parent=88 // pred_fallthru
          _
      $region89: #{tpu_custom_call.1} parent=5 // pred_fallthru
        _
    $region6: #{tpu_custom_call.1} parent=1 // loop_footer
      %s16 = sadd.s32 1, %s12
    $region7: #{tpu_custom_call.1} parent=1 // loop_footer_branch
      %11 = sbr.rel target = $region3
    $region8: #{tpu_custom_call.1} parent=1 // loop_exit
      _
    %3699 = vsyncpa [#allocation5], 1
    %s3700 = scalar_lea.sflag [#allocation5], 1
    %3701 = vsyncpa %s3700, 1

</llo_original>
